<compile_context>
chip_gen: v5e
topology: v5e:2x2
jax: 0.10.0
libtpu: 0.0.40
codegen_flags: <defaults>
</compile_context>

<pallas_src>
import jax
import jax.numpy as jnp
from jax.experimental import pallas as pl
from jax.experimental.pallas import tpu as pltpu


H = 32               # hidden size per modality
SLOT = 128           # lane width of one gate slab (vreg-aligned)
SENT_OFF = 64        # sentiment sub-slot offset inside a slab / inside the state
GW = 4 * SLOT        # 512 gate lanes: [i | f | o | g], one full slab each
SW = SLOT            # padded combined hidden-state width: [tech h | pad | sent h | pad]
BP_MULT = 16         # batch padded to a full bf16 sublane tile
GATE_SRC = (0, 1, 3, 2)  # slab k <- PyTorch gate block GATE_SRC[k]  ([i|f|g|o] -> [i|f|o|g])


# ----------------------------------------------------------------------------
# Fused Pallas kernel: both LSTM stacks (2 layers) + final FC in one call.
# ----------------------------------------------------------------------------
def fused_model_kernel(x_ref, w1x_ref, b1_ref, w1h_ref, w2x_ref, b2_ref, w2h_ref,
                       wfc_ref, bfc_ref, out_ref):
    """Whole forward pass.

    x_ref  : (T, Bp, f_in) time-major raw features [tech | sent] (no lane padding)
    w1x_ref: (f_in, GW)    bf16 layer-1 input weights (block-diag across modalities)
    b1_ref : (1, GW)       f32 combined layer-1 bias (b_ih + b_hh), lane-padded
    w1h_ref: (SW, GW)      bf16 layer-1 recurrent weights (rows laid out like h1 state)
    w2x_ref: (SW, GW)      bf16 layer-2 input weights (input = padded h1 state)
    b2_ref : (1, GW)       f32
    w2h_ref: (SW, GW)      bf16 layer-2 recurrent weights
    wfc_ref: (SW, O)       f32 final linear, rows laid out like the h2 state
    bfc_ref: (1, O)        f32
    out_ref: (Bp, O)
    """
    T, Bp, f_in = x_ref.shape

    # --- Hoisted layer-1 input projection: one batched MXU matmul for all time
    #     steps (this half of layer-1's K has no h dependence, so it is taken
    #     off the sequential critical path). Includes the layer-1 bias. ---
    x_all = x_ref[...].reshape(T * Bp, f_in).astype(jnp.bfloat16)
    xp = (jnp.dot(x_all, w1x_ref[...], preferred_element_type=jnp.float32)
          + b1_ref[...]).reshape(T, Bp, GW)

    def gates(g, c):
        # Slab order [i|f|o|g]: one contiguous sigmoid over 3 slabs, tanh over last.
        sg = jax.nn.sigmoid(g[:, 0:3 * SLOT])
        i = sg[:, 0 * SLOT:1 * SLOT]
        f = sg[:, 1 * SLOT:2 * SLOT]
        o = sg[:, 2 * SLOT:3 * SLOT]
        gg = jnp.tanh(g[:, 3 * SLOT:4 * SLOT])
        c_new = f * c + i * gg
        h_new = o * jnp.tanh(c_new)
        return h_new, c_new

    z = jnp.zeros((Bp, SW), jnp.float32)
    h1, c1, h2, c2 = z, z, z, z

    # Pad-lane invariant: pad lanes of h/c stay exactly 0 because c starts at 0
    # and all pad-lane weights/biases are 0, so g_pad == 0, i/f/o_pad == 0.5,
    # gg_pad == 0  =>  c_new_pad = 0.5*0 + 0.5*0 = 0 and h_new_pad = 0.5*tanh(0) = 0.

    for t in range(T):  # T is static and small -> trace-time unroll, static slices
        g1 = xp[t] + jnp.dot(h1.astype(jnp.bfloat16), w1h_ref[...],
                             preferred_element_type=jnp.float32)
        h1, c1 = gates(g1, c1)
        g2 = (jnp.dot(h1.astype(jnp.bfloat16), w2x_ref[...],
                      preferred_element_type=jnp.float32)
              + jnp.dot(h2.astype(jnp.bfloat16), w2h_ref[...],
                        preferred_element_type=jnp.float32)
              + b2_ref[...])
        h2, c2 = gates(g2, c2)

    # TODO(synk): dropout implemented as identity (inference mode).
    # FC epilogue runs once; keep it in f32 for accuracy (tiny op).
    out_ref[...] = (jnp.dot(h2, wfc_ref[...], preferred_element_type=jnp.float32)
                    + bfc_ref[...])


# ----------------------------------------------------------------------------
# Weight packing into the fused / lane-padded layout (done once at init).
# ----------------------------------------------------------------------------
def _place_gate_cols(w, lane_off):
    """w: (rows, 4H) PyTorch gate order [i|f|g|o] -> (rows, GW) slab order [i|f|o|g],
    each gate's H columns placed at lanes [k*SLOT+lane_off : k*SLOT+lane_off+H]."""
    out = jnp.zeros((w.shape[0], GW), jnp.float32)
    for k, src in enumerate(GATE_SRC):
        out = out.at[:, k * SLOT + lane_off: k * SLOT + lane_off + H].set(
            w[:, src * H:(src + 1) * H])
    return out


def _place_gate_bias(b, lane_off):
    out = jnp.zeros((GW,), jnp.float32)
    for k, src in enumerate(GATE_SRC):
        out = out.at[k * SLOT + lane_off: k * SLOT + lane_off + H].set(
            b[src * H:(src + 1) * H])
    return out


def pack_fused_params(tech_params, sent_params, w_fc, b_fc, tech_in, sent_in):
    """tech/sent_params: per-layer (w_ih (in,4H), w_hh (H,4H), b (4H,)) tuples."""
    (wi1_t, wh1_t, b1_t), (wi2_t, wh2_t, b2_t) = tech_params
    (wi1_s, wh1_s, b1_s), (wi2_s, wh2_s, b2_s) = sent_params
    f_in = tech_in + sent_in

    # Layer-1 input-projection weights: rows = raw concatenated features [tech|sent].
    w1x = jnp.zeros((f_in, GW), jnp.float32)
    w1x = w1x.at[0:tech_in].set(_place_gate_cols(wi1_t, 0))
    w1x = w1x.at[tech_in:f_in].set(_place_gate_cols(wi1_s, SENT_OFF))
    b1 = (_place_gate_bias(b1_t, 0) + _place_gate_bias(b1_s, SENT_OFF)).reshape(1, GW)

    # Layer-1 recurrent weights: rows laid out like the padded h1 state.
    w1h = jnp.zeros((SW, GW), jnp.float32)
    w1h = w1h.at[0:H].set(_place_gate_cols(wh1_t, 0))
    w1h = w1h.at[SENT_OFF:SENT_OFF + H].set(_place_gate_cols(wh1_s, SENT_OFF))

    # Layer-2 input weights (input is the padded h1 state) and recurrent weights.
    w2x = jnp.zeros((SW, GW), jnp.float32)
    w2x = w2x.at[0:H].set(_place_gate_cols(wi2_t, 0))
    w2x = w2x.at[SENT_OFF:SENT_OFF + H].set(_place_gate_cols(wi2_s, SENT_OFF))
    b2 = (_place_gate_bias(b2_t, 0) + _place_gate_bias(b2_s, SENT_OFF)).reshape(1, GW)
    w2h = jnp.zeros((SW, GW), jnp.float32)
    w2h = w2h.at[0:H].set(_place_gate_cols(wh2_t, 0))
    w2h = w2h.at[SENT_OFF:SENT_OFF + H].set(_place_gate_cols(wh2_s, SENT_OFF))

    # Final FC on the padded h2 state (replaces concat([tech, sent]) @ w_fc).
    out_size = w_fc.shape[1]
    wfc = jnp.zeros((SW, out_size), jnp.float32)
    wfc = wfc.at[0:H].set(w_fc[0:H])
    wfc = wfc.at[SENT_OFF:SENT_OFF + H].set(w_fc[H:2 * H])

    bf = jnp.bfloat16
    return (w1x.astype(bf), b1, w1h.astype(bf), w2x.astype(bf), b2, w2h.astype(bf),
            wfc, b_fc.reshape(1, out_size))


# ----------------------------------------------------------------------------
# Forward wrapper (single pallas_call).
# ----------------------------------------------------------------------------
@jax.jit
def multimodal_stock_predictor(tech_x, sentiment_x, packed):
    w1x, b1, w1h, w2x, b2, w2h, wfc, bfc = packed
    B, T, tech_in = tech_x.shape
    sent_in = sentiment_x.shape[2]
    f_in = tech_in + sent_in
    out_size = wfc.shape[1]
    Bp = ((B + BP_MULT - 1) // BP_MULT) * BP_MULT

    # Minimal wrapper-side packing: feature-concat (10 lanes, no 128-lane
    # inflation), time-major, batch padded to the native sublane tile.
    x = jnp.concatenate([tech_x, sentiment_x], axis=-1)   # (B, T, f_in)
    x = jnp.transpose(x, (1, 0, 2))                       # (T, B, f_in)
    x = jnp.pad(x, ((0, 0), (0, Bp - B), (0, 0)))         # (T, Bp, f_in)

    flops = (2 * T * Bp * f_in * GW            # hoisted layer-1 input projection
             + T * 3 * 2 * Bp * SW * GW        # 3 recurrent matmuls per step
             + 2 * Bp * SW * out_size)         # FC epilogue
    transcendentals = T * 2 * Bp * 5 * SLOT    # sigmoid(3 slabs) + 2x tanh(1 slab)
    bytes_accessed = (4 * x.size
                      + 2 * (w1x.size + w1h.size + w2x.size + w2h.size)
                      + 4 * (b1.size + b2.size + wfc.size + bfc.size)
                      + 4 * Bp * out_size)

    vmem = pl.BlockSpec(memory_space=pltpu.MemorySpace.VMEM)
    out = pl.pallas_call(
        fused_model_kernel,
        out_shape=jax.ShapeDtypeStruct((Bp, out_size), jnp.float32),
        in_specs=[vmem] * 9,
        out_specs=vmem,
        cost_estimate=pl.CostEstimate(flops=flops,
                                      transcendentals=transcendentals,
                                      bytes_accessed=bytes_accessed),
    )(x, w1x, b1, w1h, w2x, b2, w2h, wfc, bfc)
    return out[:B]


# ----------------------------------------------------------------------------
# Parameter construction (PyTorch-style U(-1/sqrt(H), 1/sqrt(H))) + references.
# ----------------------------------------------------------------------------
def make_raw_lstm_params(key, input_size, hidden_size, num_layers):
    params = []
    bound = 1.0 / float(hidden_size) ** 0.5
    for layer in range(num_layers):
        in_sz = input_size if layer == 0 else hidden_size
        key, k1, k2, k3, k4 = jax.random.split(key, 5)
        w_ih = jax.random.uniform(k1, (in_sz, 4 * hidden_size), jnp.float32, -bound, bound)
        w_hh = jax.random.uniform(k2, (hidden_size, 4 * hidden_size), jnp.float32, -bound, bound)
        b_ih = jax.random.uniform(k3, (4 * hidden_size,), jnp.float32, -bound, bound)
        b_hh = jax.random.uniform(k4, (4 * hidden_size,), jnp.float32, -bound, bound)
        params.append((w_ih, w_hh, b_ih + b_hh))
    return params, key


def _q(a):
    """bf16 round-trip (emulates the kernel's bf16 matmul operands)."""
    return a.astype(jnp.bfloat16).astype(jnp.float32)


def ref_lstm_stack(x, layers, quant):
    B, T, _ = x.shape
    out = x
    for (w_ih, w_hh, b) in layers:
        wi = _q(w_ih) if quant else w_ih
        wh = _q(w_hh) if quant else w_hh
        h = jnp.zeros((B, H), jnp.float32)
        c = jnp.zeros((B, H), jnp.float32)
        hs = []
        for t in range(T):
            xt = out[:, t, :]
            lhs_x = _q(xt) if quant else xt
            lhs_h = _q(h) if quant else h
            g = lhs_x @ wi + lhs_h @ wh + b
            i = jax.nn.sigmoid(g[:, 0:H])
            f = jax.nn.sigmoid(g[:, H:2 * H])
            gg = jnp.tanh(g[:, 2 * H:3 * H])
            o = jax.nn.sigmoid(g[:, 3 * H:4 * H])
            c = f * c + i * gg
            h = o * jnp.tanh(c)
            hs.append(h)
        out = jnp.stack(hs, axis=1)
    return out[:, -1, :]


def ref_forward(tech_x, sent_x, tech_params, sent_params, w_fc, b_fc, quant=False):
    t_last = ref_lstm_stack(tech_x, tech_params, quant)
    s_last = ref_lstm_stack(sent_x, sent_params, quant)
    return jnp.concatenate([t_last, s_last], axis=1) @ w_fc + b_fc


# ----------------------------------------------------------------------------
# Main
# ----------------------------------------------------------------------------
if __name__ == "__main__":
    TECH_IN, SENT_IN = 6, 4
    NUM_LAYERS = 2
    OUT = 1
    B, T = 2, 8

    key = jax.random.PRNGKey(0)
    key, kt, ks = jax.random.split(key, 3)
    tech_x = jax.random.normal(kt, (B, T, TECH_IN), jnp.float32)
    sentiment_x = jax.random.normal(ks, (B, T, SENT_IN), jnp.float32)

    tech_params, key = make_raw_lstm_params(key, TECH_IN, H, NUM_LAYERS)
    sent_params, key = make_raw_lstm_params(key, SENT_IN, H, NUM_LAYERS)

    key, kw, kb = jax.random.split(key, 3)
    fc_bound = 1.0 / float(2 * H) ** 0.5
    w_fc = jax.random.uniform(kw, (2 * H, OUT), jnp.float32, -fc_bound, fc_bound)
    b_fc = jax.random.uniform(kb, (OUT,), jnp.float32, -fc_bound, fc_bound)

    packed = pack_fused_params(tech_params, sent_params, w_fc, b_fc, TECH_IN, SENT_IN)

    out = multimodal_stock_predictor(tech_x, sentiment_x, packed)
    out = jax.block_until_ready(out)
    assert out.shape == (B, OUT), out.shape
    assert bool(jnp.all(jnp.isfinite(out)))

    # Tight check vs. a reference that applies the same bf16 weight/LHS
    # quantization the kernel uses (catches gate/lane packing bugs).
    ref_q = ref_forward(tech_x, sentiment_x, tech_params, sent_params,
                        w_fc, b_fc.reshape(1, OUT), quant=True)
    assert jnp.allclose(out, ref_q, atol=5e-3, rtol=5e-3), (out, ref_q)

    # Sanity check vs. the exact f32 module semantics (looser tol accounts for
    # the intentional bf16 weight quantization).
    ref = ref_forward(tech_x, sentiment_x, tech_params, sent_params,
                      w_fc, b_fc.reshape(1, OUT), quant=False)
    assert jnp.allclose(out, ref, atol=5e-2, rtol=5e-2), (out, ref)

    print("KERNEL_OK")
</pallas_src>

<mosaic_0001>
module attributes {stable_mosaic.version = 11 : i64} {
  func.func @fused_model_kernel(%arg0: memref<8x16x10xf32, #tpu.memory_space<vmem>>, %arg1: memref<10x512xbf16, #tpu.memory_space<vmem>>, %arg2: memref<1x512xf32, #tpu.memory_space<vmem>>, %arg3: memref<128x512xbf16, #tpu.memory_space<vmem>>, %arg4: memref<128x512xbf16, #tpu.memory_space<vmem>>, %arg5: memref<1x512xf32, #tpu.memory_space<vmem>>, %arg6: memref<128x512xbf16, #tpu.memory_space<vmem>>, %arg7: memref<128x1xf32, #tpu.memory_space<vmem>>, %arg8: memref<1x1xf32, #tpu.memory_space<vmem>>, %arg9: memref<16x1xf32, #tpu.memory_space<vmem>>) attributes {dimension_semantics = [], scalar_prefetch = 0 : i64, scratch_operands = 0 : i64, tpu.core_type = #tpu.core_type<tc>} {
    %c0 = arith.constant 0 : index
    %c0_0 = arith.constant 0 : index
    %c0_1 = arith.constant 0 : index
    %0 = vector.load %arg0[%c0, %c0_0, %c0_1] : memref<8x16x10xf32, #tpu.memory_space<vmem>>, vector<8x16x10xf32>
    %1 = vector.shape_cast %0 : vector<8x16x10xf32> to vector<128x10xf32>
    %2 = arith.truncf %1 : vector<128x10xf32> to vector<128x10xbf16>
    %c0_2 = arith.constant 0 : index
    %c0_3 = arith.constant 0 : index
    %3 = vector.load %arg1[%c0_2, %c0_3] : memref<10x512xbf16, #tpu.memory_space<vmem>>, vector<10x512xbf16>
    %cst = arith.constant dense<0.000000e+00> : vector<128x512xf32>
    %4 = tpu.matmul %2, %3, %cst {dimension_numbers = #tpu.dot_dimension_numbers<[1], [0], [0], [1], [0, 0, 1, 1], [], []>} : vector<128x10xbf16>, vector<10x512xbf16>, vector<128x512xf32> -> vector<128x512xf32>
    %c0_4 = arith.constant 0 : index
    %c0_5 = arith.constant 0 : index
    %5 = vector.load %arg2[%c0_4, %c0_5] : memref<1x512xf32, #tpu.memory_space<vmem>>, vector<1x512xf32>
    %6 = vector.broadcast %5 : vector<1x512xf32> to vector<128x512xf32>
    %7 = arith.addf %4, %6 : vector<128x512xf32>
    %8 = vector.shape_cast %7 : vector<128x512xf32> to vector<8x16x512xf32>
    %cst_6 = arith.constant 0.000000e+00 : f32
    %9 = vector.broadcast %cst_6 : f32 to vector<16x128xf32>
    %10 = vector.extract_strided_slice %8 {offsets = [0, 0, 0], sizes = [1, 16, 512], strides = [1, 1, 1]} : vector<8x16x512xf32> to vector<1x16x512xf32>
    %11 = vector.shape_cast %10 : vector<1x16x512xf32> to vector<16x512xf32>
    %12 = arith.truncf %9 : vector<16x128xf32> to vector<16x128xbf16>
    %c0_7 = arith.constant 0 : index
    %c0_8 = arith.constant 0 : index
    %13 = vector.load %arg3[%c0_7, %c0_8] : memref<128x512xbf16, #tpu.memory_space<vmem>>, vector<128x512xbf16>
    %cst_9 = arith.constant dense<0.000000e+00> : vector<16x512xf32>
    %14 = tpu.matmul %12, %13, %cst_9 {dimension_numbers = #tpu.dot_dimension_numbers<[1], [0], [0], [1], [0, 0, 1, 1], [], []>} : vector<16x128xbf16>, vector<128x512xbf16>, vector<16x512xf32> -> vector<16x512xf32>
    %15 = arith.addf %11, %14 : vector<16x512xf32>
    %16 = vector.extract_strided_slice %15 {offsets = [0, 0], sizes = [16, 384], strides = [1, 1]} : vector<16x512xf32> to vector<16x384xf32>
    %17 = arith.negf %16 : vector<16x384xf32>
    %18 = math.exp %17 : vector<16x384xf32>
    %cst_10 = arith.constant 1.000000e+00 : f32
    %19 = vector.broadcast %cst_10 : f32 to vector<16x384xf32>
    %20 = arith.addf %19, %18 : vector<16x384xf32>
    %21 = arith.divf %19, %20 : vector<16x384xf32>
    %22 = vector.extract_strided_slice %21 {offsets = [0, 0], sizes = [16, 128], strides = [1, 1]} : vector<16x384xf32> to vector<16x128xf32>
    %23 = vector.extract_strided_slice %21 {offsets = [0, 128], sizes = [16, 128], strides = [1, 1]} : vector<16x384xf32> to vector<16x128xf32>
    %24 = vector.extract_strided_slice %21 {offsets = [0, 256], sizes = [16, 128], strides = [1, 1]} : vector<16x384xf32> to vector<16x128xf32>
    %25 = vector.extract_strided_slice %15 {offsets = [0, 384], sizes = [16, 128], strides = [1, 1]} : vector<16x512xf32> to vector<16x128xf32>
    %26 = math.tanh %25 : vector<16x128xf32>
    %27 = arith.mulf %23, %9 : vector<16x128xf32>
    %28 = arith.mulf %22, %26 : vector<16x128xf32>
    %29 = arith.addf %27, %28 : vector<16x128xf32>
    %30 = math.tanh %29 : vector<16x128xf32>
    %31 = arith.mulf %24, %30 : vector<16x128xf32>
    %32 = arith.truncf %31 : vector<16x128xf32> to vector<16x128xbf16>
    %c0_11 = arith.constant 0 : index
    %c0_12 = arith.constant 0 : index
    %33 = vector.load %arg4[%c0_11, %c0_12] : memref<128x512xbf16, #tpu.memory_space<vmem>>, vector<128x512xbf16>
    %cst_13 = arith.constant dense<0.000000e+00> : vector<16x512xf32>
    %34 = tpu.matmul %32, %33, %cst_13 {dimension_numbers = #tpu.dot_dimension_numbers<[1], [0], [0], [1], [0, 0, 1, 1], [], []>} : vector<16x128xbf16>, vector<128x512xbf16>, vector<16x512xf32> -> vector<16x512xf32>
    %35 = arith.truncf %9 : vector<16x128xf32> to vector<16x128xbf16>
    %c0_14 = arith.constant 0 : index
    %c0_15 = arith.constant 0 : index
    %36 = vector.load %arg6[%c0_14, %c0_15] : memref<128x512xbf16, #tpu.memory_space<vmem>>, vector<128x512xbf16>
    %cst_16 = arith.constant dense<0.000000e+00> : vector<16x512xf32>
    %37 = tpu.matmul %35, %36, %cst_16 {dimension_numbers = #tpu.dot_dimension_numbers<[1], [0], [0], [1], [0, 0, 1, 1], [], []>} : vector<16x128xbf16>, vector<128x512xbf16>, vector<16x512xf32> -> vector<16x512xf32>
    %38 = arith.addf %34, %37 : vector<16x512xf32>
    %c0_17 = arith.constant 0 : index
    %c0_18 = arith.constant 0 : index
    %39 = vector.load %arg5[%c0_17, %c0_18] : memref<1x512xf32, #tpu.memory_space<vmem>>, vector<1x512xf32>
    %40 = vector.broadcast %39 : vector<1x512xf32> to vector<16x512xf32>
    %41 = arith.addf %38, %40 : vector<16x512xf32>
    %42 = vector.extract_strided_slice %41 {offsets = [0, 0], sizes = [16, 384], strides = [1, 1]} : vector<16x512xf32> to vector<16x384xf32>
    %43 = arith.negf %42 : vector<16x384xf32>
    %44 = math.exp %43 : vector<16x384xf32>
    %cst_19 = arith.constant 1.000000e+00 : f32
    %45 = vector.broadcast %cst_19 : f32 to vector<16x384xf32>
    %46 = arith.addf %45, %44 : vector<16x384xf32>
    %47 = arith.divf %45, %46 : vector<16x384xf32>
    %48 = vector.extract_strided_slice %47 {offsets = [0, 0], sizes = [16, 128], strides = [1, 1]} : vector<16x384xf32> to vector<16x128xf32>
    %49 = vector.extract_strided_slice %47 {offsets = [0, 128], sizes = [16, 128], strides = [1, 1]} : vector<16x384xf32> to vector<16x128xf32>
    %50 = vector.extract_strided_slice %47 {offsets = [0, 256], sizes = [16, 128], strides = [1, 1]} : vector<16x384xf32> to vector<16x128xf32>
    %51 = vector.extract_strided_slice %41 {offsets = [0, 384], sizes = [16, 128], strides = [1, 1]} : vector<16x512xf32> to vector<16x128xf32>
    %52 = math.tanh %51 : vector<16x128xf32>
    %53 = arith.mulf %49, %9 : vector<16x128xf32>
    %54 = arith.mulf %48, %52 : vector<16x128xf32>
    %55 = arith.addf %53, %54 : vector<16x128xf32>
    %56 = math.tanh %55 : vector<16x128xf32>
    %57 = arith.mulf %50, %56 : vector<16x128xf32>
    %58 = vector.extract_strided_slice %8 {offsets = [1, 0, 0], sizes = [1, 16, 512], strides = [1, 1, 1]} : vector<8x16x512xf32> to vector<1x16x512xf32>
    %59 = vector.shape_cast %58 : vector<1x16x512xf32> to vector<16x512xf32>
    %60 = arith.truncf %31 : vector<16x128xf32> to vector<16x128xbf16>
    %c0_20 = arith.constant 0 : index
    %c0_21 = arith.constant 0 : index
    %61 = vector.load %arg3[%c0_20, %c0_21] : memref<128x512xbf16, #tpu.memory_space<vmem>>, vector<128x512xbf16>
    %cst_22 = arith.constant dense<0.000000e+00> : vector<16x512xf32>
    %62 = tpu.matmul %60, %61, %cst_22 {dimension_numbers = #tpu.dot_dimension_numbers<[1], [0], [0], [1], [0, 0, 1, 1], [], []>} : vector<16x128xbf16>, vector<128x512xbf16>, vector<16x512xf32> -> vector<16x512xf32>
    %63 = arith.addf %59, %62 : vector<16x512xf32>
    %64 = vector.extract_strided_slice %63 {offsets = [0, 0], sizes = [16, 384], strides = [1, 1]} : vector<16x512xf32> to vector<16x384xf32>
    %65 = arith.negf %64 : vector<16x384xf32>
    %66 = math.exp %65 : vector<16x384xf32>
    %cst_23 = arith.constant 1.000000e+00 : f32
    %67 = vector.broadcast %cst_23 : f32 to vector<16x384xf32>
    %68 = arith.addf %67, %66 : vector<16x384xf32>
    %69 = arith.divf %67, %68 : vector<16x384xf32>
    %70 = vector.extract_strided_slice %69 {offsets = [0, 0], sizes = [16, 128], strides = [1, 1]} : vector<16x384xf32> to vector<16x128xf32>
    %71 = vector.extract_strided_slice %69 {offsets = [0, 128], sizes = [16, 128], strides = [1, 1]} : vector<16x384xf32> to vector<16x128xf32>
    %72 = vector.extract_strided_slice %69 {offsets = [0, 256], sizes = [16, 128], strides = [1, 1]} : vector<16x384xf32> to vector<16x128xf32>
    %73 = vector.extract_strided_slice %63 {offsets = [0, 384], sizes = [16, 128], strides = [1, 1]} : vector<16x512xf32> to vector<16x128xf32>
    %74 = math.tanh %73 : vector<16x128xf32>
    %75 = arith.mulf %71, %29 : vector<16x128xf32>
    %76 = arith.mulf %70, %74 : vector<16x128xf32>
    %77 = arith.addf %75, %76 : vector<16x128xf32>
    %78 = math.tanh %77 : vector<16x128xf32>
    %79 = arith.mulf %72, %78 : vector<16x128xf32>
    %80 = arith.truncf %79 : vector<16x128xf32> to vector<16x128xbf16>
    %c0_24 = arith.constant 0 : index
    %c0_25 = arith.constant 0 : index
    %81 = vector.load %arg4[%c0_24, %c0_25] : memref<128x512xbf16, #tpu.memory_space<vmem>>, vector<128x512xbf16>
    %cst_26 = arith.constant dense<0.000000e+00> : vector<16x512xf32>
    %82 = tpu.matmul %80, %81, %cst_26 {dimension_numbers = #tpu.dot_dimension_numbers<[1], [0], [0], [1], [0, 0, 1, 1], [], []>} : vector<16x128xbf16>, vector<128x512xbf16>, vector<16x512xf32> -> vector<16x512xf32>
    %83 = arith.truncf %57 : vector<16x128xf32> to vector<16x128xbf16>
    %c0_27 = arith.constant 0 : index
    %c0_28 = arith.constant 0 : index
    %84 = vector.load %arg6[%c0_27, %c0_28] : memref<128x512xbf16, #tpu.memory_space<vmem>>, vector<128x512xbf16>
    %cst_29 = arith.constant dense<0.000000e+00> : vector<16x512xf32>
    %85 = tpu.matmul %83, %84, %cst_29 {dimension_numbers = #tpu.dot_dimension_numbers<[1], [0], [0], [1], [0, 0, 1, 1], [], []>} : vector<16x128xbf16>, vector<128x512xbf16>, vector<16x512xf32> -> vector<16x512xf32>
    %86 = arith.addf %82, %85 : vector<16x512xf32>
    %c0_30 = arith.constant 0 : index
    %c0_31 = arith.constant 0 : index
    %87 = vector.load %arg5[%c0_30, %c0_31] : memref<1x512xf32, #tpu.memory_space<vmem>>, vector<1x512xf32>
    %88 = vector.broadcast %87 : vector<1x512xf32> to vector<16x512xf32>
    %89 = arith.addf %86, %88 : vector<16x512xf32>
    %90 = vector.extract_strided_slice %89 {offsets = [0, 0], sizes = [16, 384], strides = [1, 1]} : vector<16x512xf32> to vector<16x384xf32>
    %91 = arith.negf %90 : vector<16x384xf32>
    %92 = math.exp %91 : vector<16x384xf32>
    %cst_32 = arith.constant 1.000000e+00 : f32
    %93 = vector.broadcast %cst_32 : f32 to vector<16x384xf32>
    %94 = arith.addf %93, %92 : vector<16x384xf32>
    %95 = arith.divf %93, %94 : vector<16x384xf32>
    %96 = vector.extract_strided_slice %95 {offsets = [0, 0], sizes = [16, 128], strides = [1, 1]} : vector<16x384xf32> to vector<16x128xf32>
    %97 = vector.extract_strided_slice %95 {offsets = [0, 128], sizes = [16, 128], strides = [1, 1]} : vector<16x384xf32> to vector<16x128xf32>
    %98 = vector.extract_strided_slice %95 {offsets = [0, 256], sizes = [16, 128], strides = [1, 1]} : vector<16x384xf32> to vector<16x128xf32>
    %99 = vector.extract_strided_slice %89 {offsets = [0, 384], sizes = [16, 128], strides = [1, 1]} : vector<16x512xf32> to vector<16x128xf32>
    %100 = math.tanh %99 : vector<16x128xf32>
    %101 = arith.mulf %97, %55 : vector<16x128xf32>
    %102 = arith.mulf %96, %100 : vector<16x128xf32>
    %103 = arith.addf %101, %102 : vector<16x128xf32>
    %104 = math.tanh %103 : vector<16x128xf32>
    %105 = arith.mulf %98, %104 : vector<16x128xf32>
    %106 = vector.extract_strided_slice %8 {offsets = [2, 0, 0], sizes = [1, 16, 512], strides = [1, 1, 1]} : vector<8x16x512xf32> to vector<1x16x512xf32>
    %107 = vector.shape_cast %106 : vector<1x16x512xf32> to vector<16x512xf32>
    %108 = arith.truncf %79 : vector<16x128xf32> to vector<16x128xbf16>
    %c0_33 = arith.constant 0 : index
    %c0_34 = arith.constant 0 : index
    %109 = vector.load %arg3[%c0_33, %c0_34] : memref<128x512xbf16, #tpu.memory_space<vmem>>, vector<128x512xbf16>
    %cst_35 = arith.constant dense<0.000000e+00> : vector<16x512xf32>
    %110 = tpu.matmul %108, %109, %cst_35 {dimension_numbers = #tpu.dot_dimension_numbers<[1], [0], [0], [1], [0, 0, 1, 1], [], []>} : vector<16x128xbf16>, vector<128x512xbf16>, vector<16x512xf32> -> vector<16x512xf32>
    %111 = arith.addf %107, %110 : vector<16x512xf32>
    %112 = vector.extract_strided_slice %111 {offsets = [0, 0], sizes = [16, 384], strides = [1, 1]} : vector<16x512xf32> to vector<16x384xf32>
    %113 = arith.negf %112 : vector<16x384xf32>
    %114 = math.exp %113 : vector<16x384xf32>
    %cst_36 = arith.constant 1.000000e+00 : f32
    %115 = vector.broadcast %cst_36 : f32 to vector<16x384xf32>
    %116 = arith.addf %115, %114 : vector<16x384xf32>
    %117 = arith.divf %115, %116 : vector<16x384xf32>
    %118 = vector.extract_strided_slice %117 {offsets = [0, 0], sizes = [16, 128], strides = [1, 1]} : vector<16x384xf32> to vector<16x128xf32>
    %119 = vector.extract_strided_slice %117 {offsets = [0, 128], sizes = [16, 128], strides = [1, 1]} : vector<16x384xf32> to vector<16x128xf32>
    %120 = vector.extract_strided_slice %117 {offsets = [0, 256], sizes = [16, 128], strides = [1, 1]} : vector<16x384xf32> to vector<16x128xf32>
    %121 = vector.extract_strided_slice %111 {offsets = [0, 384], sizes = [16, 128], strides = [1, 1]} : vector<16x512xf32> to vector<16x128xf32>
    %122 = math.tanh %121 : vector<16x128xf32>
    %123 = arith.mulf %119, %77 : vector<16x128xf32>
    %124 = arith.mulf %118, %122 : vector<16x128xf32>
    %125 = arith.addf %123, %124 : vector<16x128xf32>
    %126 = math.tanh %125 : vector<16x128xf32>
    %127 = arith.mulf %120, %126 : vector<16x128xf32>
    %128 = arith.truncf %127 : vector<16x128xf32> to vector<16x128xbf16>
    %c0_37 = arith.constant 0 : index
    %c0_38 = arith.constant 0 : index
    %129 = vector.load %arg4[%c0_37, %c0_38] : memref<128x512xbf16, #tpu.memory_space<vmem>>, vector<128x512xbf16>
    %cst_39 = arith.constant dense<0.000000e+00> : vector<16x512xf32>
    %130 = tpu.matmul %128, %129, %cst_39 {dimension_numbers = #tpu.dot_dimension_numbers<[1], [0], [0], [1], [0, 0, 1, 1], [], []>} : vector<16x128xbf16>, vector<128x512xbf16>, vector<16x512xf32> -> vector<16x512xf32>
    %131 = arith.truncf %105 : vector<16x128xf32> to vector<16x128xbf16>
    %c0_40 = arith.constant 0 : index
    %c0_41 = arith.constant 0 : index
    %132 = vector.load %arg6[%c0_40, %c0_41] : memref<128x512xbf16, #tpu.memory_space<vmem>>, vector<128x512xbf16>
    %cst_42 = arith.constant dense<0.000000e+00> : vector<16x512xf32>
    %133 = tpu.matmul %131, %132, %cst_42 {dimension_numbers = #tpu.dot_dimension_numbers<[1], [0], [0], [1], [0, 0, 1, 1], [], []>} : vector<16x128xbf16>, vector<128x512xbf16>, vector<16x512xf32> -> vector<16x512xf32>
    %134 = arith.addf %130, %133 : vector<16x512xf32>
    %c0_43 = arith.constant 0 : index
    %c0_44 = arith.constant 0 : index
    %135 = vector.load %arg5[%c0_43, %c0_44] : memref<1x512xf32, #tpu.memory_space<vmem>>, vector<1x512xf32>
    %136 = vector.broadcast %135 : vector<1x512xf32> to vector<16x512xf32>
    %137 = arith.addf %134, %136 : vector<16x512xf32>
    %138 = vector.extract_strided_slice %137 {offsets = [0, 0], sizes = [16, 384], strides = [1, 1]} : vector<16x512xf32> to vector<16x384xf32>
    %139 = arith.negf %138 : vector<16x384xf32>
    %140 = math.exp %139 : vector<16x384xf32>
    %cst_45 = arith.constant 1.000000e+00 : f32
    %141 = vector.broadcast %cst_45 : f32 to vector<16x384xf32>
    %142 = arith.addf %141, %140 : vector<16x384xf32>
    %143 = arith.divf %141, %142 : vector<16x384xf32>
    %144 = vector.extract_strided_slice %143 {offsets = [0, 0], sizes = [16, 128], strides = [1, 1]} : vector<16x384xf32> to vector<16x128xf32>
    %145 = vector.extract_strided_slice %143 {offsets = [0, 128], sizes = [16, 128], strides = [1, 1]} : vector<16x384xf32> to vector<16x128xf32>
    %146 = vector.extract_strided_slice %143 {offsets = [0, 256], sizes = [16, 128], strides = [1, 1]} : vector<16x384xf32> to vector<16x128xf32>
    %147 = vector.extract_strided_slice %137 {offsets = [0, 384], sizes = [16, 128], strides = [1, 1]} : vector<16x512xf32> to vector<16x128xf32>
    %148 = math.tanh %147 : vector<16x128xf32>
    %149 = arith.mulf %145, %103 : vector<16x128xf32>
    %150 = arith.mulf %144, %148 : vector<16x128xf32>
    %151 = arith.addf %149, %150 : vector<16x128xf32>
    %152 = math.tanh %151 : vector<16x128xf32>
    %153 = arith.mulf %146, %152 : vector<16x128xf32>
    %154 = vector.extract_strided_slice %8 {offsets = [3, 0, 0], sizes = [1, 16, 512], strides = [1, 1, 1]} : vector<8x16x512xf32> to vector<1x16x512xf32>
    %155 = vector.shape_cast %154 : vector<1x16x512xf32> to vector<16x512xf32>
    %156 = arith.truncf %127 : vector<16x128xf32> to vector<16x128xbf16>
    %c0_46 = arith.constant 0 : index
    %c0_47 = arith.constant 0 : index
    %157 = vector.load %arg3[%c0_46, %c0_47] : memref<128x512xbf16, #tpu.memory_space<vmem>>, vector<128x512xbf16>
    %cst_48 = arith.constant dense<0.000000e+00> : vector<16x512xf32>
    %158 = tpu.matmul %156, %157, %cst_48 {dimension_numbers = #tpu.dot_dimension_numbers<[1], [0], [0], [1], [0, 0, 1, 1], [], []>} : vector<16x128xbf16>, vector<128x512xbf16>, vector<16x512xf32> -> vector<16x512xf32>
    %159 = arith.addf %155, %158 : vector<16x512xf32>
    %160 = vector.extract_strided_slice %159 {offsets = [0, 0], sizes = [16, 384], strides = [1, 1]} : vector<16x512xf32> to vector<16x384xf32>
    %161 = arith.negf %160 : vector<16x384xf32>
    %162 = math.exp %161 : vector<16x384xf32>
    %cst_49 = arith.constant 1.000000e+00 : f32
    %163 = vector.broadcast %cst_49 : f32 to vector<16x384xf32>
    %164 = arith.addf %163, %162 : vector<16x384xf32>
    %165 = arith.divf %163, %164 : vector<16x384xf32>
    %166 = vector.extract_strided_slice %165 {offsets = [0, 0], sizes = [16, 128], strides = [1, 1]} : vector<16x384xf32> to vector<16x128xf32>
    %167 = vector.extract_strided_slice %165 {offsets = [0, 128], sizes = [16, 128], strides = [1, 1]} : vector<16x384xf32> to vector<16x128xf32>
    %168 = vector.extract_strided_slice %165 {offsets = [0, 256], sizes = [16, 128], strides = [1, 1]} : vector<16x384xf32> to vector<16x128xf32>
    %169 = vector.extract_strided_slice %159 {offsets = [0, 384], sizes = [16, 128], strides = [1, 1]} : vector<16x512xf32> to vector<16x128xf32>
    %170 = math.tanh %169 : vector<16x128xf32>
    %171 = arith.mulf %167, %125 : vector<16x128xf32>
    %172 = arith.mulf %166, %170 : vector<16x128xf32>
    %173 = arith.addf %171, %172 : vector<16x128xf32>
    %174 = math.tanh %173 : vector<16x128xf32>
    %175 = arith.mulf %168, %174 : vector<16x128xf32>
    %176 = arith.truncf %175 : vector<16x128xf32> to vector<16x128xbf16>
    %c0_50 = arith.constant 0 : index
    %c0_51 = arith.constant 0 : index
    %177 = vector.load %arg4[%c0_50, %c0_51] : memref<128x512xbf16, #tpu.memory_space<vmem>>, vector<128x512xbf16>
    %cst_52 = arith.constant dense<0.000000e+00> : vector<16x512xf32>
    %178 = tpu.matmul %176, %177, %cst_52 {dimension_numbers = #tpu.dot_dimension_numbers<[1], [0], [0], [1], [0, 0, 1, 1], [], []>} : vector<16x128xbf16>, vector<128x512xbf16>, vector<16x512xf32> -> vector<16x512xf32>
    %179 = arith.truncf %153 : vector<16x128xf32> to vector<16x128xbf16>
    %c0_53 = arith.constant 0 : index
    %c0_54 = arith.constant 0 : index
    %180 = vector.load %arg6[%c0_53, %c0_54] : memref<128x512xbf16, #tpu.memory_space<vmem>>, vector<128x512xbf16>
    %cst_55 = arith.constant dense<0.000000e+00> : vector<16x512xf32>
    %181 = tpu.matmul %179, %180, %cst_55 {dimension_numbers = #tpu.dot_dimension_numbers<[1], [0], [0], [1], [0, 0, 1, 1], [], []>} : vector<16x128xbf16>, vector<128x512xbf16>, vector<16x512xf32> -> vector<16x512xf32>
    %182 = arith.addf %178, %181 : vector<16x512xf32>
    %c0_56 = arith.constant 0 : index
    %c0_57 = arith.constant 0 : index
    %183 = vector.load %arg5[%c0_56, %c0_57] : memref<1x512xf32, #tpu.memory_space<vmem>>, vector<1x512xf32>
    %184 = vector.broadcast %183 : vector<1x512xf32> to vector<16x512xf32>
    %185 = arith.addf %182, %184 : vector<16x512xf32>
    %186 = vector.extract_strided_slice %185 {offsets = [0, 0], sizes = [16, 384], strides = [1, 1]} : vector<16x512xf32> to vector<16x384xf32>
    %187 = arith.negf %186 : vector<16x384xf32>
    %188 = math.exp %187 : vector<16x384xf32>
    %cst_58 = arith.constant 1.000000e+00 : f32
    %189 = vector.broadcast %cst_58 : f32 to vector<16x384xf32>
    %190 = arith.addf %189, %188 : vector<16x384xf32>
    %191 = arith.divf %189, %190 : vector<16x384xf32>
    %192 = vector.extract_strided_slice %191 {offsets = [0, 0], sizes = [16, 128], strides = [1, 1]} : vector<16x384xf32> to vector<16x128xf32>
    %193 = vector.extract_strided_slice %191 {offsets = [0, 128], sizes = [16, 128], strides = [1, 1]} : vector<16x384xf32> to vector<16x128xf32>
    %194 = vector.extract_strided_slice %191 {offsets = [0, 256], sizes = [16, 128], strides = [1, 1]} : vector<16x384xf32> to vector<16x128xf32>
    %195 = vector.extract_strided_slice %185 {offsets = [0, 384], sizes = [16, 128], strides = [1, 1]} : vector<16x512xf32> to vector<16x128xf32>
    %196 = math.tanh %195 : vector<16x128xf32>
    %197 = arith.mulf %193, %151 : vector<16x128xf32>
    %198 = arith.mulf %192, %196 : vector<16x128xf32>
    %199 = arith.addf %197, %198 : vector<16x128xf32>
    %200 = math.tanh %199 : vector<16x128xf32>
    %201 = arith.mulf %194, %200 : vector<16x128xf32>
    %202 = vector.extract_strided_slice %8 {offsets = [4, 0, 0], sizes = [1, 16, 512], strides = [1, 1, 1]} : vector<8x16x512xf32> to vector<1x16x512xf32>
    %203 = vector.shape_cast %202 : vector<1x16x512xf32> to vector<16x512xf32>
    %204 = arith.truncf %175 : vector<16x128xf32> to vector<16x128xbf16>
    %c0_59 = arith.constant 0 : index
    %c0_60 = arith.constant 0 : index
    %205 = vector.load %arg3[%c0_59, %c0_60] : memref<128x512xbf16, #tpu.memory_space<vmem>>, vector<128x512xbf16>
    %cst_61 = arith.constant dense<0.000000e+00> : vector<16x512xf32>
    %206 = tpu.matmul %204, %205, %cst_61 {dimension_numbers = #tpu.dot_dimension_numbers<[1], [0], [0], [1], [0, 0, 1, 1], [], []>} : vector<16x128xbf16>, vector<128x512xbf16>, vector<16x512xf32> -> vector<16x512xf32>
    %207 = arith.addf %203, %206 : vector<16x512xf32>
    %208 = vector.extract_strided_slice %207 {offsets = [0, 0], sizes = [16, 384], strides = [1, 1]} : vector<16x512xf32> to vector<16x384xf32>
    %209 = arith.negf %208 : vector<16x384xf32>
    %210 = math.exp %209 : vector<16x384xf32>
    %cst_62 = arith.constant 1.000000e+00 : f32
    %211 = vector.broadcast %cst_62 : f32 to vector<16x384xf32>
    %212 = arith.addf %211, %210 : vector<16x384xf32>
    %213 = arith.divf %211, %212 : vector<16x384xf32>
    %214 = vector.extract_strided_slice %213 {offsets = [0, 0], sizes = [16, 128], strides = [1, 1]} : vector<16x384xf32> to vector<16x128xf32>
    %215 = vector.extract_strided_slice %213 {offsets = [0, 128], sizes = [16, 128], strides = [1, 1]} : vector<16x384xf32> to vector<16x128xf32>
    %216 = vector.extract_strided_slice %213 {offsets = [0, 256], sizes = [16, 128], strides = [1, 1]} : vector<16x384xf32> to vector<16x128xf32>
    %217 = vector.extract_strided_slice %207 {offsets = [0, 384], sizes = [16, 128], strides = [1, 1]} : vector<16x512xf32> to vector<16x128xf32>
    %218 = math.tanh %217 : vector<16x128xf32>
    %219 = arith.mulf %215, %173 : vector<16x128xf32>
    %220 = arith.mulf %214, %218 : vector<16x128xf32>
    %221 = arith.addf %219, %220 : vector<16x128xf32>
    %222 = math.tanh %221 : vector<16x128xf32>
    %223 = arith.mulf %216, %222 : vector<16x128xf32>
    %224 = arith.truncf %223 : vector<16x128xf32> to vector<16x128xbf16>
    %c0_63 = arith.constant 0 : index
    %c0_64 = arith.constant 0 : index
    %225 = vector.load %arg4[%c0_63, %c0_64] : memref<128x512xbf16, #tpu.memory_space<vmem>>, vector<128x512xbf16>
    %cst_65 = arith.constant dense<0.000000e+00> : vector<16x512xf32>
    %226 = tpu.matmul %224, %225, %cst_65 {dimension_numbers = #tpu.dot_dimension_numbers<[1], [0], [0], [1], [0, 0, 1, 1], [], []>} : vector<16x128xbf16>, vector<128x512xbf16>, vector<16x512xf32> -> vector<16x512xf32>
    %227 = arith.truncf %201 : vector<16x128xf32> to vector<16x128xbf16>
    %c0_66 = arith.constant 0 : index
    %c0_67 = arith.constant 0 : index
    %228 = vector.load %arg6[%c0_66, %c0_67] : memref<128x512xbf16, #tpu.memory_space<vmem>>, vector<128x512xbf16>
    %cst_68 = arith.constant dense<0.000000e+00> : vector<16x512xf32>
    %229 = tpu.matmul %227, %228, %cst_68 {dimension_numbers = #tpu.dot_dimension_numbers<[1], [0], [0], [1], [0, 0, 1, 1], [], []>} : vector<16x128xbf16>, vector<128x512xbf16>, vector<16x512xf32> -> vector<16x512xf32>
    %230 = arith.addf %226, %229 : vector<16x512xf32>
    %c0_69 = arith.constant 0 : index
    %c0_70 = arith.constant 0 : index
    %231 = vector.load %arg5[%c0_69, %c0_70] : memref<1x512xf32, #tpu.memory_space<vmem>>, vector<1x512xf32>
    %232 = vector.broadcast %231 : vector<1x512xf32> to vector<16x512xf32>
    %233 = arith.addf %230, %232 : vector<16x512xf32>
    %234 = vector.extract_strided_slice %233 {offsets = [0, 0], sizes = [16, 384], strides = [1, 1]} : vector<16x512xf32> to vector<16x384xf32>
    %235 = arith.negf %234 : vector<16x384xf32>
    %236 = math.exp %235 : vector<16x384xf32>
    %cst_71 = arith.constant 1.000000e+00 : f32
    %237 = vector.broadcast %cst_71 : f32 to vector<16x384xf32>
    %238 = arith.addf %237, %236 : vector<16x384xf32>
    %239 = arith.divf %237, %238 : vector<16x384xf32>
    %240 = vector.extract_strided_slice %239 {offsets = [0, 0], sizes = [16, 128], strides = [1, 1]} : vector<16x384xf32> to vector<16x128xf32>
    %241 = vector.extract_strided_slice %239 {offsets = [0, 128], sizes = [16, 128], strides = [1, 1]} : vector<16x384xf32> to vector<16x128xf32>
    %242 = vector.extract_strided_slice %239 {offsets = [0, 256], sizes = [16, 128], strides = [1, 1]} : vector<16x384xf32> to vector<16x128xf32>
    %243 = vector.extract_strided_slice %233 {offsets = [0, 384], sizes = [16, 128], strides = [1, 1]} : vector<16x512xf32> to vector<16x128xf32>
    %244 = math.tanh %243 : vector<16x128xf32>
    %245 = arith.mulf %241, %199 : vector<16x128xf32>
    %246 = arith.mulf %240, %244 : vector<16x128xf32>
    %247 = arith.addf %245, %246 : vector<16x128xf32>
    %248 = math.tanh %247 : vector<16x128xf32>
    %249 = arith.mulf %242, %248 : vector<16x128xf32>
    %250 = vector.extract_strided_slice %8 {offsets = [5, 0, 0], sizes = [1, 16, 512], strides = [1, 1, 1]} : vector<8x16x512xf32> to vector<1x16x512xf32>
    %251 = vector.shape_cast %250 : vector<1x16x512xf32> to vector<16x512xf32>
    %252 = arith.truncf %223 : vector<16x128xf32> to vector<16x128xbf16>
    %c0_72 = arith.constant 0 : index
    %c0_73 = arith.constant 0 : index
    %253 = vector.load %arg3[%c0_72, %c0_73] : memref<128x512xbf16, #tpu.memory_space<vmem>>, vector<128x512xbf16>
    %cst_74 = arith.constant dense<0.000000e+00> : vector<16x512xf32>
    %254 = tpu.matmul %252, %253, %cst_74 {dimension_numbers = #tpu.dot_dimension_numbers<[1], [0], [0], [1], [0, 0, 1, 1], [], []>} : vector<16x128xbf16>, vector<128x512xbf16>, vector<16x512xf32> -> vector<16x512xf32>
    %255 = arith.addf %251, %254 : vector<16x512xf32>
    %256 = vector.extract_strided_slice %255 {offsets = [0, 0], sizes = [16, 384], strides = [1, 1]} : vector<16x512xf32> to vector<16x384xf32>
    %257 = arith.negf %256 : vector<16x384xf32>
    %258 = math.exp %257 : vector<16x384xf32>
    %cst_75 = arith.constant 1.000000e+00 : f32
    %259 = vector.broadcast %cst_75 : f32 to vector<16x384xf32>
    %260 = arith.addf %259, %258 : vector<16x384xf32>
    %261 = arith.divf %259, %260 : vector<16x384xf32>
    %262 = vector.extract_strided_slice %261 {offsets = [0, 0], sizes = [16, 128], strides = [1, 1]} : vector<16x384xf32> to vector<16x128xf32>
    %263 = vector.extract_strided_slice %261 {offsets = [0, 128], sizes = [16, 128], strides = [1, 1]} : vector<16x384xf32> to vector<16x128xf32>
    %264 = vector.extract_strided_slice %261 {offsets = [0, 256], sizes = [16, 128], strides = [1, 1]} : vector<16x384xf32> to vector<16x128xf32>
    %265 = vector.extract_strided_slice %255 {offsets = [0, 384], sizes = [16, 128], strides = [1, 1]} : vector<16x512xf32> to vector<16x128xf32>
    %266 = math.tanh %265 : vector<16x128xf32>
    %267 = arith.mulf %263, %221 : vector<16x128xf32>
    %268 = arith.mulf %262, %266 : vector<16x128xf32>
    %269 = arith.addf %267, %268 : vector<16x128xf32>
    %270 = math.tanh %269 : vector<16x128xf32>
    %271 = arith.mulf %264, %270 : vector<16x128xf32>
    %272 = arith.truncf %271 : vector<16x128xf32> to vector<16x128xbf16>
    %c0_76 = arith.constant 0 : index
    %c0_77 = arith.constant 0 : index
    %273 = vector.load %arg4[%c0_76, %c0_77] : memref<128x512xbf16, #tpu.memory_space<vmem>>, vector<128x512xbf16>
    %cst_78 = arith.constant dense<0.000000e+00> : vector<16x512xf32>
    %274 = tpu.matmul %272, %273, %cst_78 {dimension_numbers = #tpu.dot_dimension_numbers<[1], [0], [0], [1], [0, 0, 1, 1], [], []>} : vector<16x128xbf16>, vector<128x512xbf16>, vector<16x512xf32> -> vector<16x512xf32>
    %275 = arith.truncf %249 : vector<16x128xf32> to vector<16x128xbf16>
    %c0_79 = arith.constant 0 : index
    %c0_80 = arith.constant 0 : index
    %276 = vector.load %arg6[%c0_79, %c0_80] : memref<128x512xbf16, #tpu.memory_space<vmem>>, vector<128x512xbf16>
    %cst_81 = arith.constant dense<0.000000e+00> : vector<16x512xf32>
    %277 = tpu.matmul %275, %276, %cst_81 {dimension_numbers = #tpu.dot_dimension_numbers<[1], [0], [0], [1], [0, 0, 1, 1], [], []>} : vector<16x128xbf16>, vector<128x512xbf16>, vector<16x512xf32> -> vector<16x512xf32>
    %278 = arith.addf %274, %277 : vector<16x512xf32>
    %c0_82 = arith.constant 0 : index
    %c0_83 = arith.constant 0 : index
    %279 = vector.load %arg5[%c0_82, %c0_83] : memref<1x512xf32, #tpu.memory_space<vmem>>, vector<1x512xf32>
    %280 = vector.broadcast %279 : vector<1x512xf32> to vector<16x512xf32>
    %281 = arith.addf %278, %280 : vector<16x512xf32>
    %282 = vector.extract_strided_slice %281 {offsets = [0, 0], sizes = [16, 384], strides = [1, 1]} : vector<16x512xf32> to vector<16x384xf32>
    %283 = arith.negf %282 : vector<16x384xf32>
    %284 = math.exp %283 : vector<16x384xf32>
    %cst_84 = arith.constant 1.000000e+00 : f32
    %285 = vector.broadcast %cst_84 : f32 to vector<16x384xf32>
    %286 = arith.addf %285, %284 : vector<16x384xf32>
    %287 = arith.divf %285, %286 : vector<16x384xf32>
    %288 = vector.extract_strided_slice %287 {offsets = [0, 0], sizes = [16, 128], strides = [1, 1]} : vector<16x384xf32> to vector<16x128xf32>
    %289 = vector.extract_strided_slice %287 {offsets = [0, 128], sizes = [16, 128], strides = [1, 1]} : vector<16x384xf32> to vector<16x128xf32>
    %290 = vector.extract_strided_slice %287 {offsets = [0, 256], sizes = [16, 128], strides = [1, 1]} : vector<16x384xf32> to vector<16x128xf32>
    %291 = vector.extract_strided_slice %281 {offsets = [0, 384], sizes = [16, 128], strides = [1, 1]} : vector<16x512xf32> to vector<16x128xf32>
    %292 = math.tanh %291 : vector<16x128xf32>
    %293 = arith.mulf %289, %247 : vector<16x128xf32>
    %294 = arith.mulf %288, %292 : vector<16x128xf32>
    %295 = arith.addf %293, %294 : vector<16x128xf32>
    %296 = math.tanh %295 : vector<16x128xf32>
    %297 = arith.mulf %290, %296 : vector<16x128xf32>
    %298 = vector.extract_strided_slice %8 {offsets = [6, 0, 0], sizes = [1, 16, 512], strides = [1, 1, 1]} : vector<8x16x512xf32> to vector<1x16x512xf32>
    %299 = vector.shape_cast %298 : vector<1x16x512xf32> to vector<16x512xf32>
    %300 = arith.truncf %271 : vector<16x128xf32> to vector<16x128xbf16>
    %c0_85 = arith.constant 0 : index
    %c0_86 = arith.constant 0 : index
    %301 = vector.load %arg3[%c0_85, %c0_86] : memref<128x512xbf16, #tpu.memory_space<vmem>>, vector<128x512xbf16>
    %cst_87 = arith.constant dense<0.000000e+00> : vector<16x512xf32>
    %302 = tpu.matmul %300, %301, %cst_87 {dimension_numbers = #tpu.dot_dimension_numbers<[1], [0], [0], [1], [0, 0, 1, 1], [], []>} : vector<16x128xbf16>, vector<128x512xbf16>, vector<16x512xf32> -> vector<16x512xf32>
    %303 = arith.addf %299, %302 : vector<16x512xf32>
    %304 = vector.extract_strided_slice %303 {offsets = [0, 0], sizes = [16, 384], strides = [1, 1]} : vector<16x512xf32> to vector<16x384xf32>
    %305 = arith.negf %304 : vector<16x384xf32>
    %306 = math.exp %305 : vector<16x384xf32>
    %cst_88 = arith.constant 1.000000e+00 : f32
    %307 = vector.broadcast %cst_88 : f32 to vector<16x384xf32>
    %308 = arith.addf %307, %306 : vector<16x384xf32>
    %309 = arith.divf %307, %308 : vector<16x384xf32>
    %310 = vector.extract_strided_slice %309 {offsets = [0, 0], sizes = [16, 128], strides = [1, 1]} : vector<16x384xf32> to vector<16x128xf32>
    %311 = vector.extract_strided_slice %309 {offsets = [0, 128], sizes = [16, 128], strides = [1, 1]} : vector<16x384xf32> to vector<16x128xf32>
    %312 = vector.extract_strided_slice %309 {offsets = [0, 256], sizes = [16, 128], strides = [1, 1]} : vector<16x384xf32> to vector<16x128xf32>
    %313 = vector.extract_strided_slice %303 {offsets = [0, 384], sizes = [16, 128], strides = [1, 1]} : vector<16x512xf32> to vector<16x128xf32>
    %314 = math.tanh %313 : vector<16x128xf32>
    %315 = arith.mulf %311, %269 : vector<16x128xf32>
    %316 = arith.mulf %310, %314 : vector<16x128xf32>
    %317 = arith.addf %315, %316 : vector<16x128xf32>
    %318 = math.tanh %317 : vector<16x128xf32>
    %319 = arith.mulf %312, %318 : vector<16x128xf32>
    %320 = arith.truncf %319 : vector<16x128xf32> to vector<16x128xbf16>
    %c0_89 = arith.constant 0 : index
    %c0_90 = arith.constant 0 : index
    %321 = vector.load %arg4[%c0_89, %c0_90] : memref<128x512xbf16, #tpu.memory_space<vmem>>, vector<128x512xbf16>
    %cst_91 = arith.constant dense<0.000000e+00> : vector<16x512xf32>
    %322 = tpu.matmul %320, %321, %cst_91 {dimension_numbers = #tpu.dot_dimension_numbers<[1], [0], [0], [1], [0, 0, 1, 1], [], []>} : vector<16x128xbf16>, vector<128x512xbf16>, vector<16x512xf32> -> vector<16x512xf32>
    %323 = arith.truncf %297 : vector<16x128xf32> to vector<16x128xbf16>
    %c0_92 = arith.constant 0 : index
    %c0_93 = arith.constant 0 : index
    %324 = vector.load %arg6[%c0_92, %c0_93] : memref<128x512xbf16, #tpu.memory_space<vmem>>, vector<128x512xbf16>
    %cst_94 = arith.constant dense<0.000000e+00> : vector<16x512xf32>
    %325 = tpu.matmul %323, %324, %cst_94 {dimension_numbers = #tpu.dot_dimension_numbers<[1], [0], [0], [1], [0, 0, 1, 1], [], []>} : vector<16x128xbf16>, vector<128x512xbf16>, vector<16x512xf32> -> vector<16x512xf32>
    %326 = arith.addf %322, %325 : vector<16x512xf32>
    %c0_95 = arith.constant 0 : index
    %c0_96 = arith.constant 0 : index
    %327 = vector.load %arg5[%c0_95, %c0_96] : memref<1x512xf32, #tpu.memory_space<vmem>>, vector<1x512xf32>
    %328 = vector.broadcast %327 : vector<1x512xf32> to vector<16x512xf32>
    %329 = arith.addf %326, %328 : vector<16x512xf32>
    %330 = vector.extract_strided_slice %329 {offsets = [0, 0], sizes = [16, 384], strides = [1, 1]} : vector<16x512xf32> to vector<16x384xf32>
    %331 = arith.negf %330 : vector<16x384xf32>
    %332 = math.exp %331 : vector<16x384xf32>
    %cst_97 = arith.constant 1.000000e+00 : f32
    %333 = vector.broadcast %cst_97 : f32 to vector<16x384xf32>
    %334 = arith.addf %333, %332 : vector<16x384xf32>
    %335 = arith.divf %333, %334 : vector<16x384xf32>
    %336 = vector.extract_strided_slice %335 {offsets = [0, 0], sizes = [16, 128], strides = [1, 1]} : vector<16x384xf32> to vector<16x128xf32>
    %337 = vector.extract_strided_slice %335 {offsets = [0, 128], sizes = [16, 128], strides = [1, 1]} : vector<16x384xf32> to vector<16x128xf32>
    %338 = vector.extract_strided_slice %335 {offsets = [0, 256], sizes = [16, 128], strides = [1, 1]} : vector<16x384xf32> to vector<16x128xf32>
    %339 = vector.extract_strided_slice %329 {offsets = [0, 384], sizes = [16, 128], strides = [1, 1]} : vector<16x512xf32> to vector<16x128xf32>
    %340 = math.tanh %339 : vector<16x128xf32>
    %341 = arith.mulf %337, %295 : vector<16x128xf32>
    %342 = arith.mulf %336, %340 : vector<16x128xf32>
    %343 = arith.addf %341, %342 : vector<16x128xf32>
    %344 = math.tanh %343 : vector<16x128xf32>
    %345 = arith.mulf %338, %344 : vector<16x128xf32>
    %346 = vector.extract_strided_slice %8 {offsets = [7, 0, 0], sizes = [1, 16, 512], strides = [1, 1, 1]} : vector<8x16x512xf32> to vector<1x16x512xf32>
    %347 = vector.shape_cast %346 : vector<1x16x512xf32> to vector<16x512xf32>
    %348 = arith.truncf %319 : vector<16x128xf32> to vector<16x128xbf16>
    %c0_98 = arith.constant 0 : index
    %c0_99 = arith.constant 0 : index
    %349 = vector.load %arg3[%c0_98, %c0_99] : memref<128x512xbf16, #tpu.memory_space<vmem>>, vector<128x512xbf16>
    %cst_100 = arith.constant dense<0.000000e+00> : vector<16x512xf32>
    %350 = tpu.matmul %348, %349, %cst_100 {dimension_numbers = #tpu.dot_dimension_numbers<[1], [0], [0], [1], [0, 0, 1, 1], [], []>} : vector<16x128xbf16>, vector<128x512xbf16>, vector<16x512xf32> -> vector<16x512xf32>
    %351 = arith.addf %347, %350 : vector<16x512xf32>
    %352 = vector.extract_strided_slice %351 {offsets = [0, 0], sizes = [16, 384], strides = [1, 1]} : vector<16x512xf32> to vector<16x384xf32>
    %353 = arith.negf %352 : vector<16x384xf32>
    %354 = math.exp %353 : vector<16x384xf32>
    %cst_101 = arith.constant 1.000000e+00 : f32
    %355 = vector.broadcast %cst_101 : f32 to vector<16x384xf32>
    %356 = arith.addf %355, %354 : vector<16x384xf32>
    %357 = arith.divf %355, %356 : vector<16x384xf32>
    %358 = vector.extract_strided_slice %357 {offsets = [0, 0], sizes = [16, 128], strides = [1, 1]} : vector<16x384xf32> to vector<16x128xf32>
    %359 = vector.extract_strided_slice %357 {offsets = [0, 128], sizes = [16, 128], strides = [1, 1]} : vector<16x384xf32> to vector<16x128xf32>
    %360 = vector.extract_strided_slice %357 {offsets = [0, 256], sizes = [16, 128], strides = [1, 1]} : vector<16x384xf32> to vector<16x128xf32>
    %361 = vector.extract_strided_slice %351 {offsets = [0, 384], sizes = [16, 128], strides = [1, 1]} : vector<16x512xf32> to vector<16x128xf32>
    %362 = math.tanh %361 : vector<16x128xf32>
    %363 = arith.mulf %359, %317 : vector<16x128xf32>
    %364 = arith.mulf %358, %362 : vector<16x128xf32>
    %365 = arith.addf %363, %364 : vector<16x128xf32>
    %366 = math.tanh %365 : vector<16x128xf32>
    %367 = arith.mulf %360, %366 : vector<16x128xf32>
    %368 = arith.truncf %367 : vector<16x128xf32> to vector<16x128xbf16>
    %c0_102 = arith.constant 0 : index
    %c0_103 = arith.constant 0 : index
    %369 = vector.load %arg4[%c0_102, %c0_103] : memref<128x512xbf16, #tpu.memory_space<vmem>>, vector<128x512xbf16>
    %cst_104 = arith.constant dense<0.000000e+00> : vector<16x512xf32>
    %370 = tpu.matmul %368, %369, %cst_104 {dimension_numbers = #tpu.dot_dimension_numbers<[1], [0], [0], [1], [0, 0, 1, 1], [], []>} : vector<16x128xbf16>, vector<128x512xbf16>, vector<16x512xf32> -> vector<16x512xf32>
    %371 = arith.truncf %345 : vector<16x128xf32> to vector<16x128xbf16>
    %c0_105 = arith.constant 0 : index
    %c0_106 = arith.constant 0 : index
    %372 = vector.load %arg6[%c0_105, %c0_106] : memref<128x512xbf16, #tpu.memory_space<vmem>>, vector<128x512xbf16>
    %cst_107 = arith.constant dense<0.000000e+00> : vector<16x512xf32>
    %373 = tpu.matmul %371, %372, %cst_107 {dimension_numbers = #tpu.dot_dimension_numbers<[1], [0], [0], [1], [0, 0, 1, 1], [], []>} : vector<16x128xbf16>, vector<128x512xbf16>, vector<16x512xf32> -> vector<16x512xf32>
    %374 = arith.addf %370, %373 : vector<16x512xf32>
    %c0_108 = arith.constant 0 : index
    %c0_109 = arith.constant 0 : index
    %375 = vector.load %arg5[%c0_108, %c0_109] : memref<1x512xf32, #tpu.memory_space<vmem>>, vector<1x512xf32>
    %376 = vector.broadcast %375 : vector<1x512xf32> to vector<16x512xf32>
    %377 = arith.addf %374, %376 : vector<16x512xf32>
    %378 = vector.extract_strided_slice %377 {offsets = [0, 0], sizes = [16, 384], strides = [1, 1]} : vector<16x512xf32> to vector<16x384xf32>
    %379 = arith.negf %378 : vector<16x384xf32>
    %380 = math.exp %379 : vector<16x384xf32>
    %cst_110 = arith.constant 1.000000e+00 : f32
    %381 = vector.broadcast %cst_110 : f32 to vector<16x384xf32>
    %382 = arith.addf %381, %380 : vector<16x384xf32>
    %383 = arith.divf %381, %382 : vector<16x384xf32>
    %384 = vector.extract_strided_slice %383 {offsets = [0, 0], sizes = [16, 128], strides = [1, 1]} : vector<16x384xf32> to vector<16x128xf32>
    %385 = vector.extract_strided_slice %383 {offsets = [0, 128], sizes = [16, 128], strides = [1, 1]} : vector<16x384xf32> to vector<16x128xf32>
    %386 = vector.extract_strided_slice %383 {offsets = [0, 256], sizes = [16, 128], strides = [1, 1]} : vector<16x384xf32> to vector<16x128xf32>
    %387 = vector.extract_strided_slice %377 {offsets = [0, 384], sizes = [16, 128], strides = [1, 1]} : vector<16x512xf32> to vector<16x128xf32>
    %388 = math.tanh %387 : vector<16x128xf32>
    %389 = arith.mulf %385, %343 : vector<16x128xf32>
    %390 = arith.mulf %384, %388 : vector<16x128xf32>
    %391 = arith.addf %389, %390 : vector<16x128xf32>
    %392 = math.tanh %391 : vector<16x128xf32>
    %393 = arith.mulf %386, %392 : vector<16x128xf32>
    %c0_111 = arith.constant 0 : index
    %c0_112 = arith.constant 0 : index
    %394 = vector.load %arg7[%c0_111, %c0_112] : memref<128x1xf32, #tpu.memory_space<vmem>>, vector<128x1xf32>
    %cst_113 = arith.constant dense<0.000000e+00> : vector<16x1xf32>
    %395 = tpu.matmul %393, %394, %cst_113 {dimension_numbers = #tpu.dot_dimension_numbers<[1], [0], [0], [1], [0, 0, 1, 1], [], []>} : vector<16x128xf32>, vector<128x1xf32>, vector<16x1xf32> -> vector<16x1xf32>
    %c0_114 = arith.constant 0 : index
    %c0_115 = arith.constant 0 : index
    %396 = vector.load %arg8[%c0_114, %c0_115] : memref<1x1xf32, #tpu.memory_space<vmem>>, vector<1x1xf32>
    %397 = vector.broadcast %396 : vector<1x1xf32> to vector<16x1xf32>
    %398 = arith.addf %395, %397 : vector<16x1xf32>
    %c0_116 = arith.constant 0 : index
    %c0_117 = arith.constant 0 : index
    %399 = vector.load %arg9[%c0_116, %c0_117] : memref<16x1xf32, #tpu.memory_space<vmem>>, vector<16x1xf32>
    tpu.vector_store %arg9[%c0_116, %c0_117], %398 {strides = array<i32>} : memref<16x1xf32, #tpu.memory_space<vmem>>, vector<16x1xf32>,
    return
  }
}

</mosaic_0001>

<llo_original>
// kernel: multimodal_stock_predictor.1
$region0: #{multimodal_stock_predictor.1}
  #allocation0 [shape = 'u32[]', space=smem, size = 0x4, offset = 0x4, fixed_abs, tag = 'smem constant byte address 0x4 - core index']
  #allocation1 [shape = 'u32[72,128]{1,0:T(1,128)}', space=vmem, size = 0x9000, scoped, tag = 'internal scratch']
  #allocation2 [shape = 'f32[1,1]{1,0:T(1,128)S(1)}', space=vmem, size = 0x200, scoped, tag = 'scoped memory for multimodal_stock_predictor.1']
  %s0 = inlined_call_operand.vmem [shape: f32[8,16,10], index: 0, kind: input, shape index: {}]
  %s1 = inlined_call_operand.vmem [shape: bf16[10,512], index: 1, kind: input, shape index: {}]
  %s2 = inlined_call_operand.vmem [shape: f32[1,512], index: 2, kind: input, shape index: {}]
  %s3 = inlined_call_operand.vmem [shape: bf16[128,512], index: 3, kind: input, shape index: {}]
  %s4 = inlined_call_operand.hbm [shape: bf16[128,512], index: 4, kind: input, shape index: {}]
  %s5 = inlined_call_operand.vmem [shape: f32[1,512], index: 5, kind: input, shape index: {}]
  %s6 = inlined_call_operand.hbm [shape: bf16[128,512], index: 6, kind: input, shape index: {}]
  %s7 = inlined_call_operand.vmem [shape: f32[128,1], index: 7, kind: input, shape index: {}]
  %s8 = inlined_call_operand.<no memory space> [shape: f32[1,1], index: 8, kind: input, shape index: {}]
  %s9 = inlined_call_operand.vmem [shape: f32[16,1], index: 9, kind: output, shape index: {}]
  %s10 = sld [smem:[#allocation0]]
  $region54: #{multimodal_stock_predictor.1} parent=0
    _
  %s12 = ssub.s32 1, %s10
  %s13 = scalar_select 0, %s12, %s10
  %v14 = vstv %s8
  %15 = vst [vmem:[#allocation2] sm:$0x1] %v14
  $region1: #{multimodal_stock_predictor.1} parent=0
    #allocation3 [shape = 'u8[131072]{0}', space=vmem, size = 0x20000, scoped, tag = 'input window, operand 4, single buffered']
    #allocation4 [shape = 's32[1]{0}', space=sflag, size = 0x4, scoped, tag = 'scoped memory for multimodal_stock_predictor.1']
    #allocation5 [shape = 'u8[131072]{0}', space=vmem, size = 0x20000, scoped, tag = 'input window, operand 6, single buffered']
    #allocation6 [shape = 's32[1]{0}', space=sflag, size = 0x4, scoped, tag = 'scoped memory for multimodal_stock_predictor.1']
    %16 = vsyncpa [#allocation4], 0
    %17 = vsyncpa [#allocation6], 0
    // Predicated region
    $region2: #{multimodal_stock_predictor.1} parent=1 // pred_check
      _
    $region3: #{multimodal_stock_predictor.1} parent=1 // pred_check_branch
      %19 = sbr.rel (0) target = $region5
    $region4: #{multimodal_stock_predictor.1} parent=1 // pred_region
      _
    $region5: #{multimodal_stock_predictor.1} parent=1 // pred_fallthru
      _
    // Predicated region
    $region6: #{multimodal_stock_predictor.1} parent=1 // pred_check
      _
    $region7: #{multimodal_stock_predictor.1} parent=1 // pred_check_branch
      %21 = sbr.rel (0) target = $region9
    $region8: #{multimodal_stock_predictor.1} parent=1 // pred_region
      _
    $region9: #{multimodal_stock_predictor.1} parent=1 // pred_fallthru
      _
    // Predicated region
    $region10: #{multimodal_stock_predictor.1} parent=1 // pred_check
      _
    $region11: #{multimodal_stock_predictor.1} parent=1 // pred_check_branch
      %23 = sbr.rel (0) target = $region13
    $region12: #{multimodal_stock_predictor.1} parent=1 // pred_region
      _
    $region13: #{multimodal_stock_predictor.1} parent=1 // pred_fallthru
      _
    // Predicated region
    $region14: #{multimodal_stock_predictor.1} parent=1 // pred_check
      _
    $region15: #{multimodal_stock_predictor.1} parent=1 // pred_check_branch
      %25 = sbr.rel (0) target = $region17
    $region16: #{multimodal_stock_predictor.1} parent=1 // pred_region
      _
    $region17: #{multimodal_stock_predictor.1} parent=1 // pred_fallthru
      _
    // Predicated region
    $region18: #{multimodal_stock_predictor.1} parent=1 // pred_check
      _
    $region19: #{multimodal_stock_predictor.1} parent=1 // pred_check_branch
      %27 = sbr.rel (0) target = $region21
    $region20: #{multimodal_stock_predictor.1} parent=1 // pred_region
      %29 = vsyncadd [#allocation4], 0
      %s30 = sshll.u32 %s4, 4
      %s31 = int_to_ptr.hbm [resolvable:$true] %s30
      %s32 = sshll.u32 [#allocation3], 4
      %s33 = int_to_ptr.vmem [resolvable:$true] %s32
      %38 = dma.hbm_to_vmem [thread:$0]  %s31, 4096, %s33, [#allocation4], 256, 256, 16
    $region21: #{multimodal_stock_predictor.1} parent=1 // pred_fallthru
      _
    // Predicated region
    $region22: #{multimodal_stock_predictor.1} parent=1 // pred_check
      _
    $region23: #{multimodal_stock_predictor.1} parent=1 // pred_check_branch
      %40 = sbr.rel (0) target = $region25
    $region24: #{multimodal_stock_predictor.1} parent=1 // pred_region
      _
    $region25: #{multimodal_stock_predictor.1} parent=1 // pred_fallthru
      _
    // Predicated region
    $region26: #{multimodal_stock_predictor.1} parent=1 // pred_check
      _
    $region27: #{multimodal_stock_predictor.1} parent=1 // pred_check_branch
      %42 = sbr.rel (0) target = $region29
    $region28: #{multimodal_stock_predictor.1} parent=1 // pred_region
      %44 = vsyncadd [#allocation6], 0
      %s45 = sshll.u32 %s6, 4
      %s46 = int_to_ptr.hbm [resolvable:$true] %s45
      %s47 = sshll.u32 [#allocation5], 4
      %s48 = int_to_ptr.vmem [resolvable:$true] %s47
      %53 = dma.hbm_to_vmem [thread:$0]  %s46, 4096, %s48, [#allocation6], 256, 256, 16
    $region29: #{multimodal_stock_predictor.1} parent=1 // pred_fallthru
      _
    // Predicated region
    $region30: #{multimodal_stock_predictor.1} parent=1 // pred_check
      _
    $region31: #{multimodal_stock_predictor.1} parent=1 // pred_check_branch
      %55 = sbr.rel (0) target = $region33
    $region32: #{multimodal_stock_predictor.1} parent=1 // pred_region
      _
    $region33: #{multimodal_stock_predictor.1} parent=1 // pred_fallthru
      _
    // Predicated region
    $region34: #{multimodal_stock_predictor.1} parent=1 // pred_check
      _
    $region35: #{multimodal_stock_predictor.1} parent=1 // pred_check_branch
      %57 = sbr.rel (0) target = $region37
    $region36: #{multimodal_stock_predictor.1} parent=1 // pred_region
      _
    $region37: #{multimodal_stock_predictor.1} parent=1 // pred_fallthru
      _
    // Predicated region
    $region38: #{multimodal_stock_predictor.1} parent=1 // pred_check
      _
    $region39: #{multimodal_stock_predictor.1} parent=1 // pred_check_branch
      %59 = sbr.rel (0) target = $region41
    $region40: #{multimodal_stock_predictor.1} parent=1 // pred_region
      %61 = dma.done [#allocation4], 4096
    $region41: #{multimodal_stock_predictor.1} parent=1 // pred_fallthru
      _
    // Predicated region
    $region42: #{multimodal_stock_predictor.1} parent=1 // pred_check
      _
    $region43: #{multimodal_stock_predictor.1} parent=1 // pred_check_branch
      %63 = sbr.rel (0) target = $region45
    $region44: #{multimodal_stock_predictor.1} parent=1 // pred_region
      %65 = dma.done [#allocation6], 4096
    $region45: #{multimodal_stock_predictor.1} parent=1 // pred_fallthru
      _
    %v67 = vld [vmem:[%s0] sm:$0xff]
    %v68 = vld [vmem:[%s0 + $0x8] sm:$0xff]
    %v69 = vld [vmem:[%s0 + $0x10] sm:$0xff]
    %v70 = vld [vmem:[%s0 + $0x18] sm:$0xff]
    %v71 = vld [vmem:[%s0 + $0x20] sm:$0xff]
    %v72 = vld [vmem:[%s0 + $0x28] sm:$0xff]
    %v73 = vld [vmem:[%s0 + $0x30] sm:$0xff]
    %v74 = vld [vmem:[%s0 + $0x38] sm:$0xff]
    %v75 = vld [vmem:[%s0 + $0x40] sm:$0xff]
    %v76 = vld [vmem:[%s0 + $0x48] sm:$0xff]
    %v77 = vld [vmem:[%s0 + $0x50] sm:$0xff]
    %v78 = vld [vmem:[%s0 + $0x58] sm:$0xff]
    %v79 = vld [vmem:[%s0 + $0x60] sm:$0xff]
    %v80 = vld [vmem:[%s0 + $0x68] sm:$0xff]
    %v81 = vld [vmem:[%s0 + $0x70] sm:$0xff]
    %v82 = vld [vmem:[%s0 + $0x78] sm:$0xff]
    %v83 = vpack.c.bf16 %v68, %v67
    %v84 = vpack.c.bf16 %v70, %v69
    %v85 = vpack.c.bf16 %v72, %v71
    %v86 = vpack.c.bf16 %v74, %v73
    %v87 = vpack.c.bf16 %v76, %v75
    %v88 = vpack.c.bf16 %v78, %v77
    %v89 = vpack.c.bf16 %v80, %v79
    %v90 = vpack.c.bf16 %v82, %v81
    %v91 = vld [vmem:[%s1] sm:$0xff]
    %v92 = vld [vmem:[%s1 + $0x8] sm:$0xff]
    %v93 = vld [vmem:[%s1 + $0x10] sm:$0x11]
    %v94 = vld [vmem:[%s1 + $0x18] sm:$0x11]
    %v95 = vld [vmem:[%s2] sm:$0xf]
    %v97 = vperm.slane %v95, 0
    %v98 = vperm.slane %v95, 1
    %v99 = vperm.slane %v95, 2
    %v100 = vperm.slane %v95, 3
    %v109 = vunpack.c.l.b16 %v91
    %v110 = vunpack.c.h.b16 %v91
    %v111 = vunpack.c.l.b16 %v92
    %v112 = vunpack.c.h.b16 %v92
    %v113 = vunpack.c.l.b16 %v93
    %v114 = vunpack.c.h.b16 %v93
    %v115 = vunpack.c.l.b16 %v94
    %v116 = vunpack.c.h.b16 %v94
    %v117 = vpack.c.b16 %v113, %v109
    %v118 = vpack.c.b16 %v114, %v110
    %v119 = vpack.c.b16 %v115, %v111
    %v120 = vpack.c.b16 %v116, %v112
    %vm121 = vcmask 80896
    %v123 = vsel %vm121, %v83, 0
    %v126 = vsel %vm121, %v84, 0
    %v129 = vsel %vm121, %v85, 0
    %v132 = vsel %vm121, %v86, 0
    %v135 = vsel %vm121, %v87, 0
    %v138 = vsel %vm121, %v88, 0
    %v141 = vsel %vm121, %v89, 0
    %v144 = vsel %vm121, %v90, 0
    %vm146 = vcmask 1044480
    %v148 = vsel %vm146, %v117, 0
    %v151 = vsel %vm146, %v118, 0
    %v154 = vsel %vm146, %v119, 0
    %v157 = vsel %vm146, %v120, 0
    %159 = vmatpush.bf16.msra.mxu0 0
    %160 = vmatpush.bf16.msra.mxu0 0
    %161 = vmatpush.bf16.msra.mxu0 0
    %162 = vmatpush.bf16.msra.mxu0 0
    %163 = vmatpush.bf16.msra.mxu0 0
    %164 = vmatpush.bf16.msra.mxu0 0
    %165 = vmatpush.bf16.msra.mxu0 0
    %166 = vmatpush.bf16.msra.mxu0 %v148
    %167 = vmatmul.bf16.gmra.mxu0 %v123
    %v168 = vpop.f32.mrf.mxu0
    %v169 = vadd.f32 %v97, %v168
    %v170 = vpop.f32.mrf.mxu0
    %v171 = vadd.f32 %v97, %v170
    %172 = vmatmul.bf16.gmra.mxu0 %v126
    %v173 = vpop.f32.mrf.mxu0
    %v174 = vadd.f32 %v97, %v173
    %v175 = vpop.f32.mrf.mxu0
    %v176 = vadd.f32 %v97, %v175
    %177 = vmatmul.bf16.gmra.mxu0 %v129
    %v178 = vpop.f32.mrf.mxu0
    %v179 = vadd.f32 %v97, %v178
    %v180 = vpop.f32.mrf.mxu0
    %v181 = vadd.f32 %v97, %v180
    %182 = vmatmul.bf16.gmra.mxu0 %v132
    %v183 = vpop.f32.mrf.mxu0
    %v184 = vadd.f32 %v97, %v183
    %v185 = vpop.f32.mrf.mxu0
    %v186 = vadd.f32 %v97, %v185
    %187 = vmatmul.bf16.gmra.mxu0 %v135
    %v188 = vpop.f32.mrf.mxu0
    %v189 = vadd.f32 %v97, %v188
    %v190 = vpop.f32.mrf.mxu0
    %v191 = vadd.f32 %v97, %v190
    %192 = vmatmul.bf16.gmra.mxu0 %v138
    %v193 = vpop.f32.mrf.mxu0
    %v194 = vadd.f32 %v97, %v193
    %v195 = vpop.f32.mrf.mxu0
    %v196 = vadd.f32 %v97, %v195
    %197 = vmatmul.bf16.gmra.mxu0 %v141
    %v198 = vpop.f32.mrf.mxu0
    %v199 = vadd.f32 %v97, %v198
    %v200 = vpop.f32.mrf.mxu0
    %v201 = vadd.f32 %v97, %v200
    %202 = vmatmul.bf16.gmra.mxu0 %v144
    %v203 = vpop.f32.mrf.mxu0
    %v204 = vadd.f32 %v97, %v203
    %v205 = vpop.f32.mrf.mxu0
    %v206 = vadd.f32 %v97, %v205
    %207 = vdwg.mxu0
    %208 = vmatpush.bf16.msra.mxu0 0
    %209 = vmatpush.bf16.msra.mxu0 0
    %210 = vmatpush.bf16.msra.mxu0 0
    %211 = vmatpush.bf16.msra.mxu0 0
    %212 = vmatpush.bf16.msra.mxu0 0
    %213 = vmatpush.bf16.msra.mxu0 0
    %214 = vmatpush.bf16.msra.mxu0 0
    %215 = vmatpush.bf16.msra.mxu0 %v151
    %216 = vmatmul.bf16.gmra.mxu0 %v123
    %v217 = vpop.f32.mrf.mxu0
    %v218 = vadd.f32 %v98, %v217
    %v219 = vpop.f32.mrf.mxu0
    %v220 = vadd.f32 %v98, %v219
    %221 = vmatmul.bf16.gmra.mxu0 %v126
    %v222 = vpop.f32.mrf.mxu0
    %v223 = vadd.f32 %v98, %v222
    %v224 = vpop.f32.mrf.mxu0
    %v225 = vadd.f32 %v98, %v224
    %226 = vmatmul.bf16.gmra.mxu0 %v129
    %v227 = vpop.f32.mrf.mxu0
    %v228 = vadd.f32 %v98, %v227
    %v229 = vpop.f32.mrf.mxu0
    %v230 = vadd.f32 %v98, %v229
    %231 = vmatmul.bf16.gmra.mxu0 %v132
    %v232 = vpop.f32.mrf.mxu0
    %v233 = vadd.f32 %v98, %v232
    %v234 = vpop.f32.mrf.mxu0
    %v235 = vadd.f32 %v98, %v234
    %236 = vmatmul.bf16.gmra.mxu0 %v135
    %v237 = vpop.f32.mrf.mxu0
    %v238 = vadd.f32 %v98, %v237
    %v239 = vpop.f32.mrf.mxu0
    %v240 = vadd.f32 %v98, %v239
    %241 = vmatmul.bf16.gmra.mxu0 %v138
    %v242 = vpop.f32.mrf.mxu0
    %v243 = vadd.f32 %v98, %v242
    %v244 = vpop.f32.mrf.mxu0
    %v245 = vadd.f32 %v98, %v244
    %246 = vmatmul.bf16.gmra.mxu0 %v141
    %v247 = vpop.f32.mrf.mxu0
    %v248 = vadd.f32 %v98, %v247
    %v249 = vpop.f32.mrf.mxu0
    %v250 = vadd.f32 %v98, %v249
    %251 = vmatmul.bf16.gmra.mxu0 %v144
    %v252 = vpop.f32.mrf.mxu0
    %v253 = vadd.f32 %v98, %v252
    %v254 = vpop.f32.mrf.mxu0
    %v255 = vadd.f32 %v98, %v254
    %256 = vdwg.mxu0
    %257 = vmatpush.bf16.msra.mxu0 0
    %258 = vmatpush.bf16.msra.mxu0 0
    %259 = vmatpush.bf16.msra.mxu0 0
    %260 = vmatpush.bf16.msra.mxu0 0
    %261 = vmatpush.bf16.msra.mxu0 0
    %262 = vmatpush.bf16.msra.mxu0 0
    %263 = vmatpush.bf16.msra.mxu0 0
    %264 = vmatpush.bf16.msra.mxu0 %v154
    %265 = vmatmul.bf16.gmra.mxu0 %v123
    %v266 = vpop.f32.mrf.mxu0
    %v267 = vadd.f32 %v99, %v266
    %v268 = vpop.f32.mrf.mxu0
    %v269 = vadd.f32 %v99, %v268
    %270 = vmatmul.bf16.gmra.mxu0 %v126
    %v271 = vpop.f32.mrf.mxu0
    %v272 = vadd.f32 %v99, %v271
    %v273 = vpop.f32.mrf.mxu0
    %v274 = vadd.f32 %v99, %v273
    %275 = vmatmul.bf16.gmra.mxu0 %v129
    %v276 = vpop.f32.mrf.mxu0
    %v277 = vadd.f32 %v99, %v276
    %v278 = vpop.f32.mrf.mxu0
    %v279 = vadd.f32 %v99, %v278
    %280 = vmatmul.bf16.gmra.mxu0 %v132
    %v281 = vpop.f32.mrf.mxu0
    %v282 = vadd.f32 %v99, %v281
    %v283 = vpop.f32.mrf.mxu0
    %v284 = vadd.f32 %v99, %v283
    %285 = vmatmul.bf16.gmra.mxu0 %v135
    %v286 = vpop.f32.mrf.mxu0
    %v287 = vadd.f32 %v99, %v286
    %v288 = vpop.f32.mrf.mxu0
    %v289 = vadd.f32 %v99, %v288
    %290 = vmatmul.bf16.gmra.mxu0 %v138
    %v291 = vpop.f32.mrf.mxu0
    %v292 = vadd.f32 %v99, %v291
    %v293 = vpop.f32.mrf.mxu0
    %v294 = vadd.f32 %v99, %v293
    %295 = vmatmul.bf16.gmra.mxu0 %v141
    %v296 = vpop.f32.mrf.mxu0
    %v297 = vadd.f32 %v99, %v296
    %v298 = vpop.f32.mrf.mxu0
    %v299 = vadd.f32 %v99, %v298
    %300 = vmatmul.bf16.gmra.mxu0 %v144
    %v301 = vpop.f32.mrf.mxu0
    %v302 = vadd.f32 %v99, %v301
    %v303 = vpop.f32.mrf.mxu0
    %v304 = vadd.f32 %v99, %v303
    %305 = vdwg.mxu0
    %306 = vmatpush.bf16.msra.mxu0 0
    %307 = vmatpush.bf16.msra.mxu0 0
    %308 = vmatpush.bf16.msra.mxu0 0
    %309 = vmatpush.bf16.msra.mxu0 0
    %310 = vmatpush.bf16.msra.mxu0 0
    %311 = vmatpush.bf16.msra.mxu0 0
    %312 = vmatpush.bf16.msra.mxu0 0
    %313 = vmatpush.bf16.msra.mxu0 %v157
    %314 = vmatmul.bf16.gmra.mxu0 %v123
    %v315 = vpop.f32.mrf.mxu0
    %v316 = vadd.f32 %v100, %v315
    %v317 = vpop.f32.mrf.mxu0
    %v318 = vadd.f32 %v100, %v317
    %319 = vmatmul.bf16.gmra.mxu0 %v126
    %v320 = vpop.f32.mrf.mxu0
    %v321 = vadd.f32 %v100, %v320
    %v322 = vpop.f32.mrf.mxu0
    %v323 = vadd.f32 %v100, %v322
    %324 = vmatmul.bf16.gmra.mxu0 %v129
    %v325 = vpop.f32.mrf.mxu0
    %v326 = vadd.f32 %v100, %v325
    %v327 = vpop.f32.mrf.mxu0
    %v328 = vadd.f32 %v100, %v327
    %329 = vmatmul.bf16.gmra.mxu0 %v132
    %v330 = vpop.f32.mrf.mxu0
    %v331 = vadd.f32 %v100, %v330
    %v332 = vpop.f32.mrf.mxu0
    %v333 = vadd.f32 %v100, %v332
    %334 = vmatmul.bf16.gmra.mxu0 %v135
    %v335 = vpop.f32.mrf.mxu0
    %v336 = vadd.f32 %v100, %v335
    %v337 = vpop.f32.mrf.mxu0
    %v338 = vadd.f32 %v100, %v337
    %339 = vmatmul.bf16.gmra.mxu0 %v138
    %v340 = vpop.f32.mrf.mxu0
    %v341 = vadd.f32 %v100, %v340
    %v342 = vpop.f32.mrf.mxu0
    %v343 = vadd.f32 %v100, %v342
    %344 = vmatmul.bf16.gmra.mxu0 %v141
    %v345 = vpop.f32.mrf.mxu0
    %v346 = vadd.f32 %v100, %v345
    %v347 = vpop.f32.mrf.mxu0
    %v348 = vadd.f32 %v100, %v347
    %349 = vmatmul.bf16.gmra.mxu0 %v144
    %v350 = vpop.f32.mrf.mxu0
    %v351 = vadd.f32 %v100, %v350
    %v352 = vpop.f32.mrf.mxu0
    %v353 = vadd.f32 %v100, %v352
    %354 = vdwg.mxu0
    %v355 = vld [vmem:[%s3] sm:$0xff]
    %v356 = vld [vmem:[%s3 + $0x8] sm:$0xff]
    %v357 = vld [vmem:[%s3 + $0x10] sm:$0xff]
    %v358 = vld [vmem:[%s3 + $0x18] sm:$0xff]
    %v359 = vld [vmem:[%s3 + $0x20] sm:$0xff]
    %v360 = vld [vmem:[%s3 + $0x28] sm:$0xff]
    %v361 = vld [vmem:[%s3 + $0x30] sm:$0xff]
    %v362 = vld [vmem:[%s3 + $0x38] sm:$0xff]
    %v363 = vld [vmem:[%s3 + $0x40] sm:$0xff]
    %v364 = vld [vmem:[%s3 + $0x48] sm:$0xff]
    %v365 = vld [vmem:[%s3 + $0x50] sm:$0xff]
    %v366 = vld [vmem:[%s3 + $0x58] sm:$0xff]
    %v367 = vld [vmem:[%s3 + $0x60] sm:$0xff]
    %v368 = vld [vmem:[%s3 + $0x68] sm:$0xff]
    %v369 = vld [vmem:[%s3 + $0x70] sm:$0xff]
    %v370 = vld [vmem:[%s3 + $0x78] sm:$0xff]
    %v371 = vld [vmem:[%s3 + $0x80] sm:$0xff]
    %v372 = vld [vmem:[%s3 + $0x88] sm:$0xff]
    %v373 = vld [vmem:[%s3 + $0x90] sm:$0xff]
    %v374 = vld [vmem:[%s3 + $0x98] sm:$0xff]
    %v375 = vld [vmem:[%s3 + $0xa0] sm:$0xff]
    %v376 = vld [vmem:[%s3 + $0xa8] sm:$0xff]
    %v377 = vld [vmem:[%s3 + $0xb0] sm:$0xff]
    %v378 = vld [vmem:[%s3 + $0xb8] sm:$0xff]
    %v379 = vld [vmem:[%s3 + $0xc0] sm:$0xff]
    %v380 = vld [vmem:[%s3 + $0xc8] sm:$0xff]
    %v381 = vld [vmem:[%s3 + $0xd0] sm:$0xff]
    %v382 = vld [vmem:[%s3 + $0xd8] sm:$0xff]
    %v383 = vld [vmem:[%s3 + $0xe0] sm:$0xff]
    %v384 = vld [vmem:[%s3 + $0xe8] sm:$0xff]
    %v385 = vld [vmem:[%s3 + $0xf0] sm:$0xff]
    %v386 = vld [vmem:[%s3 + $0xf8] sm:$0xff]
    %v419 = vunpack.c.l.b16 %v355
    %v420 = vunpack.c.h.b16 %v355
    %v421 = vunpack.c.l.b16 %v356
    %v422 = vunpack.c.h.b16 %v356
    %v423 = vunpack.c.l.b16 %v357
    %v424 = vunpack.c.h.b16 %v357
    %v425 = vunpack.c.l.b16 %v358
    %v426 = vunpack.c.h.b16 %v358
    %v427 = vunpack.c.l.b16 %v359
    %v428 = vunpack.c.h.b16 %v359
    %v429 = vunpack.c.l.b16 %v360
    %v430 = vunpack.c.h.b16 %v360
    %v431 = vunpack.c.l.b16 %v361
    %v432 = vunpack.c.h.b16 %v361
    %v433 = vunpack.c.l.b16 %v362
    %v434 = vunpack.c.h.b16 %v362
    %v435 = vunpack.c.l.b16 %v363
    %v436 = vunpack.c.h.b16 %v363
    %v437 = vunpack.c.l.b16 %v364
    %v438 = vunpack.c.h.b16 %v364
    %v439 = vunpack.c.l.b16 %v365
    %v440 = vunpack.c.h.b16 %v365
    %v441 = vunpack.c.l.b16 %v366
    %v442 = vunpack.c.h.b16 %v366
    %v443 = vunpack.c.l.b16 %v367
    %v444 = vunpack.c.h.b16 %v367
    %v445 = vunpack.c.l.b16 %v368
    %v446 = vunpack.c.h.b16 %v368
    %v447 = vunpack.c.l.b16 %v369
    %v448 = vunpack.c.h.b16 %v369
    %v449 = vunpack.c.l.b16 %v370
    %v450 = vunpack.c.h.b16 %v370
    %v451 = vunpack.c.l.b16 %v371
    %v452 = vunpack.c.h.b16 %v371
    %v453 = vunpack.c.l.b16 %v372
    %v454 = vunpack.c.h.b16 %v372
    %v455 = vunpack.c.l.b16 %v373
    %v456 = vunpack.c.h.b16 %v373
    %v457 = vunpack.c.l.b16 %v374
    %v458 = vunpack.c.h.b16 %v374
    %v459 = vunpack.c.l.b16 %v375
    %v460 = vunpack.c.h.b16 %v375
    %v461 = vunpack.c.l.b16 %v376
    %v462 = vunpack.c.h.b16 %v376
    %v463 = vunpack.c.l.b16 %v377
    %v464 = vunpack.c.h.b16 %v377
    %v465 = vunpack.c.l.b16 %v378
    %v466 = vunpack.c.h.b16 %v378
    %v467 = vunpack.c.l.b16 %v379
    %v468 = vunpack.c.h.b16 %v379
    %v469 = vunpack.c.l.b16 %v380
    %v470 = vunpack.c.h.b16 %v380
    %v471 = vunpack.c.l.b16 %v381
    %v472 = vunpack.c.h.b16 %v381
    %v473 = vunpack.c.l.b16 %v382
    %v474 = vunpack.c.h.b16 %v382
    %v475 = vunpack.c.l.b16 %v383
    %v476 = vunpack.c.h.b16 %v383
    %v477 = vunpack.c.l.b16 %v384
    %v478 = vunpack.c.h.b16 %v384
    %v479 = vunpack.c.l.b16 %v385
    %v480 = vunpack.c.h.b16 %v385
    %v481 = vunpack.c.l.b16 %v386
    %v482 = vunpack.c.h.b16 %v386
    %v483 = vpack.c.b16 %v423, %v419
    %v484 = vpack.c.b16 %v424, %v420
    %v485 = vpack.c.b16 %v425, %v421
    %v486 = vpack.c.b16 %v426, %v422
    %v487 = vpack.c.b16 %v431, %v427
    %v488 = vpack.c.b16 %v432, %v428
    %v489 = vpack.c.b16 %v433, %v429
    %v490 = vpack.c.b16 %v434, %v430
    %v491 = vpack.c.b16 %v439, %v435
    %v492 = vpack.c.b16 %v440, %v436
    %v493 = vpack.c.b16 %v441, %v437
    %v494 = vpack.c.b16 %v442, %v438
    %v495 = vpack.c.b16 %v447, %v443
    %v496 = vpack.c.b16 %v448, %v444
    %v497 = vpack.c.b16 %v449, %v445
    %v498 = vpack.c.b16 %v450, %v446
    %v499 = vpack.c.b16 %v455, %v451
    %v500 = vpack.c.b16 %v456, %v452
    %v501 = vpack.c.b16 %v457, %v453
    %v502 = vpack.c.b16 %v458, %v454
    %v503 = vpack.c.b16 %v463, %v459
    %v504 = vpack.c.b16 %v464, %v460
    %v505 = vpack.c.b16 %v465, %v461
    %v506 = vpack.c.b16 %v466, %v462
    %v507 = vpack.c.b16 %v471, %v467
    %v508 = vpack.c.b16 %v472, %v468
    %v509 = vpack.c.b16 %v473, %v469
    %v510 = vpack.c.b16 %v474, %v470
    %v511 = vpack.c.b16 %v479, %v475
    %v512 = vpack.c.b16 %v480, %v476
    %v513 = vpack.c.b16 %v481, %v477
    %v514 = vpack.c.b16 %v482, %v478
    %547 = vmatpush.bf16.msra.mxu0 %v511
    %548 = vmatpush.bf16.msra.mxu0 %v507
    %549 = vmatpush.bf16.msra.mxu0 %v503
    %550 = vmatpush.bf16.msra.mxu0 %v499
    %551 = vmatpush.bf16.msra.mxu0 %v495
    %552 = vmatpush.bf16.msra.mxu0 %v491
    %553 = vmatpush.bf16.msra.mxu0 %v487
    %554 = vmatpush.bf16.msra.mxu0 %v483
    %555 = vmatmul.bf16.gmra.mxu0 0
    %v556 = vpop.f32.mrf.mxu0
    %v557 = vadd.f32 0.0, %v556
    %v558 = vpop.f32.mrf.mxu0
    %v559 = vadd.f32 0.0, %v558
    %560 = vdwg.mxu0
    %561 = vmatpush.bf16.msra.mxu0 %v512
    %562 = vmatpush.bf16.msra.mxu0 %v508
    %563 = vmatpush.bf16.msra.mxu0 %v504
    %564 = vmatpush.bf16.msra.mxu0 %v500
    %565 = vmatpush.bf16.msra.mxu0 %v496
    %566 = vmatpush.bf16.msra.mxu0 %v492
    %567 = vmatpush.bf16.msra.mxu0 %v488
    %568 = vmatpush.bf16.msra.mxu0 %v484
    %569 = vmatmul.bf16.gmra.mxu0 0
    %v570 = vpop.f32.mrf.mxu0
    %v571 = vadd.f32 0.0, %v570
    %v572 = vpop.f32.mrf.mxu0
    %v573 = vadd.f32 0.0, %v572
    %574 = vdwg.mxu0
    %575 = vmatpush.bf16.msra.mxu0 %v513
    %576 = vmatpush.bf16.msra.mxu0 %v509
    %577 = vmatpush.bf16.msra.mxu0 %v505
    %578 = vmatpush.bf16.msra.mxu0 %v501
    %579 = vmatpush.bf16.msra.mxu0 %v497
    %580 = vmatpush.bf16.msra.mxu0 %v493
    %581 = vmatpush.bf16.msra.mxu0 %v489
    %582 = vmatpush.bf16.msra.mxu0 %v485
    %583 = vmatmul.bf16.gmra.mxu0 0
    %v584 = vpop.f32.mrf.mxu0
    %v585 = vadd.f32 0.0, %v584
    %v586 = vpop.f32.mrf.mxu0
    %v587 = vadd.f32 0.0, %v586
    %588 = vdwg.mxu0
    %589 = vmatpush.bf16.msra.mxu0 %v514
    %590 = vmatpush.bf16.msra.mxu0 %v510
    %591 = vmatpush.bf16.msra.mxu0 %v506
    %592 = vmatpush.bf16.msra.mxu0 %v502
    %593 = vmatpush.bf16.msra.mxu0 %v498
    %594 = vmatpush.bf16.msra.mxu0 %v494
    %595 = vmatpush.bf16.msra.mxu0 %v490
    %596 = vmatpush.bf16.msra.mxu0 %v486
    %597 = vmatmul.bf16.gmra.mxu0 0
    %v598 = vpop.f32.mrf.mxu0
    %v599 = vadd.f32 0.0, %v598
    %v600 = vpop.f32.mrf.mxu0
    %v601 = vadd.f32 0.0, %v600
    %602 = vdwg.mxu0
    %v603 = vadd.f32 %v169, %v557
    %v604 = vadd.f32 %v218, %v571
    %v605 = vadd.f32 %v267, %v585
    %v606 = vadd.f32 %v316, %v599
    %v607 = vadd.f32 %v171, %v559
    %v608 = vadd.f32 %v220, %v573
    %v609 = vadd.f32 %v269, %v587
    %v610 = vadd.f32 %v318, %v601
    %v611 = vxor.u32 %v603, 2147483648
    %v612 = vxor.u32 %v604, 2147483648
    %v613 = vxor.u32 %v605, 2147483648
    %v614 = vxor.u32 %v607, 2147483648
    %v615 = vxor.u32 %v608, 2147483648
    %v616 = vxor.u32 %v609, 2147483648
    %v617 = vmul.f32 %v611, 1.442695
    %v618 = vpow.pop %v617
    %v619 = vmul.f32 %v612, 1.442695
    %v620 = vpow.pop %v619
    %v621 = vmul.f32 %v613, 1.442695
    %v622 = vpow.pop %v621
    %v623 = vmul.f32 %v614, 1.442695
    %v624 = vpow.pop %v623
    %v625 = vmul.f32 %v615, 1.442695
    %v626 = vpow.pop %v625
    %v627 = vmul.f32 %v616, 1.442695
    %v628 = vpow.pop %v627
    %v629 = vadd.f32 %v618, 1.0
    %v630 = vadd.f32 %v620, 1.0
    %v631 = vadd.f32 %v622, 1.0
    %v632 = vadd.f32 %v624, 1.0
    %v633 = vadd.f32 %v626, 1.0
    %v634 = vadd.f32 %v628, 1.0
    %v635 = vrcp.pop %v629
    %v636 = vmul.f32 %v629, %v635
    %v637 = vsub.f32 1.0, %v636
    %v638 = vmul.f32 %v635, %v637
    %v639 = vadd.f32 %v635, %v638
    %vm640 = vweird.f32 %v629
    %vm641 = vweird.f32 %v635
    %vm642 = vmor %vm640, %vm641
    %v643 = vsel %vm642, %v635, %v639
    %v644 = vand.u32 2147483647, %v629
    %vm645 = vcmp.eq.f32.partialorder %v644, 8.507059e+37
    %v646 = vand.u32 %v629, 2147483648
    %v647 = vor.u32 1.1754944e-38, %v646
    %v648 = vsel %vm645, %v647, %v643
    %v649 = vmul.f32 1.0, %v648
    %v650 = vrcp.pop %v630
    %v651 = vmul.f32 %v630, %v650
    %v652 = vsub.f32 1.0, %v651
    %v653 = vmul.f32 %v650, %v652
    %v654 = vadd.f32 %v650, %v653
    %vm655 = vweird.f32 %v630
    %vm656 = vweird.f32 %v650
    %vm657 = vmor %vm655, %vm656
    %v658 = vsel %vm657, %v650, %v654
    %v659 = vand.u32 2147483647, %v630
    %vm660 = vcmp.eq.f32.partialorder %v659, 8.507059e+37
    %v661 = vand.u32 %v630, 2147483648
    %v662 = vor.u32 1.1754944e-38, %v661
    %v663 = vsel %vm660, %v662, %v658
    %v664 = vmul.f32 1.0, %v663
    %v665 = vrcp.pop %v631
    %v666 = vmul.f32 %v631, %v665
    %v667 = vsub.f32 1.0, %v666
    %v668 = vmul.f32 %v665, %v667
    %v669 = vadd.f32 %v665, %v668
    %vm670 = vweird.f32 %v631
    %vm671 = vweird.f32 %v665
    %vm672 = vmor %vm670, %vm671
    %v673 = vsel %vm672, %v665, %v669
    %v674 = vand.u32 2147483647, %v631
    %vm675 = vcmp.eq.f32.partialorder %v674, 8.507059e+37
    %v676 = vand.u32 %v631, 2147483648
    %v677 = vor.u32 1.1754944e-38, %v676
    %v678 = vsel %vm675, %v677, %v673
    %v679 = vmul.f32 1.0, %v678
    %v680 = vrcp.pop %v632
    %v681 = vmul.f32 %v632, %v680
    %v682 = vsub.f32 1.0, %v681
    %v683 = vmul.f32 %v680, %v682
    %v684 = vadd.f32 %v680, %v683
    %vm685 = vweird.f32 %v632
    %vm686 = vweird.f32 %v680
    %vm687 = vmor %vm685, %vm686
    %v688 = vsel %vm687, %v680, %v684
    %v689 = vand.u32 2147483647, %v632
    %vm690 = vcmp.eq.f32.partialorder %v689, 8.507059e+37
    %v691 = vand.u32 %v632, 2147483648
    %v692 = vor.u32 1.1754944e-38, %v691
    %v693 = vsel %vm690, %v692, %v688
    %v694 = vmul.f32 1.0, %v693
    %v695 = vrcp.pop %v633
    %v696 = vmul.f32 %v633, %v695
    %v697 = vsub.f32 1.0, %v696
    %v698 = vmul.f32 %v695, %v697
    %v699 = vadd.f32 %v695, %v698
    %vm700 = vweird.f32 %v633
    %vm701 = vweird.f32 %v695
    %vm702 = vmor %vm700, %vm701
    %v703 = vsel %vm702, %v695, %v699
    %v704 = vand.u32 2147483647, %v633
    %vm705 = vcmp.eq.f32.partialorder %v704, 8.507059e+37
    %v706 = vand.u32 %v633, 2147483648
    %v707 = vor.u32 1.1754944e-38, %v706
    %v708 = vsel %vm705, %v707, %v703
    %v709 = vmul.f32 1.0, %v708
    %v710 = vrcp.pop %v634
    %v711 = vmul.f32 %v634, %v710
    %v712 = vsub.f32 1.0, %v711
    %v713 = vmul.f32 %v710, %v712
    %v714 = vadd.f32 %v710, %v713
    %vm715 = vweird.f32 %v634
    %vm716 = vweird.f32 %v710
    %vm717 = vmor %vm715, %vm716
    %v718 = vsel %vm717, %v710, %v714
    %v719 = vand.u32 2147483647, %v634
    %vm720 = vcmp.eq.f32.partialorder %v719, 8.507059e+37
    %v721 = vand.u32 %v634, 2147483648
    %v722 = vor.u32 1.1754944e-38, %v721
    %v723 = vsel %vm720, %v722, %v718
    %v724 = vmul.f32 1.0, %v723
    %v725 = vtanh.pop %v606
    %v726 = vtanh.pop %v610
    %v727 = vmul.f32 %v664, 0.0
    %v728 = vmul.f32 %v709, 0.0
    %v729 = vmul.f32 %v649, %v725
    %v730 = vmul.f32 %v694, %v726
    %v731 = vadd.f32 %v727, %v729
    %v732 = vadd.f32 %v728, %v730
    %v733 = vtanh.pop %v731
    %v734 = vtanh.pop %v732
    %v735 = vmul.f32 %v679, %v733
    %v736 = vmul.f32 %v724, %v734
    %v737 = vpack.c.bf16 %v736, %v735
    %v738 = vld [vmem:[#allocation3] sm:$0xff]
    %v739 = vld [vmem:[#allocation3 + $0x8] sm:$0xff]
    %v740 = vld [vmem:[#allocation3 + $0x10] sm:$0xff]
    %v741 = vld [vmem:[#allocation3 + $0x18] sm:$0xff]
    %v742 = vld [vmem:[#allocation3 + $0x20] sm:$0xff]
    %v743 = vld [vmem:[#allocation3 + $0x28] sm:$0xff]
    %v744 = vld [vmem:[#allocation3 + $0x30] sm:$0xff]
    %v745 = vld [vmem:[#allocation3 + $0x38] sm:$0xff]
    %v746 = vld [vmem:[#allocation3 + $0x40] sm:$0xff]
    %v747 = vld [vmem:[#allocation3 + $0x48] sm:$0xff]
    %v748 = vld [vmem:[#allocation3 + $0x50] sm:$0xff]
    %v749 = vld [vmem:[#allocation3 + $0x58] sm:$0xff]
    %v750 = vld [vmem:[#allocation3 + $0x60] sm:$0xff]
    %v751 = vld [vmem:[#allocation3 + $0x68] sm:$0xff]
    %v752 = vld [vmem:[#allocation3 + $0x70] sm:$0xff]
    %v753 = vld [vmem:[#allocation3 + $0x78] sm:$0xff]
    %v754 = vld [vmem:[#allocation3 + $0x80] sm:$0xff]
    %v755 = vld [vmem:[#allocation3 + $0x88] sm:$0xff]
    %v756 = vld [vmem:[#allocation3 + $0x90] sm:$0xff]
    %v757 = vld [vmem:[#allocation3 + $0x98] sm:$0xff]
    %v758 = vld [vmem:[#allocation3 + $0xa0] sm:$0xff]
    %v759 = vld [vmem:[#allocation3 + $0xa8] sm:$0xff]
    %v760 = vld [vmem:[#allocation3 + $0xb0] sm:$0xff]
    %v761 = vld [vmem:[#allocation3 + $0xb8] sm:$0xff]
    %v762 = vld [vmem:[#allocation3 + $0xc0] sm:$0xff]
    %v763 = vld [vmem:[#allocation3 + $0xc8] sm:$0xff]
    %v764 = vld [vmem:[#allocation3 + $0xd0] sm:$0xff]
    %v765 = vld [vmem:[#allocation3 + $0xd8] sm:$0xff]
    %v766 = vld [vmem:[#allocation3 + $0xe0] sm:$0xff]
    %v767 = vld [vmem:[#allocation3 + $0xe8] sm:$0xff]
    %v768 = vld [vmem:[#allocation3 + $0xf0] sm:$0xff]
    %v769 = vld [vmem:[#allocation3 + $0xf8] sm:$0xff]
    %v770 = vld [vmem:[#allocation5] sm:$0xff]
    %v771 = vld [vmem:[#allocation5 + $0x8] sm:$0xff]
    %v772 = vld [vmem:[#allocation5 + $0x10] sm:$0xff]
    %v773 = vld [vmem:[#allocation5 + $0x18] sm:$0xff]
    %v774 = vld [vmem:[#allocation5 + $0x20] sm:$0xff]
    %v775 = vld [vmem:[#allocation5 + $0x28] sm:$0xff]
    %v776 = vld [vmem:[#allocation5 + $0x30] sm:$0xff]
    %v777 = vld [vmem:[#allocation5 + $0x38] sm:$0xff]
    %v778 = vld [vmem:[#allocation5 + $0x40] sm:$0xff]
    %v779 = vld [vmem:[#allocation5 + $0x48] sm:$0xff]
    %v780 = vld [vmem:[#allocation5 + $0x50] sm:$0xff]
    %v781 = vld [vmem:[#allocation5 + $0x58] sm:$0xff]
    %v782 = vld [vmem:[#allocation5 + $0x60] sm:$0xff]
    %v783 = vld [vmem:[#allocation5 + $0x68] sm:$0xff]
    %v784 = vld [vmem:[#allocation5 + $0x70] sm:$0xff]
    %v785 = vld [vmem:[#allocation5 + $0x78] sm:$0xff]
    %v786 = vld [vmem:[#allocation5 + $0x80] sm:$0xff]
    %v787 = vld [vmem:[#allocation5 + $0x88] sm:$0xff]
    %v788 = vld [vmem:[#allocation5 + $0x90] sm:$0xff]
    %v789 = vld [vmem:[#allocation5 + $0x98] sm:$0xff]
    %v790 = vld [vmem:[#allocation5 + $0xa0] sm:$0xff]
    %v791 = vld [vmem:[#allocation5 + $0xa8] sm:$0xff]
    %v792 = vld [vmem:[#allocation5 + $0xb0] sm:$0xff]
    %v793 = vld [vmem:[#allocation5 + $0xb8] sm:$0xff]
    %v794 = vld [vmem:[#allocation5 + $0xc0] sm:$0xff]
    %v795 = vld [vmem:[#allocation5 + $0xc8] sm:$0xff]
    %v796 = vld [vmem:[#allocation5 + $0xd0] sm:$0xff]
    %v797 = vld [vmem:[#allocation5 + $0xd8] sm:$0xff]
    %v798 = vld [vmem:[#allocation5 + $0xe0] sm:$0xff]
    %v799 = vld [vmem:[#allocation5 + $0xe8] sm:$0xff]
    %v800 = vld [vmem:[#allocation5 + $0xf0] sm:$0xff]
    %v801 = vld [vmem:[#allocation5 + $0xf8] sm:$0xff]
    %v834 = vunpack.c.l.b16 %v770
    %v835 = vunpack.c.h.b16 %v770
    %v836 = vunpack.c.l.b16 %v771
    %v837 = vunpack.c.h.b16 %v771
    %v838 = vunpack.c.l.b16 %v772
    %v839 = vunpack.c.h.b16 %v772
    %v840 = vunpack.c.l.b16 %v773
    %v841 = vunpack.c.h.b16 %v773
    %v842 = vunpack.c.l.b16 %v774
    %v843 = vunpack.c.h.b16 %v774
    %v844 = vunpack.c.l.b16 %v775
    %v845 = vunpack.c.h.b16 %v775
    %v846 = vunpack.c.l.b16 %v776
    %v847 = vunpack.c.h.b16 %v776
    %v848 = vunpack.c.l.b16 %v777
    %v849 = vunpack.c.h.b16 %v777
    %v850 = vunpack.c.l.b16 %v778
    %v851 = vunpack.c.h.b16 %v778
    %v852 = vunpack.c.l.b16 %v779
    %v853 = vunpack.c.h.b16 %v779
    %v854 = vunpack.c.l.b16 %v780
    %v855 = vunpack.c.h.b16 %v780
    %v856 = vunpack.c.l.b16 %v781
    %v857 = vunpack.c.h.b16 %v781
    %v858 = vunpack.c.l.b16 %v782
    %v859 = vunpack.c.h.b16 %v782
    %v860 = vunpack.c.l.b16 %v783
    %v861 = vunpack.c.h.b16 %v783
    %v862 = vunpack.c.l.b16 %v784
    %v863 = vunpack.c.h.b16 %v784
    %v864 = vunpack.c.l.b16 %v785
    %v865 = vunpack.c.h.b16 %v785
    %v866 = vunpack.c.l.b16 %v786
    %v867 = vunpack.c.h.b16 %v786
    %v868 = vunpack.c.l.b16 %v787
    %v869 = vunpack.c.h.b16 %v787
    %v870 = vunpack.c.l.b16 %v788
    %v871 = vunpack.c.h.b16 %v788
    %v872 = vunpack.c.l.b16 %v789
    %v873 = vunpack.c.h.b16 %v789
    %v874 = vunpack.c.l.b16 %v790
    %v875 = vunpack.c.h.b16 %v790
    %v876 = vunpack.c.l.b16 %v791
    %v877 = vunpack.c.h.b16 %v791
    %v878 = vunpack.c.l.b16 %v792
    %v879 = vunpack.c.h.b16 %v792
    %v880 = vunpack.c.l.b16 %v793
    %v881 = vunpack.c.h.b16 %v793
    %v882 = vunpack.c.l.b16 %v794
    %v883 = vunpack.c.h.b16 %v794
    %v884 = vunpack.c.l.b16 %v795
    %v885 = vunpack.c.h.b16 %v795
    %v886 = vunpack.c.l.b16 %v796
    %v887 = vunpack.c.h.b16 %v796
    %v888 = vunpack.c.l.b16 %v797
    %v889 = vunpack.c.h.b16 %v797
    %v890 = vunpack.c.l.b16 %v798
    %v891 = vunpack.c.h.b16 %v798
    %v892 = vunpack.c.l.b16 %v799
    %v893 = vunpack.c.h.b16 %v799
    %v894 = vunpack.c.l.b16 %v800
    %v895 = vunpack.c.h.b16 %v800
    %v896 = vunpack.c.l.b16 %v801
    %v897 = vunpack.c.h.b16 %v801
    %v898 = vpack.c.b16 %v838, %v834
    %v899 = vpack.c.b16 %v839, %v835
    %v900 = vpack.c.b16 %v840, %v836
    %v901 = vpack.c.b16 %v841, %v837
    %v902 = vpack.c.b16 %v846, %v842
    %v903 = vpack.c.b16 %v847, %v843
    %v904 = vpack.c.b16 %v848, %v844
    %v905 = vpack.c.b16 %v849, %v845
    %v906 = vpack.c.b16 %v854, %v850
    %v907 = vpack.c.b16 %v855, %v851
    %v908 = vpack.c.b16 %v856, %v852
    %v909 = vpack.c.b16 %v857, %v853
    %v910 = vpack.c.b16 %v862, %v858
    %v911 = vpack.c.b16 %v863, %v859
    %v912 = vpack.c.b16 %v864, %v860
    %v913 = vpack.c.b16 %v865, %v861
    %v914 = vpack.c.b16 %v870, %v866
    %v915 = vpack.c.b16 %v871, %v867
    %v916 = vpack.c.b16 %v872, %v868
    %v917 = vpack.c.b16 %v873, %v869
    %v918 = vpack.c.b16 %v878, %v874
    %v919 = vpack.c.b16 %v879, %v875
    %v920 = vpack.c.b16 %v880, %v876
    %v921 = vpack.c.b16 %v881, %v877
    %v922 = vpack.c.b16 %v886, %v882
    %v923 = vpack.c.b16 %v887, %v883
    %v924 = vpack.c.b16 %v888, %v884
    %v925 = vpack.c.b16 %v889, %v885
    %v926 = vpack.c.b16 %v894, %v890
    %v927 = vpack.c.b16 %v895, %v891
    %v928 = vpack.c.b16 %v896, %v892
    %v929 = vpack.c.b16 %v897, %v893
    %962 = vmatpush.bf16.msra.mxu0 %v926
    %963 = vmatpush.bf16.msra.mxu0 %v922
    %964 = vmatpush.bf16.msra.mxu0 %v918
    %965 = vmatpush.bf16.msra.mxu0 %v914
    %966 = vmatpush.bf16.msra.mxu0 %v910
    %967 = vmatpush.bf16.msra.mxu0 %v906
    %968 = vmatpush.bf16.msra.mxu0 %v902
    %969 = vmatpush.bf16.msra.mxu0 %v898
    %970 = vmatmul.bf16.gmra.mxu0 0
    %v971 = vpop.f32.mrf.mxu0
    %v972 = vadd.f32 0.0, %v971
    %v973 = vpop.f32.mrf.mxu0
    %v974 = vadd.f32 0.0, %v973
    %975 = vdwg.mxu0
    %976 = vmatpush.bf16.msra.mxu0 %v927
    %977 = vmatpush.bf16.msra.mxu0 %v923
    %978 = vmatpush.bf16.msra.mxu0 %v919
    %979 = vmatpush.bf16.msra.mxu0 %v915
    %980 = vmatpush.bf16.msra.mxu0 %v911
    %981 = vmatpush.bf16.msra.mxu0 %v907
    %982 = vmatpush.bf16.msra.mxu0 %v903
    %983 = vmatpush.bf16.msra.mxu0 %v899
    %984 = vmatmul.bf16.gmra.mxu0 0
    %v985 = vpop.f32.mrf.mxu0
    %v986 = vadd.f32 0.0, %v985
    %v987 = vpop.f32.mrf.mxu0
    %v988 = vadd.f32 0.0, %v987
    %989 = vdwg.mxu0
    %990 = vmatpush.bf16.msra.mxu0 %v928
    %991 = vmatpush.bf16.msra.mxu0 %v924
    %992 = vmatpush.bf16.msra.mxu0 %v920
    %993 = vmatpush.bf16.msra.mxu0 %v916
    %994 = vmatpush.bf16.msra.mxu0 %v912
    %995 = vmatpush.bf16.msra.mxu0 %v908
    %996 = vmatpush.bf16.msra.mxu0 %v904
    %997 = vmatpush.bf16.msra.mxu0 %v900
    %998 = vmatmul.bf16.gmra.mxu0 0
    %v999 = vpop.f32.mrf.mxu0
    %v1000 = vadd.f32 0.0, %v999
    %v1001 = vpop.f32.mrf.mxu0
    %v1002 = vadd.f32 0.0, %v1001
    %1003 = vdwg.mxu0
    %1004 = vmatpush.bf16.msra.mxu0 %v929
    %1005 = vmatpush.bf16.msra.mxu0 %v925
    %1006 = vmatpush.bf16.msra.mxu0 %v921
    %1007 = vmatpush.bf16.msra.mxu0 %v917
    %1008 = vmatpush.bf16.msra.mxu0 %v913
    %1009 = vmatpush.bf16.msra.mxu0 %v909
    %1010 = vmatpush.bf16.msra.mxu0 %v905
    %1011 = vmatpush.bf16.msra.mxu0 %v901
    %1012 = vmatmul.bf16.gmra.mxu0 0
    %v1013 = vpop.f32.mrf.mxu0
    %v1014 = vadd.f32 0.0, %v1013
    %v1015 = vpop.f32.mrf.mxu0
    %v1016 = vadd.f32 0.0, %v1015
    %1017 = vdwg.mxu0
    %v1050 = vunpack.c.l.b16 %v738
    %v1051 = vunpack.c.h.b16 %v738
    %v1052 = vunpack.c.l.b16 %v739
    %v1053 = vunpack.c.h.b16 %v739
    %v1054 = vunpack.c.l.b16 %v740
    %v1055 = vunpack.c.h.b16 %v740
    %v1056 = vunpack.c.l.b16 %v741
    %v1057 = vunpack.c.h.b16 %v741
    %v1058 = vunpack.c.l.b16 %v742
    %v1059 = vunpack.c.h.b16 %v742
    %v1060 = vunpack.c.l.b16 %v743
    %v1061 = vunpack.c.h.b16 %v743
    %v1062 = vunpack.c.l.b16 %v744
    %v1063 = vunpack.c.h.b16 %v744
    %v1064 = vunpack.c.l.b16 %v745
    %v1065 = vunpack.c.h.b16 %v745
    %v1066 = vunpack.c.l.b16 %v746
    %v1067 = vunpack.c.h.b16 %v746
    %v1068 = vunpack.c.l.b16 %v747
    %v1069 = vunpack.c.h.b16 %v747
    %v1070 = vunpack.c.l.b16 %v748
    %v1071 = vunpack.c.h.b16 %v748
    %v1072 = vunpack.c.l.b16 %v749
    %v1073 = vunpack.c.h.b16 %v749
    %v1074 = vunpack.c.l.b16 %v750
    %v1075 = vunpack.c.h.b16 %v750
    %v1076 = vunpack.c.l.b16 %v751
    %v1077 = vunpack.c.h.b16 %v751
    %v1078 = vunpack.c.l.b16 %v752
    %v1079 = vunpack.c.h.b16 %v752
    %v1080 = vunpack.c.l.b16 %v753
    %v1081 = vunpack.c.h.b16 %v753
    %v1082 = vunpack.c.l.b16 %v754
    %v1083 = vunpack.c.h.b16 %v754
    %v1084 = vunpack.c.l.b16 %v755
    %v1085 = vunpack.c.h.b16 %v755
    %v1086 = vunpack.c.l.b16 %v756
    %v1087 = vunpack.c.h.b16 %v756
    %v1088 = vunpack.c.l.b16 %v757
    %v1089 = vunpack.c.h.b16 %v757
    %v1090 = vunpack.c.l.b16 %v758
    %v1091 = vunpack.c.h.b16 %v758
    %v1092 = vunpack.c.l.b16 %v759
    %v1093 = vunpack.c.h.b16 %v759
    %v1094 = vunpack.c.l.b16 %v760
    %v1095 = vunpack.c.h.b16 %v760
    %v1096 = vunpack.c.l.b16 %v761
    %v1097 = vunpack.c.h.b16 %v761
    %v1098 = vunpack.c.l.b16 %v762
    %v1099 = vunpack.c.h.b16 %v762
    %v1100 = vunpack.c.l.b16 %v763
    %v1101 = vunpack.c.h.b16 %v763
    %v1102 = vunpack.c.l.b16 %v764
    %v1103 = vunpack.c.h.b16 %v764
    %v1104 = vunpack.c.l.b16 %v765
    %v1105 = vunpack.c.h.b16 %v765
    %v1106 = vunpack.c.l.b16 %v766
    %v1107 = vunpack.c.h.b16 %v766
    %v1108 = vunpack.c.l.b16 %v767
    %v1109 = vunpack.c.h.b16 %v767
    %v1110 = vunpack.c.l.b16 %v768
    %v1111 = vunpack.c.h.b16 %v768
    %v1112 = vunpack.c.l.b16 %v769
    %v1113 = vunpack.c.h.b16 %v769
    %v1114 = vpack.c.b16 %v1054, %v1050
    %v1115 = vpack.c.b16 %v1055, %v1051
    %v1116 = vpack.c.b16 %v1056, %v1052
    %v1117 = vpack.c.b16 %v1057, %v1053
    %v1118 = vpack.c.b16 %v1062, %v1058
    %v1119 = vpack.c.b16 %v1063, %v1059
    %v1120 = vpack.c.b16 %v1064, %v1060
    %v1121 = vpack.c.b16 %v1065, %v1061
    %v1122 = vpack.c.b16 %v1070, %v1066
    %v1123 = vpack.c.b16 %v1071, %v1067
    %v1124 = vpack.c.b16 %v1072, %v1068
    %v1125 = vpack.c.b16 %v1073, %v1069
    %v1126 = vpack.c.b16 %v1078, %v1074
    %v1127 = vpack.c.b16 %v1079, %v1075
    %v1128 = vpack.c.b16 %v1080, %v1076
    %v1129 = vpack.c.b16 %v1081, %v1077
    %v1130 = vpack.c.b16 %v1086, %v1082
    %v1131 = vpack.c.b16 %v1087, %v1083
    %v1132 = vpack.c.b16 %v1088, %v1084
    %v1133 = vpack.c.b16 %v1089, %v1085
    %v1134 = vpack.c.b16 %v1094, %v1090
    %v1135 = vpack.c.b16 %v1095, %v1091
    %v1136 = vpack.c.b16 %v1096, %v1092
    %v1137 = vpack.c.b16 %v1097, %v1093
    %v1138 = vpack.c.b16 %v1102, %v1098
    %v1139 = vpack.c.b16 %v1103, %v1099
    %v1140 = vpack.c.b16 %v1104, %v1100
    %v1141 = vpack.c.b16 %v1105, %v1101
    %v1142 = vpack.c.b16 %v1110, %v1106
    %v1143 = vpack.c.b16 %v1111, %v1107
    %v1144 = vpack.c.b16 %v1112, %v1108
    %v1145 = vpack.c.b16 %v1113, %v1109
    %1178 = vmatpush.bf16.msra.mxu0 %v1142
    %1179 = vmatpush.bf16.msra.mxu0 %v1138
    %1180 = vmatpush.bf16.msra.mxu0 %v1134
    %1181 = vmatpush.bf16.msra.mxu0 %v1130
    %1182 = vmatpush.bf16.msra.mxu0 %v1126
    %1183 = vmatpush.bf16.msra.mxu0 %v1122
    %1184 = vmatpush.bf16.msra.mxu0 %v1118
    %1185 = vmatpush.bf16.msra.mxu0 %v1114
    %1186 = vmatmul.bf16.gmra.mxu0 %v737
    %v1187 = vpop.f32.mrf.mxu0
    %v1188 = vadd.f32 %v972, %v1187
    %v1189 = vpop.f32.mrf.mxu0
    %v1190 = vadd.f32 %v974, %v1189
    %1191 = vdwg.mxu0
    %1192 = vmatpush.bf16.msra.mxu0 %v1143
    %1193 = vmatpush.bf16.msra.mxu0 %v1139
    %1194 = vmatpush.bf16.msra.mxu0 %v1135
    %1195 = vmatpush.bf16.msra.mxu0 %v1131
    %1196 = vmatpush.bf16.msra.mxu0 %v1127
    %1197 = vmatpush.bf16.msra.mxu0 %v1123
    %1198 = vmatpush.bf16.msra.mxu0 %v1119
    %1199 = vmatpush.bf16.msra.mxu0 %v1115
    %1200 = vmatmul.bf16.gmra.mxu0 %v737
    %v1201 = vpop.f32.mrf.mxu0
    %v1202 = vadd.f32 %v986, %v1201
    %v1203 = vpop.f32.mrf.mxu0
    %v1204 = vadd.f32 %v988, %v1203
    %1205 = vdwg.mxu0
    %1206 = vmatpush.bf16.msra.mxu0 %v1144
    %1207 = vmatpush.bf16.msra.mxu0 %v1140
    %1208 = vmatpush.bf16.msra.mxu0 %v1136
    %1209 = vmatpush.bf16.msra.mxu0 %v1132
    %1210 = vmatpush.bf16.msra.mxu0 %v1128
    %1211 = vmatpush.bf16.msra.mxu0 %v1124
    %1212 = vmatpush.bf16.msra.mxu0 %v1120
    %1213 = vmatpush.bf16.msra.mxu0 %v1116
    %1214 = vmatmul.bf16.gmra.mxu0 %v737
    %v1215 = vpop.f32.mrf.mxu0
    %v1216 = vadd.f32 %v1000, %v1215
    %v1217 = vpop.f32.mrf.mxu0
    %v1218 = vadd.f32 %v1002, %v1217
    %1219 = vdwg.mxu0
    %1220 = vmatpush.bf16.msra.mxu0 %v1145
    %1221 = vmatpush.bf16.msra.mxu0 %v1141
    %1222 = vmatpush.bf16.msra.mxu0 %v1137
    %1223 = vmatpush.bf16.msra.mxu0 %v1133
    %1224 = vmatpush.bf16.msra.mxu0 %v1129
    %1225 = vmatpush.bf16.msra.mxu0 %v1125
    %1226 = vmatpush.bf16.msra.mxu0 %v1121
    %1227 = vmatpush.bf16.msra.mxu0 %v1117
    %1228 = vmatmul.bf16.gmra.mxu0 %v737
    %v1229 = vpop.f32.mrf.mxu0
    %v1230 = vadd.f32 %v1014, %v1229
    %v1231 = vpop.f32.mrf.mxu0
    %v1232 = vadd.f32 %v1016, %v1231
    %1233 = vdwg.mxu0
    %v1234 = vld [vmem:[%s5] sm:$0xf]
    %v1236 = vperm.slane %v1234, 0
    %v1237 = vperm.slane %v1234, 1
    %v1238 = vperm.slane %v1234, 2
    %v1239 = vperm.slane %v1234, 3
    %v1244 = vadd.f32 %v1188, %v1236
    %v1245 = vadd.f32 %v1202, %v1237
    %v1246 = vadd.f32 %v1216, %v1238
    %v1247 = vadd.f32 %v1230, %v1239
    %v1248 = vadd.f32 %v1190, %v1236
    %v1249 = vadd.f32 %v1204, %v1237
    %v1250 = vadd.f32 %v1218, %v1238
    %v1251 = vadd.f32 %v1232, %v1239
    %v1252 = vxor.u32 %v1244, 2147483648
    %v1253 = vxor.u32 %v1245, 2147483648
    %v1254 = vxor.u32 %v1246, 2147483648
    %v1255 = vxor.u32 %v1248, 2147483648
    %v1256 = vxor.u32 %v1249, 2147483648
    %v1257 = vxor.u32 %v1250, 2147483648
    %v1258 = vmul.f32 %v1252, 1.442695
    %v1259 = vpow.pop %v1258
    %v1260 = vmul.f32 %v1253, 1.442695
    %v1261 = vpow.pop %v1260
    %v1262 = vmul.f32 %v1254, 1.442695
    %v1263 = vpow.pop %v1262
    %v1264 = vmul.f32 %v1255, 1.442695
    %v1265 = vpow.pop %v1264
    %v1266 = vmul.f32 %v1256, 1.442695
    %v1267 = vpow.pop %v1266
    %v1268 = vmul.f32 %v1257, 1.442695
    %v1269 = vpow.pop %v1268
    %v1270 = vadd.f32 %v1259, 1.0
    %v1271 = vadd.f32 %v1261, 1.0
    %v1272 = vadd.f32 %v1263, 1.0
    %v1273 = vadd.f32 %v1265, 1.0
    %v1274 = vadd.f32 %v1267, 1.0
    %v1275 = vadd.f32 %v1269, 1.0
    %v1276 = vrcp.pop %v1270
    %v1277 = vmul.f32 %v1270, %v1276
    %v1278 = vsub.f32 1.0, %v1277
    %v1279 = vmul.f32 %v1276, %v1278
    %v1280 = vadd.f32 %v1276, %v1279
    %vm1281 = vweird.f32 %v1270
    %vm1282 = vweird.f32 %v1276
    %vm1283 = vmor %vm1281, %vm1282
    %v1284 = vsel %vm1283, %v1276, %v1280
    %v1285 = vand.u32 2147483647, %v1270
    %vm1286 = vcmp.eq.f32.partialorder %v1285, 8.507059e+37
    %v1287 = vand.u32 %v1270, 2147483648
    %v1288 = vor.u32 1.1754944e-38, %v1287
    %v1289 = vsel %vm1286, %v1288, %v1284
    %v1290 = vmul.f32 1.0, %v1289
    %v1291 = vrcp.pop %v1271
    %v1292 = vmul.f32 %v1271, %v1291
    %v1293 = vsub.f32 1.0, %v1292
    %v1294 = vmul.f32 %v1291, %v1293
    %v1295 = vadd.f32 %v1291, %v1294
    %vm1296 = vweird.f32 %v1271
    %vm1297 = vweird.f32 %v1291
    %vm1298 = vmor %vm1296, %vm1297
    %v1299 = vsel %vm1298, %v1291, %v1295
    %v1300 = vand.u32 2147483647, %v1271
    %vm1301 = vcmp.eq.f32.partialorder %v1300, 8.507059e+37
    %v1302 = vand.u32 %v1271, 2147483648
    %v1303 = vor.u32 1.1754944e-38, %v1302
    %v1304 = vsel %vm1301, %v1303, %v1299
    %v1305 = vmul.f32 1.0, %v1304
    %v1306 = vrcp.pop %v1272
    %v1307 = vmul.f32 %v1272, %v1306
    %v1308 = vsub.f32 1.0, %v1307
    %v1309 = vmul.f32 %v1306, %v1308
    %v1310 = vadd.f32 %v1306, %v1309
    %vm1311 = vweird.f32 %v1272
    %vm1312 = vweird.f32 %v1306
    %vm1313 = vmor %vm1311, %vm1312
    %v1314 = vsel %vm1313, %v1306, %v1310
    %v1315 = vand.u32 2147483647, %v1272
    %vm1316 = vcmp.eq.f32.partialorder %v1315, 8.507059e+37
    %v1317 = vand.u32 %v1272, 2147483648
    %v1318 = vor.u32 1.1754944e-38, %v1317
    %v1319 = vsel %vm1316, %v1318, %v1314
    %v1320 = vmul.f32 1.0, %v1319
    %v1321 = vrcp.pop %v1273
    %v1322 = vmul.f32 %v1273, %v1321
    %v1323 = vsub.f32 1.0, %v1322
    %v1324 = vmul.f32 %v1321, %v1323
    %v1325 = vadd.f32 %v1321, %v1324
    %vm1326 = vweird.f32 %v1273
    %vm1327 = vweird.f32 %v1321
    %vm1328 = vmor %vm1326, %vm1327
    %v1329 = vsel %vm1328, %v1321, %v1325
    %v1330 = vand.u32 2147483647, %v1273
    %vm1331 = vcmp.eq.f32.partialorder %v1330, 8.507059e+37
    %v1332 = vand.u32 %v1273, 2147483648
    %v1333 = vor.u32 1.1754944e-38, %v1332
    %v1334 = vsel %vm1331, %v1333, %v1329
    %v1335 = vmul.f32 1.0, %v1334
    %v1336 = vrcp.pop %v1274
    %v1337 = vmul.f32 %v1274, %v1336
    %v1338 = vsub.f32 1.0, %v1337
    %v1339 = vmul.f32 %v1336, %v1338
    %v1340 = vadd.f32 %v1336, %v1339
    %vm1341 = vweird.f32 %v1274
    %vm1342 = vweird.f32 %v1336
    %vm1343 = vmor %vm1341, %vm1342
    %v1344 = vsel %vm1343, %v1336, %v1340
    %v1345 = vand.u32 2147483647, %v1274
    %vm1346 = vcmp.eq.f32.partialorder %v1345, 8.507059e+37
    %v1347 = vand.u32 %v1274, 2147483648
    %v1348 = vor.u32 1.1754944e-38, %v1347
    %v1349 = vsel %vm1346, %v1348, %v1344
    %v1350 = vmul.f32 1.0, %v1349
    %v1351 = vrcp.pop %v1275
    %v1352 = vmul.f32 %v1275, %v1351
    %v1353 = vsub.f32 1.0, %v1352
    %v1354 = vmul.f32 %v1351, %v1353
    %v1355 = vadd.f32 %v1351, %v1354
    %vm1356 = vweird.f32 %v1275
    %vm1357 = vweird.f32 %v1351
    %vm1358 = vmor %vm1356, %vm1357
    %v1359 = vsel %vm1358, %v1351, %v1355
    %v1360 = vand.u32 2147483647, %v1275
    %vm1361 = vcmp.eq.f32.partialorder %v1360, 8.507059e+37
    %v1362 = vand.u32 %v1275, 2147483648
    %v1363 = vor.u32 1.1754944e-38, %v1362
    %v1364 = vsel %vm1361, %v1363, %v1359
    %v1365 = vmul.f32 1.0, %v1364
    %v1366 = vtanh.pop %v1247
    %v1367 = vtanh.pop %v1251
    %v1368 = vmul.f32 %v1305, 0.0
    %v1369 = vmul.f32 %v1350, 0.0
    %v1370 = vmul.f32 %v1290, %v1366
    %v1371 = vmul.f32 %v1335, %v1367
    %v1372 = vadd.f32 %v1368, %v1370
    %v1373 = vadd.f32 %v1369, %v1371
    %v1374 = vtanh.pop %v1372
    %v1375 = vtanh.pop %v1373
    %v1376 = vmul.f32 %v1320, %v1374
    %v1377 = vmul.f32 %v1365, %v1375
    %1378 = vmatpush.bf16.msra.mxu0 %v511
    %1379 = vmatpush.bf16.msra.mxu0 %v507
    %1380 = vmatpush.bf16.msra.mxu0 %v503
    %1381 = vmatpush.bf16.msra.mxu0 %v499
    %1382 = vmatpush.bf16.msra.mxu0 %v495
    %1383 = vmatpush.bf16.msra.mxu0 %v491
    %1384 = vmatpush.bf16.msra.mxu0 %v487
    %1385 = vmatpush.bf16.msra.mxu0 %v483
    %1386 = vmatmul.bf16.gmra.mxu0 %v737
    %v1387 = vpop.f32.mrf.mxu0
    %v1388 = vadd.f32 0.0, %v1387
    %v1389 = vpop.f32.mrf.mxu0
    %v1390 = vadd.f32 0.0, %v1389
    %1391 = vdwg.mxu0
    %1392 = vmatpush.bf16.msra.mxu0 %v512
    %1393 = vmatpush.bf16.msra.mxu0 %v508
    %1394 = vmatpush.bf16.msra.mxu0 %v504
    %1395 = vmatpush.bf16.msra.mxu0 %v500
    %1396 = vmatpush.bf16.msra.mxu0 %v496
    %1397 = vmatpush.bf16.msra.mxu0 %v492
    %1398 = vmatpush.bf16.msra.mxu0 %v488
    %1399 = vmatpush.bf16.msra.mxu0 %v484
    %1400 = vmatmul.bf16.gmra.mxu0 %v737
    %v1401 = vpop.f32.mrf.mxu0
    %v1402 = vadd.f32 0.0, %v1401
    %v1403 = vpop.f32.mrf.mxu0
    %v1404 = vadd.f32 0.0, %v1403
    %1405 = vdwg.mxu0
    %1406 = vmatpush.bf16.msra.mxu0 %v513
    %1407 = vmatpush.bf16.msra.mxu0 %v509
    %1408 = vmatpush.bf16.msra.mxu0 %v505
    %1409 = vmatpush.bf16.msra.mxu0 %v501
    %1410 = vmatpush.bf16.msra.mxu0 %v497
    %1411 = vmatpush.bf16.msra.mxu0 %v493
    %1412 = vmatpush.bf16.msra.mxu0 %v489
    %1413 = vmatpush.bf16.msra.mxu0 %v485
    %1414 = vmatmul.bf16.gmra.mxu0 %v737
    %v1415 = vpop.f32.mrf.mxu0
    %v1416 = vadd.f32 0.0, %v1415
    %v1417 = vpop.f32.mrf.mxu0
    %v1418 = vadd.f32 0.0, %v1417
    %1419 = vdwg.mxu0
    %1420 = vmatpush.bf16.msra.mxu0 %v514
    %1421 = vmatpush.bf16.msra.mxu0 %v510
    %1422 = vmatpush.bf16.msra.mxu0 %v506
    %1423 = vmatpush.bf16.msra.mxu0 %v502
    %1424 = vmatpush.bf16.msra.mxu0 %v498
    %1425 = vmatpush.bf16.msra.mxu0 %v494
    %1426 = vmatpush.bf16.msra.mxu0 %v490
    %1427 = vmatpush.bf16.msra.mxu0 %v486
    %1428 = vmatmul.bf16.gmra.mxu0 %v737
    %v1429 = vpop.f32.mrf.mxu0
    %v1430 = vadd.f32 0.0, %v1429
    %v1431 = vpop.f32.mrf.mxu0
    %v1432 = vadd.f32 0.0, %v1431
    %1433 = vdwg.mxu0
    %v1434 = vadd.f32 %v174, %v1388
    %v1435 = vadd.f32 %v223, %v1402
    %v1436 = vadd.f32 %v272, %v1416
    %v1437 = vadd.f32 %v321, %v1430
    %v1438 = vadd.f32 %v176, %v1390
    %v1439 = vadd.f32 %v225, %v1404
    %v1440 = vadd.f32 %v274, %v1418
    %v1441 = vadd.f32 %v323, %v1432
    %v1442 = vxor.u32 %v1434, 2147483648
    %v1443 = vxor.u32 %v1435, 2147483648
    %v1444 = vxor.u32 %v1436, 2147483648
    %v1445 = vxor.u32 %v1438, 2147483648
    %v1446 = vxor.u32 %v1439, 2147483648
    %v1447 = vxor.u32 %v1440, 2147483648
    %v1448 = vmul.f32 %v1442, 1.442695
    %v1449 = vpow.pop %v1448
    %v1450 = vmul.f32 %v1443, 1.442695
    %v1451 = vpow.pop %v1450
    %v1452 = vmul.f32 %v1444, 1.442695
    %v1453 = vpow.pop %v1452
    %v1454 = vmul.f32 %v1445, 1.442695
    %v1455 = vpow.pop %v1454
    %v1456 = vmul.f32 %v1446, 1.442695
    %v1457 = vpow.pop %v1456
    %v1458 = vmul.f32 %v1447, 1.442695
    %v1459 = vpow.pop %v1458
    %v1460 = vadd.f32 %v1449, 1.0
    %v1461 = vadd.f32 %v1451, 1.0
    %v1462 = vadd.f32 %v1453, 1.0
    %v1463 = vadd.f32 %v1455, 1.0
    %v1464 = vadd.f32 %v1457, 1.0
    %v1465 = vadd.f32 %v1459, 1.0
    %v1466 = vrcp.pop %v1460
    %v1467 = vmul.f32 %v1460, %v1466
    %v1468 = vsub.f32 1.0, %v1467
    %v1469 = vmul.f32 %v1466, %v1468
    %v1470 = vadd.f32 %v1466, %v1469
    %vm1471 = vweird.f32 %v1460
    %vm1472 = vweird.f32 %v1466
    %vm1473 = vmor %vm1471, %vm1472
    %v1474 = vsel %vm1473, %v1466, %v1470
    %v1475 = vand.u32 2147483647, %v1460
    %vm1476 = vcmp.eq.f32.partialorder %v1475, 8.507059e+37
    %v1477 = vand.u32 %v1460, 2147483648
    %v1478 = vor.u32 1.1754944e-38, %v1477
    %v1479 = vsel %vm1476, %v1478, %v1474
    %v1480 = vmul.f32 1.0, %v1479
    %v1481 = vrcp.pop %v1461
    %v1482 = vmul.f32 %v1461, %v1481
    %v1483 = vsub.f32 1.0, %v1482
    %v1484 = vmul.f32 %v1481, %v1483
    %v1485 = vadd.f32 %v1481, %v1484
    %vm1486 = vweird.f32 %v1461
    %vm1487 = vweird.f32 %v1481
    %vm1488 = vmor %vm1486, %vm1487
    %v1489 = vsel %vm1488, %v1481, %v1485
    %v1490 = vand.u32 2147483647, %v1461
    %vm1491 = vcmp.eq.f32.partialorder %v1490, 8.507059e+37
    %v1492 = vand.u32 %v1461, 2147483648
    %v1493 = vor.u32 1.1754944e-38, %v1492
    %v1494 = vsel %vm1491, %v1493, %v1489
    %v1495 = vmul.f32 1.0, %v1494
    %v1496 = vrcp.pop %v1462
    %v1497 = vmul.f32 %v1462, %v1496
    %v1498 = vsub.f32 1.0, %v1497
    %v1499 = vmul.f32 %v1496, %v1498
    %v1500 = vadd.f32 %v1496, %v1499
    %vm1501 = vweird.f32 %v1462
    %vm1502 = vweird.f32 %v1496
    %vm1503 = vmor %vm1501, %vm1502
    %v1504 = vsel %vm1503, %v1496, %v1500
    %v1505 = vand.u32 2147483647, %v1462
    %vm1506 = vcmp.eq.f32.partialorder %v1505, 8.507059e+37
    %v1507 = vand.u32 %v1462, 2147483648
    %v1508 = vor.u32 1.1754944e-38, %v1507
    %v1509 = vsel %vm1506, %v1508, %v1504
    %v1510 = vmul.f32 1.0, %v1509
    %v1511 = vrcp.pop %v1463
    %v1512 = vmul.f32 %v1463, %v1511
    %v1513 = vsub.f32 1.0, %v1512
    %v1514 = vmul.f32 %v1511, %v1513
    %v1515 = vadd.f32 %v1511, %v1514
    %vm1516 = vweird.f32 %v1463
    %vm1517 = vweird.f32 %v1511
    %vm1518 = vmor %vm1516, %vm1517
    %v1519 = vsel %vm1518, %v1511, %v1515
    %v1520 = vand.u32 2147483647, %v1463
    %vm1521 = vcmp.eq.f32.partialorder %v1520, 8.507059e+37
    %v1522 = vand.u32 %v1463, 2147483648
    %v1523 = vor.u32 1.1754944e-38, %v1522
    %v1524 = vsel %vm1521, %v1523, %v1519
    %v1525 = vmul.f32 1.0, %v1524
    %v1526 = vrcp.pop %v1464
    %v1527 = vmul.f32 %v1464, %v1526
    %v1528 = vsub.f32 1.0, %v1527
    %v1529 = vmul.f32 %v1526, %v1528
    %v1530 = vadd.f32 %v1526, %v1529
    %vm1531 = vweird.f32 %v1464
    %vm1532 = vweird.f32 %v1526
    %vm1533 = vmor %vm1531, %vm1532
    %v1534 = vsel %vm1533, %v1526, %v1530
    %v1535 = vand.u32 2147483647, %v1464
    %vm1536 = vcmp.eq.f32.partialorder %v1535, 8.507059e+37
    %v1537 = vand.u32 %v1464, 2147483648
    %v1538 = vor.u32 1.1754944e-38, %v1537
    %v1539 = vsel %vm1536, %v1538, %v1534
    %v1540 = vmul.f32 1.0, %v1539
    %v1541 = vrcp.pop %v1465
    %v1542 = vmul.f32 %v1465, %v1541
    %v1543 = vsub.f32 1.0, %v1542
    %v1544 = vmul.f32 %v1541, %v1543
    %v1545 = vadd.f32 %v1541, %v1544
    %vm1546 = vweird.f32 %v1465
    %vm1547 = vweird.f32 %v1541
    %vm1548 = vmor %vm1546, %vm1547
    %v1549 = vsel %vm1548, %v1541, %v1545
    %v1550 = vand.u32 2147483647, %v1465
    %vm1551 = vcmp.eq.f32.partialorder %v1550, 8.507059e+37
    %v1552 = vand.u32 %v1465, 2147483648
    %v1553 = vor.u32 1.1754944e-38, %v1552
    %v1554 = vsel %vm1551, %v1553, %v1549
    %v1555 = vmul.f32 1.0, %v1554
    %v1556 = vtanh.pop %v1437
    %v1557 = vtanh.pop %v1441
    %v1558 = vmul.f32 %v1495, %v731
    %v1559 = vmul.f32 %v1540, %v732
    %v1560 = vmul.f32 %v1480, %v1556
    %v1561 = vmul.f32 %v1525, %v1557
    %v1562 = vadd.f32 %v1558, %v1560
    %v1563 = vadd.f32 %v1559, %v1561
    %v1564 = vtanh.pop %v1562
    %v1565 = vtanh.pop %v1563
    %v1566 = vmul.f32 %v1510, %v1564
    %v1567 = vmul.f32 %v1555, %v1565
    %v1568 = vpack.c.bf16 %v1567, %v1566
    %v1569 = vpack.c.bf16 %v1377, %v1376
    %1570 = vmatpush.bf16.msra.mxu0 %v926
    %1571 = vmatpush.bf16.msra.mxu0 %v922
    %1572 = vmatpush.bf16.msra.mxu0 %v918
    %1573 = vmatpush.bf16.msra.mxu0 %v914
    %1574 = vmatpush.bf16.msra.mxu0 %v910
    %1575 = vmatpush.bf16.msra.mxu0 %v906
    %1576 = vmatpush.bf16.msra.mxu0 %v902
    %1577 = vmatpush.bf16.msra.mxu0 %v898
    %1578 = vmatmul.bf16.gmra.mxu0 %v1569
    %v1579 = vpop.f32.mrf.mxu0
    %v1580 = vadd.f32 0.0, %v1579
    %v1581 = vpop.f32.mrf.mxu0
    %v1582 = vadd.f32 0.0, %v1581
    %1583 = vdwg.mxu0
    %1584 = vmatpush.bf16.msra.mxu0 %v927
    %1585 = vmatpush.bf16.msra.mxu0 %v923
    %1586 = vmatpush.bf16.msra.mxu0 %v919
    %1587 = vmatpush.bf16.msra.mxu0 %v915
    %1588 = vmatpush.bf16.msra.mxu0 %v911
    %1589 = vmatpush.bf16.msra.mxu0 %v907
    %1590 = vmatpush.bf16.msra.mxu0 %v903
    %1591 = vmatpush.bf16.msra.mxu0 %v899
    %1592 = vmatmul.bf16.gmra.mxu0 %v1569
    %v1593 = vpop.f32.mrf.mxu0
    %v1594 = vadd.f32 0.0, %v1593
    %v1595 = vpop.f32.mrf.mxu0
    %v1596 = vadd.f32 0.0, %v1595
    %1597 = vdwg.mxu0
    %1598 = vmatpush.bf16.msra.mxu0 %v928
    %1599 = vmatpush.bf16.msra.mxu0 %v924
    %1600 = vmatpush.bf16.msra.mxu0 %v920
    %1601 = vmatpush.bf16.msra.mxu0 %v916
    %1602 = vmatpush.bf16.msra.mxu0 %v912
    %1603 = vmatpush.bf16.msra.mxu0 %v908
    %1604 = vmatpush.bf16.msra.mxu0 %v904
    %1605 = vmatpush.bf16.msra.mxu0 %v900
    %1606 = vmatmul.bf16.gmra.mxu0 %v1569
    %v1607 = vpop.f32.mrf.mxu0
    %v1608 = vadd.f32 0.0, %v1607
    %v1609 = vpop.f32.mrf.mxu0
    %v1610 = vadd.f32 0.0, %v1609
    %1611 = vdwg.mxu0
    %1612 = vmatpush.bf16.msra.mxu0 %v929
    %1613 = vmatpush.bf16.msra.mxu0 %v925
    %1614 = vmatpush.bf16.msra.mxu0 %v921
    %1615 = vmatpush.bf16.msra.mxu0 %v917
    %1616 = vmatpush.bf16.msra.mxu0 %v913
    %1617 = vmatpush.bf16.msra.mxu0 %v909
    %1618 = vmatpush.bf16.msra.mxu0 %v905
    %1619 = vmatpush.bf16.msra.mxu0 %v901
    %1620 = vmatmul.bf16.gmra.mxu0 %v1569
    %v1621 = vpop.f32.mrf.mxu0
    %v1622 = vadd.f32 0.0, %v1621
    %v1623 = vpop.f32.mrf.mxu0
    %v1624 = vadd.f32 0.0, %v1623
    %1625 = vdwg.mxu0
    %1626 = vmatpush.bf16.msra.mxu0 %v1142
    %1627 = vmatpush.bf16.msra.mxu0 %v1138
    %1628 = vmatpush.bf16.msra.mxu0 %v1134
    %1629 = vmatpush.bf16.msra.mxu0 %v1130
    %1630 = vmatpush.bf16.msra.mxu0 %v1126
    %1631 = vmatpush.bf16.msra.mxu0 %v1122
    %1632 = vmatpush.bf16.msra.mxu0 %v1118
    %1633 = vmatpush.bf16.msra.mxu0 %v1114
    %1634 = vmatmul.bf16.gmra.mxu0 %v1568
    %v1635 = vpop.f32.mrf.mxu0
    %v1636 = vadd.f32 %v1580, %v1635
    %v1637 = vpop.f32.mrf.mxu0
    %v1638 = vadd.f32 %v1582, %v1637
    %1639 = vdwg.mxu0
    %1640 = vmatpush.bf16.msra.mxu0 %v1143
    %1641 = vmatpush.bf16.msra.mxu0 %v1139
    %1642 = vmatpush.bf16.msra.mxu0 %v1135
    %1643 = vmatpush.bf16.msra.mxu0 %v1131
    %1644 = vmatpush.bf16.msra.mxu0 %v1127
    %1645 = vmatpush.bf16.msra.mxu0 %v1123
    %1646 = vmatpush.bf16.msra.mxu0 %v1119
    %1647 = vmatpush.bf16.msra.mxu0 %v1115
    %1648 = vmatmul.bf16.gmra.mxu0 %v1568
    %v1649 = vpop.f32.mrf.mxu0
    %v1650 = vadd.f32 %v1594, %v1649
    %v1651 = vpop.f32.mrf.mxu0
    %v1652 = vadd.f32 %v1596, %v1651
    %1653 = vdwg.mxu0
    %1654 = vmatpush.bf16.msra.mxu0 %v1144
    %1655 = vmatpush.bf16.msra.mxu0 %v1140
    %1656 = vmatpush.bf16.msra.mxu0 %v1136
    %1657 = vmatpush.bf16.msra.mxu0 %v1132
    %1658 = vmatpush.bf16.msra.mxu0 %v1128
    %1659 = vmatpush.bf16.msra.mxu0 %v1124
    %1660 = vmatpush.bf16.msra.mxu0 %v1120
    %1661 = vmatpush.bf16.msra.mxu0 %v1116
    %1662 = vmatmul.bf16.gmra.mxu0 %v1568
    %v1663 = vpop.f32.mrf.mxu0
    %v1664 = vadd.f32 %v1608, %v1663
    %v1665 = vpop.f32.mrf.mxu0
    %v1666 = vadd.f32 %v1610, %v1665
    %1667 = vdwg.mxu0
    %1668 = vmatpush.bf16.msra.mxu0 %v1145
    %1669 = vmatpush.bf16.msra.mxu0 %v1141
    %1670 = vmatpush.bf16.msra.mxu0 %v1137
    %1671 = vmatpush.bf16.msra.mxu0 %v1133
    %1672 = vmatpush.bf16.msra.mxu0 %v1129
    %1673 = vmatpush.bf16.msra.mxu0 %v1125
    %1674 = vmatpush.bf16.msra.mxu0 %v1121
    %1675 = vmatpush.bf16.msra.mxu0 %v1117
    %1676 = vmatmul.bf16.gmra.mxu0 %v1568
    %v1677 = vpop.f32.mrf.mxu0
    %v1678 = vadd.f32 %v1622, %v1677
    %v1679 = vpop.f32.mrf.mxu0
    %v1680 = vadd.f32 %v1624, %v1679
    %1681 = vdwg.mxu0
    %v1682 = vadd.f32 %v1636, %v1236
    %v1683 = vadd.f32 %v1650, %v1237
    %v1684 = vadd.f32 %v1664, %v1238
    %v1685 = vadd.f32 %v1678, %v1239
    %v1686 = vadd.f32 %v1638, %v1236
    %v1687 = vadd.f32 %v1652, %v1237
    %v1688 = vadd.f32 %v1666, %v1238
    %v1689 = vadd.f32 %v1680, %v1239
    %v1690 = vxor.u32 %v1682, 2147483648
    %v1691 = vxor.u32 %v1683, 2147483648
    %v1692 = vxor.u32 %v1684, 2147483648
    %v1693 = vxor.u32 %v1686, 2147483648
    %v1694 = vxor.u32 %v1687, 2147483648
    %v1695 = vxor.u32 %v1688, 2147483648
    %v1696 = vmul.f32 %v1690, 1.442695
    %v1697 = vpow.pop %v1696
    %v1698 = vmul.f32 %v1691, 1.442695
    %v1699 = vpow.pop %v1698
    %v1700 = vmul.f32 %v1692, 1.442695
    %v1701 = vpow.pop %v1700
    %v1702 = vmul.f32 %v1693, 1.442695
    %v1703 = vpow.pop %v1702
    %v1704 = vmul.f32 %v1694, 1.442695
    %v1705 = vpow.pop %v1704
    %v1706 = vmul.f32 %v1695, 1.442695
    %v1707 = vpow.pop %v1706
    %v1708 = vadd.f32 %v1697, 1.0
    %v1709 = vadd.f32 %v1699, 1.0
    %v1710 = vadd.f32 %v1701, 1.0
    %v1711 = vadd.f32 %v1703, 1.0
    %v1712 = vadd.f32 %v1705, 1.0
    %v1713 = vadd.f32 %v1707, 1.0
    %v1714 = vrcp.pop %v1708
    %v1715 = vmul.f32 %v1708, %v1714
    %v1716 = vsub.f32 1.0, %v1715
    %v1717 = vmul.f32 %v1714, %v1716
    %v1718 = vadd.f32 %v1714, %v1717
    %vm1719 = vweird.f32 %v1708
    %vm1720 = vweird.f32 %v1714
    %vm1721 = vmor %vm1719, %vm1720
    %v1722 = vsel %vm1721, %v1714, %v1718
    %v1723 = vand.u32 2147483647, %v1708
    %vm1724 = vcmp.eq.f32.partialorder %v1723, 8.507059e+37
    %v1725 = vand.u32 %v1708, 2147483648
    %v1726 = vor.u32 1.1754944e-38, %v1725
    %v1727 = vsel %vm1724, %v1726, %v1722
    %v1728 = vmul.f32 1.0, %v1727
    %v1729 = vrcp.pop %v1709
    %v1730 = vmul.f32 %v1709, %v1729
    %v1731 = vsub.f32 1.0, %v1730
    %v1732 = vmul.f32 %v1729, %v1731
    %v1733 = vadd.f32 %v1729, %v1732
    %vm1734 = vweird.f32 %v1709
    %vm1735 = vweird.f32 %v1729
    %vm1736 = vmor %vm1734, %vm1735
    %v1737 = vsel %vm1736, %v1729, %v1733
    %v1738 = vand.u32 2147483647, %v1709
    %vm1739 = vcmp.eq.f32.partialorder %v1738, 8.507059e+37
    %v1740 = vand.u32 %v1709, 2147483648
    %v1741 = vor.u32 1.1754944e-38, %v1740
    %v1742 = vsel %vm1739, %v1741, %v1737
    %v1743 = vmul.f32 1.0, %v1742
    %v1744 = vrcp.pop %v1710
    %v1745 = vmul.f32 %v1710, %v1744
    %v1746 = vsub.f32 1.0, %v1745
    %v1747 = vmul.f32 %v1744, %v1746
    %v1748 = vadd.f32 %v1744, %v1747
    %vm1749 = vweird.f32 %v1710
    %vm1750 = vweird.f32 %v1744
    %vm1751 = vmor %vm1749, %vm1750
    %v1752 = vsel %vm1751, %v1744, %v1748
    %v1753 = vand.u32 2147483647, %v1710
    %vm1754 = vcmp.eq.f32.partialorder %v1753, 8.507059e+37
    %v1755 = vand.u32 %v1710, 2147483648
    %v1756 = vor.u32 1.1754944e-38, %v1755
    %v1757 = vsel %vm1754, %v1756, %v1752
    %v1758 = vmul.f32 1.0, %v1757
    %v1759 = vrcp.pop %v1711
    %v1760 = vmul.f32 %v1711, %v1759
    %v1761 = vsub.f32 1.0, %v1760
    %v1762 = vmul.f32 %v1759, %v1761
    %v1763 = vadd.f32 %v1759, %v1762
    %vm1764 = vweird.f32 %v1711
    %vm1765 = vweird.f32 %v1759
    %vm1766 = vmor %vm1764, %vm1765
    %v1767 = vsel %vm1766, %v1759, %v1763
    %v1768 = vand.u32 2147483647, %v1711
    %vm1769 = vcmp.eq.f32.partialorder %v1768, 8.507059e+37
    %v1770 = vand.u32 %v1711, 2147483648
    %v1771 = vor.u32 1.1754944e-38, %v1770
    %v1772 = vsel %vm1769, %v1771, %v1767
    %v1773 = vmul.f32 1.0, %v1772
    %v1774 = vrcp.pop %v1712
    %v1775 = vmul.f32 %v1712, %v1774
    %v1776 = vsub.f32 1.0, %v1775
    %v1777 = vmul.f32 %v1774, %v1776
    %v1778 = vadd.f32 %v1774, %v1777
    %vm1779 = vweird.f32 %v1712
    %vm1780 = vweird.f32 %v1774
    %vm1781 = vmor %vm1779, %vm1780
    %v1782 = vsel %vm1781, %v1774, %v1778
    %v1783 = vand.u32 2147483647, %v1712
    %vm1784 = vcmp.eq.f32.partialorder %v1783, 8.507059e+37
    %v1785 = vand.u32 %v1712, 2147483648
    %v1786 = vor.u32 1.1754944e-38, %v1785
    %v1787 = vsel %vm1784, %v1786, %v1782
    %v1788 = vmul.f32 1.0, %v1787
    %v1789 = vrcp.pop %v1713
    %v1790 = vmul.f32 %v1713, %v1789
    %v1791 = vsub.f32 1.0, %v1790
    %v1792 = vmul.f32 %v1789, %v1791
    %v1793 = vadd.f32 %v1789, %v1792
    %vm1794 = vweird.f32 %v1713
    %vm1795 = vweird.f32 %v1789
    %vm1796 = vmor %vm1794, %vm1795
    %v1797 = vsel %vm1796, %v1789, %v1793
    %v1798 = vand.u32 2147483647, %v1713
    %vm1799 = vcmp.eq.f32.partialorder %v1798, 8.507059e+37
    %v1800 = vand.u32 %v1713, 2147483648
    %v1801 = vor.u32 1.1754944e-38, %v1800
    %v1802 = vsel %vm1799, %v1801, %v1797
    %v1803 = vmul.f32 1.0, %v1802
    %v1804 = vtanh.pop %v1685
    %v1805 = vtanh.pop %v1689
    %v1806 = vmul.f32 %v1743, %v1372
    %v1807 = vmul.f32 %v1788, %v1373
    %v1808 = vmul.f32 %v1728, %v1804
    %v1809 = vmul.f32 %v1773, %v1805
    %v1810 = vadd.f32 %v1806, %v1808
    %v1811 = vadd.f32 %v1807, %v1809
    %v1812 = vtanh.pop %v1810
    %v1813 = vtanh.pop %v1811
    %v1814 = vmul.f32 %v1758, %v1812
    %v1815 = vmul.f32 %v1803, %v1813
    %1816 = vmatpush.bf16.msra.mxu0 %v511
    %1817 = vmatpush.bf16.msra.mxu0 %v507
    %1818 = vmatpush.bf16.msra.mxu0 %v503
    %1819 = vmatpush.bf16.msra.mxu0 %v499
    %1820 = vmatpush.bf16.msra.mxu0 %v495
    %1821 = vmatpush.bf16.msra.mxu0 %v491
    %1822 = vmatpush.bf16.msra.mxu0 %v487
    %1823 = vmatpush.bf16.msra.mxu0 %v483
    %1824 = vmatmul.bf16.gmra.mxu0 %v1568
    %v1825 = vpop.f32.mrf.mxu0
    %v1826 = vadd.f32 0.0, %v1825
    %v1827 = vpop.f32.mrf.mxu0
    %v1828 = vadd.f32 0.0, %v1827
    %1829 = vdwg.mxu0
    %1830 = vmatpush.bf16.msra.mxu0 %v512
    %1831 = vmatpush.bf16.msra.mxu0 %v508
    %1832 = vmatpush.bf16.msra.mxu0 %v504
    %1833 = vmatpush.bf16.msra.mxu0 %v500
    %1834 = vmatpush.bf16.msra.mxu0 %v496
    %1835 = vmatpush.bf16.msra.mxu0 %v492
    %1836 = vmatpush.bf16.msra.mxu0 %v488
    %1837 = vmatpush.bf16.msra.mxu0 %v484
    %1838 = vmatmul.bf16.gmra.mxu0 %v1568
    %v1839 = vpop.f32.mrf.mxu0
    %v1840 = vadd.f32 0.0, %v1839
    %v1841 = vpop.f32.mrf.mxu0
    %v1842 = vadd.f32 0.0, %v1841
    %1843 = vdwg.mxu0
    %1844 = vmatpush.bf16.msra.mxu0 %v513
    %1845 = vmatpush.bf16.msra.mxu0 %v509
    %1846 = vmatpush.bf16.msra.mxu0 %v505
    %1847 = vmatpush.bf16.msra.mxu0 %v501
    %1848 = vmatpush.bf16.msra.mxu0 %v497
    %1849 = vmatpush.bf16.msra.mxu0 %v493
    %1850 = vmatpush.bf16.msra.mxu0 %v489
    %1851 = vmatpush.bf16.msra.mxu0 %v485
    %1852 = vmatmul.bf16.gmra.mxu0 %v1568
    %v1853 = vpop.f32.mrf.mxu0
    %v1854 = vadd.f32 0.0, %v1853
    %v1855 = vpop.f32.mrf.mxu0
    %v1856 = vadd.f32 0.0, %v1855
    %1857 = vdwg.mxu0
    %1858 = vmatpush.bf16.msra.mxu0 %v514
    %1859 = vmatpush.bf16.msra.mxu0 %v510
    %1860 = vmatpush.bf16.msra.mxu0 %v506
    %1861 = vmatpush.bf16.msra.mxu0 %v502
    %1862 = vmatpush.bf16.msra.mxu0 %v498
    %1863 = vmatpush.bf16.msra.mxu0 %v494
    %1864 = vmatpush.bf16.msra.mxu0 %v490
    %1865 = vmatpush.bf16.msra.mxu0 %v486
    %1866 = vmatmul.bf16.gmra.mxu0 %v1568
    %v1867 = vpop.f32.mrf.mxu0
    %v1868 = vadd.f32 0.0, %v1867
    %v1869 = vpop.f32.mrf.mxu0
    %v1870 = vadd.f32 0.0, %v1869
    %1871 = vdwg.mxu0
    %v1872 = vadd.f32 %v179, %v1826
    %v1873 = vadd.f32 %v228, %v1840
    %v1874 = vadd.f32 %v277, %v1854
    %v1875 = vadd.f32 %v326, %v1868
    %v1876 = vadd.f32 %v181, %v1828
    %v1877 = vadd.f32 %v230, %v1842
    %v1878 = vadd.f32 %v279, %v1856
    %v1879 = vadd.f32 %v328, %v1870
    %v1880 = vxor.u32 %v1872, 2147483648
    %v1881 = vxor.u32 %v1873, 2147483648
    %v1882 = vxor.u32 %v1874, 2147483648
    %v1883 = vxor.u32 %v1876, 2147483648
    %v1884 = vxor.u32 %v1877, 2147483648
    %v1885 = vxor.u32 %v1878, 2147483648
    %v1886 = vmul.f32 %v1880, 1.442695
    %v1887 = vpow.pop %v1886
    %v1888 = vmul.f32 %v1881, 1.442695
    %v1889 = vpow.pop %v1888
    %v1890 = vmul.f32 %v1882, 1.442695
    %v1891 = vpow.pop %v1890
    %v1892 = vmul.f32 %v1883, 1.442695
    %v1893 = vpow.pop %v1892
    %v1894 = vmul.f32 %v1884, 1.442695
    %v1895 = vpow.pop %v1894
    %v1896 = vmul.f32 %v1885, 1.442695
    %v1897 = vpow.pop %v1896
    %v1898 = vadd.f32 %v1887, 1.0
    %v1899 = vadd.f32 %v1889, 1.0
    %v1900 = vadd.f32 %v1891, 1.0
    %v1901 = vadd.f32 %v1893, 1.0
    %v1902 = vadd.f32 %v1895, 1.0
    %v1903 = vadd.f32 %v1897, 1.0
    %v1904 = vrcp.pop %v1898
    %v1905 = vmul.f32 %v1898, %v1904
    %v1906 = vsub.f32 1.0, %v1905
    %v1907 = vmul.f32 %v1904, %v1906
    %v1908 = vadd.f32 %v1904, %v1907
    %vm1909 = vweird.f32 %v1898
    %vm1910 = vweird.f32 %v1904
    %vm1911 = vmor %vm1909, %vm1910
    %v1912 = vsel %vm1911, %v1904, %v1908
    %v1913 = vand.u32 2147483647, %v1898
    %vm1914 = vcmp.eq.f32.partialorder %v1913, 8.507059e+37
    %v1915 = vand.u32 %v1898, 2147483648
    %v1916 = vor.u32 1.1754944e-38, %v1915
    %v1917 = vsel %vm1914, %v1916, %v1912
    %v1918 = vmul.f32 1.0, %v1917
    %v1919 = vrcp.pop %v1899
    %v1920 = vmul.f32 %v1899, %v1919
    %v1921 = vsub.f32 1.0, %v1920
    %v1922 = vmul.f32 %v1919, %v1921
    %v1923 = vadd.f32 %v1919, %v1922
    %vm1924 = vweird.f32 %v1899
    %vm1925 = vweird.f32 %v1919
    %vm1926 = vmor %vm1924, %vm1925
    %v1927 = vsel %vm1926, %v1919, %v1923
    %v1928 = vand.u32 2147483647, %v1899
    %vm1929 = vcmp.eq.f32.partialorder %v1928, 8.507059e+37
    %v1930 = vand.u32 %v1899, 2147483648
    %v1931 = vor.u32 1.1754944e-38, %v1930
    %v1932 = vsel %vm1929, %v1931, %v1927
    %v1933 = vmul.f32 1.0, %v1932
    %v1934 = vrcp.pop %v1900
    %v1935 = vmul.f32 %v1900, %v1934
    %v1936 = vsub.f32 1.0, %v1935
    %v1937 = vmul.f32 %v1934, %v1936
    %v1938 = vadd.f32 %v1934, %v1937
    %vm1939 = vweird.f32 %v1900
    %vm1940 = vweird.f32 %v1934
    %vm1941 = vmor %vm1939, %vm1940
    %v1942 = vsel %vm1941, %v1934, %v1938
    %v1943 = vand.u32 2147483647, %v1900
    %vm1944 = vcmp.eq.f32.partialorder %v1943, 8.507059e+37
    %v1945 = vand.u32 %v1900, 2147483648
    %v1946 = vor.u32 1.1754944e-38, %v1945
    %v1947 = vsel %vm1944, %v1946, %v1942
    %v1948 = vmul.f32 1.0, %v1947
    %v1949 = vrcp.pop %v1901
    %v1950 = vmul.f32 %v1901, %v1949
    %v1951 = vsub.f32 1.0, %v1950
    %v1952 = vmul.f32 %v1949, %v1951
    %v1953 = vadd.f32 %v1949, %v1952
    %vm1954 = vweird.f32 %v1901
    %vm1955 = vweird.f32 %v1949
    %vm1956 = vmor %vm1954, %vm1955
    %v1957 = vsel %vm1956, %v1949, %v1953
    %v1958 = vand.u32 2147483647, %v1901
    %vm1959 = vcmp.eq.f32.partialorder %v1958, 8.507059e+37
    %v1960 = vand.u32 %v1901, 2147483648
    %v1961 = vor.u32 1.1754944e-38, %v1960
    %v1962 = vsel %vm1959, %v1961, %v1957
    %v1963 = vmul.f32 1.0, %v1962
    %v1964 = vrcp.pop %v1902
    %v1965 = vmul.f32 %v1902, %v1964
    %v1966 = vsub.f32 1.0, %v1965
    %v1967 = vmul.f32 %v1964, %v1966
    %v1968 = vadd.f32 %v1964, %v1967
    %vm1969 = vweird.f32 %v1902
    %vm1970 = vweird.f32 %v1964
    %vm1971 = vmor %vm1969, %vm1970
    %v1972 = vsel %vm1971, %v1964, %v1968
    %v1973 = vand.u32 2147483647, %v1902
    %vm1974 = vcmp.eq.f32.partialorder %v1973, 8.507059e+37
    %v1975 = vand.u32 %v1902, 2147483648
    %v1976 = vor.u32 1.1754944e-38, %v1975
    %v1977 = vsel %vm1974, %v1976, %v1972
    %v1978 = vmul.f32 1.0, %v1977
    %v1979 = vrcp.pop %v1903
    %v1980 = vmul.f32 %v1903, %v1979
    %v1981 = vsub.f32 1.0, %v1980
    %v1982 = vmul.f32 %v1979, %v1981
    %v1983 = vadd.f32 %v1979, %v1982
    %vm1984 = vweird.f32 %v1903
    %vm1985 = vweird.f32 %v1979
    %vm1986 = vmor %vm1984, %vm1985
    %v1987 = vsel %vm1986, %v1979, %v1983
    %v1988 = vand.u32 2147483647, %v1903
    %vm1989 = vcmp.eq.f32.partialorder %v1988, 8.507059e+37
    %v1990 = vand.u32 %v1903, 2147483648
    %v1991 = vor.u32 1.1754944e-38, %v1990
    %v1992 = vsel %vm1989, %v1991, %v1987
    %v1993 = vmul.f32 1.0, %v1992
    %v1994 = vtanh.pop %v1875
    %v1995 = vtanh.pop %v1879
    %v1996 = vmul.f32 %v1933, %v1562
    %v1997 = vmul.f32 %v1978, %v1563
    %v1998 = vmul.f32 %v1918, %v1994
    %v1999 = vmul.f32 %v1963, %v1995
    %v2000 = vadd.f32 %v1996, %v1998
    %v2001 = vadd.f32 %v1997, %v1999
    %v2002 = vtanh.pop %v2000
    %v2003 = vtanh.pop %v2001
    %v2004 = vmul.f32 %v1948, %v2002
    %v2005 = vmul.f32 %v1993, %v2003
    %v2006 = vpack.c.bf16 %v2005, %v2004
    %v2007 = vpack.c.bf16 %v1815, %v1814
    %2008 = vmatpush.bf16.msra.mxu0 %v926
    %2009 = vmatpush.bf16.msra.mxu0 %v922
    %2010 = vmatpush.bf16.msra.mxu0 %v918
    %2011 = vmatpush.bf16.msra.mxu0 %v914
    %2012 = vmatpush.bf16.msra.mxu0 %v910
    %2013 = vmatpush.bf16.msra.mxu0 %v906
    %2014 = vmatpush.bf16.msra.mxu0 %v902
    %2015 = vmatpush.bf16.msra.mxu0 %v898
    %2016 = vmatmul.bf16.gmra.mxu0 %v2007
    %v2017 = vpop.f32.mrf.mxu0
    %v2018 = vadd.f32 0.0, %v2017
    %v2019 = vpop.f32.mrf.mxu0
    %v2020 = vadd.f32 0.0, %v2019
    %2021 = vdwg.mxu0
    %2022 = vmatpush.bf16.msra.mxu0 %v927
    %2023 = vmatpush.bf16.msra.mxu0 %v923
    %2024 = vmatpush.bf16.msra.mxu0 %v919
    %2025 = vmatpush.bf16.msra.mxu0 %v915
    %2026 = vmatpush.bf16.msra.mxu0 %v911
    %2027 = vmatpush.bf16.msra.mxu0 %v907
    %2028 = vmatpush.bf16.msra.mxu0 %v903
    %2029 = vmatpush.bf16.msra.mxu0 %v899
    %2030 = vmatmul.bf16.gmra.mxu0 %v2007
    %v2031 = vpop.f32.mrf.mxu0
    %v2032 = vadd.f32 0.0, %v2031
    %v2033 = vpop.f32.mrf.mxu0
    %v2034 = vadd.f32 0.0, %v2033
    %2035 = vdwg.mxu0
    %2036 = vmatpush.bf16.msra.mxu0 %v928
    %2037 = vmatpush.bf16.msra.mxu0 %v924
    %2038 = vmatpush.bf16.msra.mxu0 %v920
    %2039 = vmatpush.bf16.msra.mxu0 %v916
    %2040 = vmatpush.bf16.msra.mxu0 %v912
    %2041 = vmatpush.bf16.msra.mxu0 %v908
    %2042 = vmatpush.bf16.msra.mxu0 %v904
    %2043 = vmatpush.bf16.msra.mxu0 %v900
    %2044 = vmatmul.bf16.gmra.mxu0 %v2007
    %v2045 = vpop.f32.mrf.mxu0
    %v2046 = vadd.f32 0.0, %v2045
    %v2047 = vpop.f32.mrf.mxu0
    %v2048 = vadd.f32 0.0, %v2047
    %2049 = vdwg.mxu0
    %2050 = vmatpush.bf16.msra.mxu0 %v929
    %2051 = vmatpush.bf16.msra.mxu0 %v925
    %2052 = vmatpush.bf16.msra.mxu0 %v921
    %2053 = vmatpush.bf16.msra.mxu0 %v917
    %2054 = vmatpush.bf16.msra.mxu0 %v913
    %2055 = vmatpush.bf16.msra.mxu0 %v909
    %2056 = vmatpush.bf16.msra.mxu0 %v905
    %2057 = vmatpush.bf16.msra.mxu0 %v901
    %2058 = vmatmul.bf16.gmra.mxu0 %v2007
    %v2059 = vpop.f32.mrf.mxu0
    %v2060 = vadd.f32 0.0, %v2059
    %v2061 = vpop.f32.mrf.mxu0
    %v2062 = vadd.f32 0.0, %v2061
    %2063 = vdwg.mxu0
    %2064 = vmatpush.bf16.msra.mxu0 %v1142
    %2065 = vmatpush.bf16.msra.mxu0 %v1138
    %2066 = vmatpush.bf16.msra.mxu0 %v1134
    %2067 = vmatpush.bf16.msra.mxu0 %v1130
    %2068 = vmatpush.bf16.msra.mxu0 %v1126
    %2069 = vmatpush.bf16.msra.mxu0 %v1122
    %2070 = vmatpush.bf16.msra.mxu0 %v1118
    %2071 = vmatpush.bf16.msra.mxu0 %v1114
    %2072 = vmatmul.bf16.gmra.mxu0 %v2006
    %v2073 = vpop.f32.mrf.mxu0
    %v2074 = vadd.f32 %v2018, %v2073
    %v2075 = vpop.f32.mrf.mxu0
    %v2076 = vadd.f32 %v2020, %v2075
    %2077 = vdwg.mxu0
    %2078 = vmatpush.bf16.msra.mxu0 %v1143
    %2079 = vmatpush.bf16.msra.mxu0 %v1139
    %2080 = vmatpush.bf16.msra.mxu0 %v1135
    %2081 = vmatpush.bf16.msra.mxu0 %v1131
    %2082 = vmatpush.bf16.msra.mxu0 %v1127
    %2083 = vmatpush.bf16.msra.mxu0 %v1123
    %2084 = vmatpush.bf16.msra.mxu0 %v1119
    %2085 = vmatpush.bf16.msra.mxu0 %v1115
    %2086 = vmatmul.bf16.gmra.mxu0 %v2006
    %v2087 = vpop.f32.mrf.mxu0
    %v2088 = vadd.f32 %v2032, %v2087
    %v2089 = vpop.f32.mrf.mxu0
    %v2090 = vadd.f32 %v2034, %v2089
    %2091 = vdwg.mxu0
    %2092 = vmatpush.bf16.msra.mxu0 %v1144
    %2093 = vmatpush.bf16.msra.mxu0 %v1140
    %2094 = vmatpush.bf16.msra.mxu0 %v1136
    %2095 = vmatpush.bf16.msra.mxu0 %v1132
    %2096 = vmatpush.bf16.msra.mxu0 %v1128
    %2097 = vmatpush.bf16.msra.mxu0 %v1124
    %2098 = vmatpush.bf16.msra.mxu0 %v1120
    %2099 = vmatpush.bf16.msra.mxu0 %v1116
    %2100 = vmatmul.bf16.gmra.mxu0 %v2006
    %v2101 = vpop.f32.mrf.mxu0
    %v2102 = vadd.f32 %v2046, %v2101
    %v2103 = vpop.f32.mrf.mxu0
    %v2104 = vadd.f32 %v2048, %v2103
    %2105 = vdwg.mxu0
    %2106 = vmatpush.bf16.msra.mxu0 %v1145
    %2107 = vmatpush.bf16.msra.mxu0 %v1141
    %2108 = vmatpush.bf16.msra.mxu0 %v1137
    %2109 = vmatpush.bf16.msra.mxu0 %v1133
    %2110 = vmatpush.bf16.msra.mxu0 %v1129
    %2111 = vmatpush.bf16.msra.mxu0 %v1125
    %2112 = vmatpush.bf16.msra.mxu0 %v1121
    %2113 = vmatpush.bf16.msra.mxu0 %v1117
    %2114 = vmatmul.bf16.gmra.mxu0 %v2006
    %v2115 = vpop.f32.mrf.mxu0
    %v2116 = vadd.f32 %v2060, %v2115
    %v2117 = vpop.f32.mrf.mxu0
    %v2118 = vadd.f32 %v2062, %v2117
    %2119 = vdwg.mxu0
    %v2120 = vadd.f32 %v2074, %v1236
    %v2121 = vadd.f32 %v2088, %v1237
    %v2122 = vadd.f32 %v2102, %v1238
    %v2123 = vadd.f32 %v2116, %v1239
    %v2124 = vadd.f32 %v2076, %v1236
    %v2125 = vadd.f32 %v2090, %v1237
    %v2126 = vadd.f32 %v2104, %v1238
    %v2127 = vadd.f32 %v2118, %v1239
    %v2128 = vxor.u32 %v2120, 2147483648
    %v2129 = vxor.u32 %v2121, 2147483648
    %v2130 = vxor.u32 %v2122, 2147483648
    %v2131 = vxor.u32 %v2124, 2147483648
    %v2132 = vxor.u32 %v2125, 2147483648
    %v2133 = vxor.u32 %v2126, 2147483648
    %v2134 = vmul.f32 %v2128, 1.442695
    %v2135 = vpow.pop %v2134
    %v2136 = vmul.f32 %v2129, 1.442695
    %v2137 = vpow.pop %v2136
    %v2138 = vmul.f32 %v2130, 1.442695
    %v2139 = vpow.pop %v2138
    %v2140 = vmul.f32 %v2131, 1.442695
    %v2141 = vpow.pop %v2140
    %v2142 = vmul.f32 %v2132, 1.442695
    %v2143 = vpow.pop %v2142
    %v2144 = vmul.f32 %v2133, 1.442695
    %v2145 = vpow.pop %v2144
    %v2146 = vadd.f32 %v2135, 1.0
    %v2147 = vadd.f32 %v2137, 1.0
    %v2148 = vadd.f32 %v2139, 1.0
    %v2149 = vadd.f32 %v2141, 1.0
    %v2150 = vadd.f32 %v2143, 1.0
    %v2151 = vadd.f32 %v2145, 1.0
    %v2152 = vrcp.pop %v2146
    %v2153 = vmul.f32 %v2146, %v2152
    %v2154 = vsub.f32 1.0, %v2153
    %v2155 = vmul.f32 %v2152, %v2154
    %v2156 = vadd.f32 %v2152, %v2155
    %vm2157 = vweird.f32 %v2146
    %vm2158 = vweird.f32 %v2152
    %vm2159 = vmor %vm2157, %vm2158
    %v2160 = vsel %vm2159, %v2152, %v2156
    %v2161 = vand.u32 2147483647, %v2146
    %vm2162 = vcmp.eq.f32.partialorder %v2161, 8.507059e+37
    %v2163 = vand.u32 %v2146, 2147483648
    %v2164 = vor.u32 1.1754944e-38, %v2163
    %v2165 = vsel %vm2162, %v2164, %v2160
    %v2166 = vmul.f32 1.0, %v2165
    %v2167 = vrcp.pop %v2147
    %v2168 = vmul.f32 %v2147, %v2167
    %v2169 = vsub.f32 1.0, %v2168
    %v2170 = vmul.f32 %v2167, %v2169
    %v2171 = vadd.f32 %v2167, %v2170
    %vm2172 = vweird.f32 %v2147
    %vm2173 = vweird.f32 %v2167
    %vm2174 = vmor %vm2172, %vm2173
    %v2175 = vsel %vm2174, %v2167, %v2171
    %v2176 = vand.u32 2147483647, %v2147
    %vm2177 = vcmp.eq.f32.partialorder %v2176, 8.507059e+37
    %v2178 = vand.u32 %v2147, 2147483648
    %v2179 = vor.u32 1.1754944e-38, %v2178
    %v2180 = vsel %vm2177, %v2179, %v2175
    %v2181 = vmul.f32 1.0, %v2180
    %v2182 = vrcp.pop %v2148
    %v2183 = vmul.f32 %v2148, %v2182
    %v2184 = vsub.f32 1.0, %v2183
    %v2185 = vmul.f32 %v2182, %v2184
    %v2186 = vadd.f32 %v2182, %v2185
    %vm2187 = vweird.f32 %v2148
    %vm2188 = vweird.f32 %v2182
    %vm2189 = vmor %vm2187, %vm2188
    %v2190 = vsel %vm2189, %v2182, %v2186
    %v2191 = vand.u32 2147483647, %v2148
    %vm2192 = vcmp.eq.f32.partialorder %v2191, 8.507059e+37
    %v2193 = vand.u32 %v2148, 2147483648
    %v2194 = vor.u32 1.1754944e-38, %v2193
    %v2195 = vsel %vm2192, %v2194, %v2190
    %v2196 = vmul.f32 1.0, %v2195
    %v2197 = vrcp.pop %v2149
    %v2198 = vmul.f32 %v2149, %v2197
    %v2199 = vsub.f32 1.0, %v2198
    %v2200 = vmul.f32 %v2197, %v2199
    %v2201 = vadd.f32 %v2197, %v2200
    %vm2202 = vweird.f32 %v2149
    %vm2203 = vweird.f32 %v2197
    %vm2204 = vmor %vm2202, %vm2203
    %v2205 = vsel %vm2204, %v2197, %v2201
    %v2206 = vand.u32 2147483647, %v2149
    %vm2207 = vcmp.eq.f32.partialorder %v2206, 8.507059e+37
    %v2208 = vand.u32 %v2149, 2147483648
    %v2209 = vor.u32 1.1754944e-38, %v2208
    %v2210 = vsel %vm2207, %v2209, %v2205
    %v2211 = vmul.f32 1.0, %v2210
    %v2212 = vrcp.pop %v2150
    %v2213 = vmul.f32 %v2150, %v2212
    %v2214 = vsub.f32 1.0, %v2213
    %v2215 = vmul.f32 %v2212, %v2214
    %v2216 = vadd.f32 %v2212, %v2215
    %vm2217 = vweird.f32 %v2150
    %vm2218 = vweird.f32 %v2212
    %vm2219 = vmor %vm2217, %vm2218
    %v2220 = vsel %vm2219, %v2212, %v2216
    %v2221 = vand.u32 2147483647, %v2150
    %vm2222 = vcmp.eq.f32.partialorder %v2221, 8.507059e+37
    %v2223 = vand.u32 %v2150, 2147483648
    %v2224 = vor.u32 1.1754944e-38, %v2223
    %v2225 = vsel %vm2222, %v2224, %v2220
    %v2226 = vmul.f32 1.0, %v2225
    %v2227 = vrcp.pop %v2151
    %v2228 = vmul.f32 %v2151, %v2227
    %v2229 = vsub.f32 1.0, %v2228
    %v2230 = vmul.f32 %v2227, %v2229
    %v2231 = vadd.f32 %v2227, %v2230
    %vm2232 = vweird.f32 %v2151
    %vm2233 = vweird.f32 %v2227
    %vm2234 = vmor %vm2232, %vm2233
    %v2235 = vsel %vm2234, %v2227, %v2231
    %v2236 = vand.u32 2147483647, %v2151
    %vm2237 = vcmp.eq.f32.partialorder %v2236, 8.507059e+37
    %v2238 = vand.u32 %v2151, 2147483648
    %v2239 = vor.u32 1.1754944e-38, %v2238
    %v2240 = vsel %vm2237, %v2239, %v2235
    %v2241 = vmul.f32 1.0, %v2240
    %v2242 = vtanh.pop %v2123
    %v2243 = vtanh.pop %v2127
    %v2244 = vmul.f32 %v2181, %v1810
    %v2245 = vmul.f32 %v2226, %v1811
    %v2246 = vmul.f32 %v2166, %v2242
    %v2247 = vmul.f32 %v2211, %v2243
    %v2248 = vadd.f32 %v2244, %v2246
    %v2249 = vadd.f32 %v2245, %v2247
    %v2250 = vtanh.pop %v2248
    %v2251 = vtanh.pop %v2249
    %v2252 = vmul.f32 %v2196, %v2250
    %v2253 = vmul.f32 %v2241, %v2251
    %2254 = vmatpush.bf16.msra.mxu0 %v511
    %2255 = vmatpush.bf16.msra.mxu0 %v507
    %2256 = vmatpush.bf16.msra.mxu0 %v503
    %2257 = vmatpush.bf16.msra.mxu0 %v499
    %2258 = vmatpush.bf16.msra.mxu0 %v495
    %2259 = vmatpush.bf16.msra.mxu0 %v491
    %2260 = vmatpush.bf16.msra.mxu0 %v487
    %2261 = vmatpush.bf16.msra.mxu0 %v483
    %2262 = vmatmul.bf16.gmra.mxu0 %v2006
    %v2263 = vpop.f32.mrf.mxu0
    %v2264 = vadd.f32 0.0, %v2263
    %v2265 = vpop.f32.mrf.mxu0
    %v2266 = vadd.f32 0.0, %v2265
    %2267 = vdwg.mxu0
    %2268 = vmatpush.bf16.msra.mxu0 %v512
    %2269 = vmatpush.bf16.msra.mxu0 %v508
    %2270 = vmatpush.bf16.msra.mxu0 %v504
    %2271 = vmatpush.bf16.msra.mxu0 %v500
    %2272 = vmatpush.bf16.msra.mxu0 %v496
    %2273 = vmatpush.bf16.msra.mxu0 %v492
    %2274 = vmatpush.bf16.msra.mxu0 %v488
    %2275 = vmatpush.bf16.msra.mxu0 %v484
    %2276 = vmatmul.bf16.gmra.mxu0 %v2006
    %v2277 = vpop.f32.mrf.mxu0
    %v2278 = vadd.f32 0.0, %v2277
    %v2279 = vpop.f32.mrf.mxu0
    %v2280 = vadd.f32 0.0, %v2279
    %2281 = vdwg.mxu0
    %2282 = vmatpush.bf16.msra.mxu0 %v513
    %2283 = vmatpush.bf16.msra.mxu0 %v509
    %2284 = vmatpush.bf16.msra.mxu0 %v505
    %2285 = vmatpush.bf16.msra.mxu0 %v501
    %2286 = vmatpush.bf16.msra.mxu0 %v497
    %2287 = vmatpush.bf16.msra.mxu0 %v493
    %2288 = vmatpush.bf16.msra.mxu0 %v489
    %2289 = vmatpush.bf16.msra.mxu0 %v485
    %2290 = vmatmul.bf16.gmra.mxu0 %v2006
    %v2291 = vpop.f32.mrf.mxu0
    %v2292 = vadd.f32 0.0, %v2291
    %v2293 = vpop.f32.mrf.mxu0
    %v2294 = vadd.f32 0.0, %v2293
    %2295 = vdwg.mxu0
    %2296 = vmatpush.bf16.msra.mxu0 %v514
    %2297 = vmatpush.bf16.msra.mxu0 %v510
    %2298 = vmatpush.bf16.msra.mxu0 %v506
    %2299 = vmatpush.bf16.msra.mxu0 %v502
    %2300 = vmatpush.bf16.msra.mxu0 %v498
    %2301 = vmatpush.bf16.msra.mxu0 %v494
    %2302 = vmatpush.bf16.msra.mxu0 %v490
    %2303 = vmatpush.bf16.msra.mxu0 %v486
    %2304 = vmatmul.bf16.gmra.mxu0 %v2006
    %v2305 = vpop.f32.mrf.mxu0
    %v2306 = vadd.f32 0.0, %v2305
    %v2307 = vpop.f32.mrf.mxu0
    %v2308 = vadd.f32 0.0, %v2307
    %2309 = vdwg.mxu0
    %v2310 = vadd.f32 %v184, %v2264
    %v2311 = vadd.f32 %v233, %v2278
    %v2312 = vadd.f32 %v282, %v2292
    %v2313 = vadd.f32 %v331, %v2306
    %v2314 = vadd.f32 %v186, %v2266
    %v2315 = vadd.f32 %v235, %v2280
    %v2316 = vadd.f32 %v284, %v2294
    %v2317 = vadd.f32 %v333, %v2308
    %v2318 = vxor.u32 %v2310, 2147483648
    %v2319 = vxor.u32 %v2311, 2147483648
    %v2320 = vxor.u32 %v2312, 2147483648
    %v2321 = vxor.u32 %v2314, 2147483648
    %v2322 = vxor.u32 %v2315, 2147483648
    %v2323 = vxor.u32 %v2316, 2147483648
    %v2324 = vmul.f32 %v2318, 1.442695
    %v2325 = vpow.pop %v2324
    %v2326 = vmul.f32 %v2319, 1.442695
    %v2327 = vpow.pop %v2326
    %v2328 = vmul.f32 %v2320, 1.442695
    %v2329 = vpow.pop %v2328
    %v2330 = vmul.f32 %v2321, 1.442695
    %v2331 = vpow.pop %v2330
    %v2332 = vmul.f32 %v2322, 1.442695
    %v2333 = vpow.pop %v2332
    %v2334 = vmul.f32 %v2323, 1.442695
    %v2335 = vpow.pop %v2334
    %v2336 = vadd.f32 %v2325, 1.0
    %v2337 = vadd.f32 %v2327, 1.0
    %v2338 = vadd.f32 %v2329, 1.0
    %v2339 = vadd.f32 %v2331, 1.0
    %v2340 = vadd.f32 %v2333, 1.0
    %v2341 = vadd.f32 %v2335, 1.0
    %v2342 = vrcp.pop %v2336
    %v2343 = vmul.f32 %v2336, %v2342
    %v2344 = vsub.f32 1.0, %v2343
    %v2345 = vmul.f32 %v2342, %v2344
    %v2346 = vadd.f32 %v2342, %v2345
    %vm2347 = vweird.f32 %v2336
    %vm2348 = vweird.f32 %v2342
    %vm2349 = vmor %vm2347, %vm2348
    %v2350 = vsel %vm2349, %v2342, %v2346
    %v2351 = vand.u32 2147483647, %v2336
    %vm2352 = vcmp.eq.f32.partialorder %v2351, 8.507059e+37
    %v2353 = vand.u32 %v2336, 2147483648
    %v2354 = vor.u32 1.1754944e-38, %v2353
    %v2355 = vsel %vm2352, %v2354, %v2350
    %v2356 = vmul.f32 1.0, %v2355
    %v2357 = vrcp.pop %v2337
    %v2358 = vmul.f32 %v2337, %v2357
    %v2359 = vsub.f32 1.0, %v2358
    %v2360 = vmul.f32 %v2357, %v2359
    %v2361 = vadd.f32 %v2357, %v2360
    %vm2362 = vweird.f32 %v2337
    %vm2363 = vweird.f32 %v2357
    %vm2364 = vmor %vm2362, %vm2363
    %v2365 = vsel %vm2364, %v2357, %v2361
    %v2366 = vand.u32 2147483647, %v2337
    %vm2367 = vcmp.eq.f32.partialorder %v2366, 8.507059e+37
    %v2368 = vand.u32 %v2337, 2147483648
    %v2369 = vor.u32 1.1754944e-38, %v2368
    %v2370 = vsel %vm2367, %v2369, %v2365
    %v2371 = vmul.f32 1.0, %v2370
    %v2372 = vrcp.pop %v2338
    %v2373 = vmul.f32 %v2338, %v2372
    %v2374 = vsub.f32 1.0, %v2373
    %v2375 = vmul.f32 %v2372, %v2374
    %v2376 = vadd.f32 %v2372, %v2375
    %vm2377 = vweird.f32 %v2338
    %vm2378 = vweird.f32 %v2372
    %vm2379 = vmor %vm2377, %vm2378
    %v2380 = vsel %vm2379, %v2372, %v2376
    %v2381 = vand.u32 2147483647, %v2338
    %vm2382 = vcmp.eq.f32.partialorder %v2381, 8.507059e+37
    %v2383 = vand.u32 %v2338, 2147483648
    %v2384 = vor.u32 1.1754944e-38, %v2383
    %v2385 = vsel %vm2382, %v2384, %v2380
    %v2386 = vmul.f32 1.0, %v2385
    %v2387 = vrcp.pop %v2339
    %v2388 = vmul.f32 %v2339, %v2387
    %v2389 = vsub.f32 1.0, %v2388
    %v2390 = vmul.f32 %v2387, %v2389
    %v2391 = vadd.f32 %v2387, %v2390
    %vm2392 = vweird.f32 %v2339
    %vm2393 = vweird.f32 %v2387
    %vm2394 = vmor %vm2392, %vm2393
    %v2395 = vsel %vm2394, %v2387, %v2391
    %v2396 = vand.u32 2147483647, %v2339
    %vm2397 = vcmp.eq.f32.partialorder %v2396, 8.507059e+37
    %v2398 = vand.u32 %v2339, 2147483648
    %v2399 = vor.u32 1.1754944e-38, %v2398
    %v2400 = vsel %vm2397, %v2399, %v2395
    %v2401 = vmul.f32 1.0, %v2400
    %v2402 = vrcp.pop %v2340
    %v2403 = vmul.f32 %v2340, %v2402
    %v2404 = vsub.f32 1.0, %v2403
    %v2405 = vmul.f32 %v2402, %v2404
    %v2406 = vadd.f32 %v2402, %v2405
    %vm2407 = vweird.f32 %v2340
    %vm2408 = vweird.f32 %v2402
    %vm2409 = vmor %vm2407, %vm2408
    %v2410 = vsel %vm2409, %v2402, %v2406
    %v2411 = vand.u32 2147483647, %v2340
    %vm2412 = vcmp.eq.f32.partialorder %v2411, 8.507059e+37
    %v2413 = vand.u32 %v2340, 2147483648
    %v2414 = vor.u32 1.1754944e-38, %v2413
    %v2415 = vsel %vm2412, %v2414, %v2410
    %v2416 = vmul.f32 1.0, %v2415
    %v2417 = vrcp.pop %v2341
    %v2418 = vmul.f32 %v2341, %v2417
    %v2419 = vsub.f32 1.0, %v2418
    %v2420 = vmul.f32 %v2417, %v2419
    %v2421 = vadd.f32 %v2417, %v2420
    %vm2422 = vweird.f32 %v2341
    %vm2423 = vweird.f32 %v2417
    %vm2424 = vmor %vm2422, %vm2423
    %v2425 = vsel %vm2424, %v2417, %v2421
    %v2426 = vand.u32 2147483647, %v2341
    %vm2427 = vcmp.eq.f32.partialorder %v2426, 8.507059e+37
    %v2428 = vand.u32 %v2341, 2147483648
    %v2429 = vor.u32 1.1754944e-38, %v2428
    %v2430 = vsel %vm2427, %v2429, %v2425
    %v2431 = vmul.f32 1.0, %v2430
    %v2432 = vtanh.pop %v2313
    %v2433 = vtanh.pop %v2317
    %v2434 = vmul.f32 %v2371, %v2000
    %v2435 = vmul.f32 %v2416, %v2001
    %v2436 = vmul.f32 %v2356, %v2432
    %v2437 = vmul.f32 %v2401, %v2433
    %v2438 = vadd.f32 %v2434, %v2436
    %v2439 = vadd.f32 %v2435, %v2437
    %v2440 = vtanh.pop %v2438
    %v2441 = vtanh.pop %v2439
    %v2442 = vmul.f32 %v2386, %v2440
    %v2443 = vmul.f32 %v2431, %v2441
    %v2444 = vpack.c.bf16 %v2443, %v2442
    %v2445 = vpack.c.bf16 %v2253, %v2252
    %2446 = vmatpush.bf16.msra.mxu0 %v926
    %2447 = vmatpush.bf16.msra.mxu0 %v922
    %2448 = vmatpush.bf16.msra.mxu0 %v918
    %2449 = vmatpush.bf16.msra.mxu0 %v914
    %2450 = vmatpush.bf16.msra.mxu0 %v910
    %2451 = vmatpush.bf16.msra.mxu0 %v906
    %2452 = vmatpush.bf16.msra.mxu0 %v902
    %2453 = vmatpush.bf16.msra.mxu0 %v898
    %2454 = vmatmul.bf16.gmra.mxu0 %v2445
    %v2455 = vpop.f32.mrf.mxu0
    %v2456 = vadd.f32 0.0, %v2455
    %v2457 = vpop.f32.mrf.mxu0
    %v2458 = vadd.f32 0.0, %v2457
    %2459 = vdwg.mxu0
    %2460 = vmatpush.bf16.msra.mxu0 %v927
    %2461 = vmatpush.bf16.msra.mxu0 %v923
    %2462 = vmatpush.bf16.msra.mxu0 %v919
    %2463 = vmatpush.bf16.msra.mxu0 %v915
    %2464 = vmatpush.bf16.msra.mxu0 %v911
    %2465 = vmatpush.bf16.msra.mxu0 %v907
    %2466 = vmatpush.bf16.msra.mxu0 %v903
    %2467 = vmatpush.bf16.msra.mxu0 %v899
    %2468 = vmatmul.bf16.gmra.mxu0 %v2445
    %v2469 = vpop.f32.mrf.mxu0
    %v2470 = vadd.f32 0.0, %v2469
    %v2471 = vpop.f32.mrf.mxu0
    %v2472 = vadd.f32 0.0, %v2471
    %2473 = vdwg.mxu0
    %2474 = vmatpush.bf16.msra.mxu0 %v928
    %2475 = vmatpush.bf16.msra.mxu0 %v924
    %2476 = vmatpush.bf16.msra.mxu0 %v920
    %2477 = vmatpush.bf16.msra.mxu0 %v916
    %2478 = vmatpush.bf16.msra.mxu0 %v912
    %2479 = vmatpush.bf16.msra.mxu0 %v908
    %2480 = vmatpush.bf16.msra.mxu0 %v904
    %2481 = vmatpush.bf16.msra.mxu0 %v900
    %2482 = vmatmul.bf16.gmra.mxu0 %v2445
    %v2483 = vpop.f32.mrf.mxu0
    %v2484 = vadd.f32 0.0, %v2483
    %v2485 = vpop.f32.mrf.mxu0
    %v2486 = vadd.f32 0.0, %v2485
    %2487 = vdwg.mxu0
    %2488 = vmatpush.bf16.msra.mxu0 %v929
    %2489 = vmatpush.bf16.msra.mxu0 %v925
    %2490 = vmatpush.bf16.msra.mxu0 %v921
    %2491 = vmatpush.bf16.msra.mxu0 %v917
    %2492 = vmatpush.bf16.msra.mxu0 %v913
    %2493 = vmatpush.bf16.msra.mxu0 %v909
    %2494 = vmatpush.bf16.msra.mxu0 %v905
    %2495 = vmatpush.bf16.msra.mxu0 %v901
    %2496 = vmatmul.bf16.gmra.mxu0 %v2445
    %v2497 = vpop.f32.mrf.mxu0
    %v2498 = vadd.f32 0.0, %v2497
    %v2499 = vpop.f32.mrf.mxu0
    %v2500 = vadd.f32 0.0, %v2499
    %2501 = vdwg.mxu0
    %2502 = vmatpush.bf16.msra.mxu0 %v1142
    %2503 = vmatpush.bf16.msra.mxu0 %v1138
    %2504 = vmatpush.bf16.msra.mxu0 %v1134
    %2505 = vmatpush.bf16.msra.mxu0 %v1130
    %2506 = vmatpush.bf16.msra.mxu0 %v1126
    %2507 = vmatpush.bf16.msra.mxu0 %v1122
    %2508 = vmatpush.bf16.msra.mxu0 %v1118
    %2509 = vmatpush.bf16.msra.mxu0 %v1114
    %2510 = vmatmul.bf16.gmra.mxu0 %v2444
    %v2511 = vpop.f32.mrf.mxu0
    %v2512 = vadd.f32 %v2456, %v2511
    %v2513 = vpop.f32.mrf.mxu0
    %v2514 = vadd.f32 %v2458, %v2513
    %2515 = vdwg.mxu0
    %2516 = vmatpush.bf16.msra.mxu0 %v1143
    %2517 = vmatpush.bf16.msra.mxu0 %v1139
    %2518 = vmatpush.bf16.msra.mxu0 %v1135
    %2519 = vmatpush.bf16.msra.mxu0 %v1131
    %2520 = vmatpush.bf16.msra.mxu0 %v1127
    %2521 = vmatpush.bf16.msra.mxu0 %v1123
    %2522 = vmatpush.bf16.msra.mxu0 %v1119
    %2523 = vmatpush.bf16.msra.mxu0 %v1115
    %2524 = vmatmul.bf16.gmra.mxu0 %v2444
    %v2525 = vpop.f32.mrf.mxu0
    %v2526 = vadd.f32 %v2470, %v2525
    %v2527 = vpop.f32.mrf.mxu0
    %v2528 = vadd.f32 %v2472, %v2527
    %2529 = vdwg.mxu0
    %2530 = vmatpush.bf16.msra.mxu0 %v1144
    %2531 = vmatpush.bf16.msra.mxu0 %v1140
    %2532 = vmatpush.bf16.msra.mxu0 %v1136
    %2533 = vmatpush.bf16.msra.mxu0 %v1132
    %2534 = vmatpush.bf16.msra.mxu0 %v1128
    %2535 = vmatpush.bf16.msra.mxu0 %v1124
    %2536 = vmatpush.bf16.msra.mxu0 %v1120
    %2537 = vmatpush.bf16.msra.mxu0 %v1116
    %2538 = vmatmul.bf16.gmra.mxu0 %v2444
    %v2539 = vpop.f32.mrf.mxu0
    %v2540 = vadd.f32 %v2484, %v2539
    %v2541 = vpop.f32.mrf.mxu0
    %v2542 = vadd.f32 %v2486, %v2541
    %2543 = vdwg.mxu0
    %2544 = vmatpush.bf16.msra.mxu0 %v1145
    %2545 = vmatpush.bf16.msra.mxu0 %v1141
    %2546 = vmatpush.bf16.msra.mxu0 %v1137
    %2547 = vmatpush.bf16.msra.mxu0 %v1133
    %2548 = vmatpush.bf16.msra.mxu0 %v1129
    %2549 = vmatpush.bf16.msra.mxu0 %v1125
    %2550 = vmatpush.bf16.msra.mxu0 %v1121
    %2551 = vmatpush.bf16.msra.mxu0 %v1117
    %2552 = vmatmul.bf16.gmra.mxu0 %v2444
    %v2553 = vpop.f32.mrf.mxu0
    %v2554 = vadd.f32 %v2498, %v2553
    %v2555 = vpop.f32.mrf.mxu0
    %v2556 = vadd.f32 %v2500, %v2555
    %2557 = vdwg.mxu0
    %v2558 = vadd.f32 %v2512, %v1236
    %v2559 = vadd.f32 %v2526, %v1237
    %v2560 = vadd.f32 %v2540, %v1238
    %v2561 = vadd.f32 %v2554, %v1239
    %v2562 = vadd.f32 %v2514, %v1236
    %v2563 = vadd.f32 %v2528, %v1237
    %v2564 = vadd.f32 %v2542, %v1238
    %v2565 = vadd.f32 %v2556, %v1239
    %v2566 = vxor.u32 %v2558, 2147483648
    %v2567 = vxor.u32 %v2559, 2147483648
    %v2568 = vxor.u32 %v2560, 2147483648
    %v2569 = vxor.u32 %v2562, 2147483648
    %v2570 = vxor.u32 %v2563, 2147483648
    %v2571 = vxor.u32 %v2564, 2147483648
    %v2572 = vmul.f32 %v2566, 1.442695
    %v2573 = vpow.pop %v2572
    %v2574 = vmul.f32 %v2567, 1.442695
    %v2575 = vpow.pop %v2574
    %v2576 = vmul.f32 %v2568, 1.442695
    %v2577 = vpow.pop %v2576
    %v2578 = vmul.f32 %v2569, 1.442695
    %v2579 = vpow.pop %v2578
    %v2580 = vmul.f32 %v2570, 1.442695
    %v2581 = vpow.pop %v2580
    %v2582 = vmul.f32 %v2571, 1.442695
    %v2583 = vpow.pop %v2582
    %v2584 = vadd.f32 %v2573, 1.0
    %v2585 = vadd.f32 %v2575, 1.0
    %v2586 = vadd.f32 %v2577, 1.0
    %v2587 = vadd.f32 %v2579, 1.0
    %v2588 = vadd.f32 %v2581, 1.0
    %v2589 = vadd.f32 %v2583, 1.0
    %v2590 = vrcp.pop %v2584
    %v2591 = vmul.f32 %v2584, %v2590
    %v2592 = vsub.f32 1.0, %v2591
    %v2593 = vmul.f32 %v2590, %v2592
    %v2594 = vadd.f32 %v2590, %v2593
    %vm2595 = vweird.f32 %v2584
    %vm2596 = vweird.f32 %v2590
    %vm2597 = vmor %vm2595, %vm2596
    %v2598 = vsel %vm2597, %v2590, %v2594
    %v2599 = vand.u32 2147483647, %v2584
    %vm2600 = vcmp.eq.f32.partialorder %v2599, 8.507059e+37
    %v2601 = vand.u32 %v2584, 2147483648
    %v2602 = vor.u32 1.1754944e-38, %v2601
    %v2603 = vsel %vm2600, %v2602, %v2598
    %v2604 = vmul.f32 1.0, %v2603
    %v2605 = vrcp.pop %v2585
    %v2606 = vmul.f32 %v2585, %v2605
    %v2607 = vsub.f32 1.0, %v2606
    %v2608 = vmul.f32 %v2605, %v2607
    %v2609 = vadd.f32 %v2605, %v2608
    %vm2610 = vweird.f32 %v2585
    %vm2611 = vweird.f32 %v2605
    %vm2612 = vmor %vm2610, %vm2611
    %v2613 = vsel %vm2612, %v2605, %v2609
    %v2614 = vand.u32 2147483647, %v2585
    %vm2615 = vcmp.eq.f32.partialorder %v2614, 8.507059e+37
    %v2616 = vand.u32 %v2585, 2147483648
    %v2617 = vor.u32 1.1754944e-38, %v2616
    %v2618 = vsel %vm2615, %v2617, %v2613
    %v2619 = vmul.f32 1.0, %v2618
    %v2620 = vrcp.pop %v2586
    %v2621 = vmul.f32 %v2586, %v2620
    %v2622 = vsub.f32 1.0, %v2621
    %v2623 = vmul.f32 %v2620, %v2622
    %v2624 = vadd.f32 %v2620, %v2623
    %vm2625 = vweird.f32 %v2586
    %vm2626 = vweird.f32 %v2620
    %vm2627 = vmor %vm2625, %vm2626
    %v2628 = vsel %vm2627, %v2620, %v2624
    %v2629 = vand.u32 2147483647, %v2586
    %vm2630 = vcmp.eq.f32.partialorder %v2629, 8.507059e+37
    %v2631 = vand.u32 %v2586, 2147483648
    %v2632 = vor.u32 1.1754944e-38, %v2631
    %v2633 = vsel %vm2630, %v2632, %v2628
    %v2634 = vmul.f32 1.0, %v2633
    %v2635 = vrcp.pop %v2587
    %v2636 = vmul.f32 %v2587, %v2635
    %v2637 = vsub.f32 1.0, %v2636
    %v2638 = vmul.f32 %v2635, %v2637
    %v2639 = vadd.f32 %v2635, %v2638
    %vm2640 = vweird.f32 %v2587
    %vm2641 = vweird.f32 %v2635
    %vm2642 = vmor %vm2640, %vm2641
    %v2643 = vsel %vm2642, %v2635, %v2639
    %v2644 = vand.u32 2147483647, %v2587
    %vm2645 = vcmp.eq.f32.partialorder %v2644, 8.507059e+37
    %v2646 = vand.u32 %v2587, 2147483648
    %v2647 = vor.u32 1.1754944e-38, %v2646
    %v2648 = vsel %vm2645, %v2647, %v2643
    %v2649 = vmul.f32 1.0, %v2648
    %v2650 = vrcp.pop %v2588
    %v2651 = vmul.f32 %v2588, %v2650
    %v2652 = vsub.f32 1.0, %v2651
    %v2653 = vmul.f32 %v2650, %v2652
    %v2654 = vadd.f32 %v2650, %v2653
    %vm2655 = vweird.f32 %v2588
    %vm2656 = vweird.f32 %v2650
    %vm2657 = vmor %vm2655, %vm2656
    %v2658 = vsel %vm2657, %v2650, %v2654
    %v2659 = vand.u32 2147483647, %v2588
    %vm2660 = vcmp.eq.f32.partialorder %v2659, 8.507059e+37
    %v2661 = vand.u32 %v2588, 2147483648
    %v2662 = vor.u32 1.1754944e-38, %v2661
    %v2663 = vsel %vm2660, %v2662, %v2658
    %v2664 = vmul.f32 1.0, %v2663
    %v2665 = vrcp.pop %v2589
    %v2666 = vmul.f32 %v2589, %v2665
    %v2667 = vsub.f32 1.0, %v2666
    %v2668 = vmul.f32 %v2665, %v2667
    %v2669 = vadd.f32 %v2665, %v2668
    %vm2670 = vweird.f32 %v2589
    %vm2671 = vweird.f32 %v2665
    %vm2672 = vmor %vm2670, %vm2671
    %v2673 = vsel %vm2672, %v2665, %v2669
    %v2674 = vand.u32 2147483647, %v2589
    %vm2675 = vcmp.eq.f32.partialorder %v2674, 8.507059e+37
    %v2676 = vand.u32 %v2589, 2147483648
    %v2677 = vor.u32 1.1754944e-38, %v2676
    %v2678 = vsel %vm2675, %v2677, %v2673
    %v2679 = vmul.f32 1.0, %v2678
    %v2680 = vtanh.pop %v2561
    %v2681 = vtanh.pop %v2565
    %v2682 = vmul.f32 %v2619, %v2248
    %v2683 = vmul.f32 %v2664, %v2249
    %v2684 = vmul.f32 %v2604, %v2680
    %v2685 = vmul.f32 %v2649, %v2681
    %v2686 = vadd.f32 %v2682, %v2684
    %v2687 = vadd.f32 %v2683, %v2685
    %v2688 = vtanh.pop %v2686
    %v2689 = vtanh.pop %v2687
    %v2690 = vmul.f32 %v2634, %v2688
    %v2691 = vmul.f32 %v2679, %v2689
    %2692 = vmatpush.bf16.msra.mxu0 %v511
    %2693 = vmatpush.bf16.msra.mxu0 %v507
    %2694 = vmatpush.bf16.msra.mxu0 %v503
    %2695 = vmatpush.bf16.msra.mxu0 %v499
    %2696 = vmatpush.bf16.msra.mxu0 %v495
    %2697 = vmatpush.bf16.msra.mxu0 %v491
    %2698 = vmatpush.bf16.msra.mxu0 %v487
    %2699 = vmatpush.bf16.msra.mxu0 %v483
    %2700 = vmatmul.bf16.gmra.mxu0 %v2444
    %v2701 = vpop.f32.mrf.mxu0
    %v2702 = vadd.f32 0.0, %v2701
    %v2703 = vpop.f32.mrf.mxu0
    %v2704 = vadd.f32 0.0, %v2703
    %2705 = vdwg.mxu0
    %2706 = vmatpush.bf16.msra.mxu0 %v512
    %2707 = vmatpush.bf16.msra.mxu0 %v508
    %2708 = vmatpush.bf16.msra.mxu0 %v504
    %2709 = vmatpush.bf16.msra.mxu0 %v500
    %2710 = vmatpush.bf16.msra.mxu0 %v496
    %2711 = vmatpush.bf16.msra.mxu0 %v492
    %2712 = vmatpush.bf16.msra.mxu0 %v488
    %2713 = vmatpush.bf16.msra.mxu0 %v484
    %2714 = vmatmul.bf16.gmra.mxu0 %v2444
    %v2715 = vpop.f32.mrf.mxu0
    %v2716 = vadd.f32 0.0, %v2715
    %v2717 = vpop.f32.mrf.mxu0
    %v2718 = vadd.f32 0.0, %v2717
    %2719 = vdwg.mxu0
    %2720 = vmatpush.bf16.msra.mxu0 %v513
    %2721 = vmatpush.bf16.msra.mxu0 %v509
    %2722 = vmatpush.bf16.msra.mxu0 %v505
    %2723 = vmatpush.bf16.msra.mxu0 %v501
    %2724 = vmatpush.bf16.msra.mxu0 %v497
    %2725 = vmatpush.bf16.msra.mxu0 %v493
    %2726 = vmatpush.bf16.msra.mxu0 %v489
    %2727 = vmatpush.bf16.msra.mxu0 %v485
    %2728 = vmatmul.bf16.gmra.mxu0 %v2444
    %v2729 = vpop.f32.mrf.mxu0
    %v2730 = vadd.f32 0.0, %v2729
    %v2731 = vpop.f32.mrf.mxu0
    %v2732 = vadd.f32 0.0, %v2731
    %2733 = vdwg.mxu0
    %2734 = vmatpush.bf16.msra.mxu0 %v514
    %2735 = vmatpush.bf16.msra.mxu0 %v510
    %2736 = vmatpush.bf16.msra.mxu0 %v506
    %2737 = vmatpush.bf16.msra.mxu0 %v502
    %2738 = vmatpush.bf16.msra.mxu0 %v498
    %2739 = vmatpush.bf16.msra.mxu0 %v494
    %2740 = vmatpush.bf16.msra.mxu0 %v490
    %2741 = vmatpush.bf16.msra.mxu0 %v486
    %2742 = vmatmul.bf16.gmra.mxu0 %v2444
    %v2743 = vpop.f32.mrf.mxu0
    %v2744 = vadd.f32 0.0, %v2743
    %v2745 = vpop.f32.mrf.mxu0
    %v2746 = vadd.f32 0.0, %v2745
    %2747 = vdwg.mxu0
    %v2748 = vadd.f32 %v189, %v2702
    %v2749 = vadd.f32 %v238, %v2716
    %v2750 = vadd.f32 %v287, %v2730
    %v2751 = vadd.f32 %v336, %v2744
    %v2752 = vadd.f32 %v191, %v2704
    %v2753 = vadd.f32 %v240, %v2718
    %v2754 = vadd.f32 %v289, %v2732
    %v2755 = vadd.f32 %v338, %v2746
    %v2756 = vxor.u32 %v2748, 2147483648
    %v2757 = vxor.u32 %v2749, 2147483648
    %v2758 = vxor.u32 %v2750, 2147483648
    %v2759 = vxor.u32 %v2752, 2147483648
    %v2760 = vxor.u32 %v2753, 2147483648
    %v2761 = vxor.u32 %v2754, 2147483648
    %v2762 = vmul.f32 %v2756, 1.442695
    %v2763 = vpow.pop %v2762
    %v2764 = vmul.f32 %v2757, 1.442695
    %v2765 = vpow.pop %v2764
    %v2766 = vmul.f32 %v2758, 1.442695
    %v2767 = vpow.pop %v2766
    %v2768 = vmul.f32 %v2759, 1.442695
    %v2769 = vpow.pop %v2768
    %v2770 = vmul.f32 %v2760, 1.442695
    %v2771 = vpow.pop %v2770
    %v2772 = vmul.f32 %v2761, 1.442695
    %v2773 = vpow.pop %v2772
    %v2774 = vadd.f32 %v2763, 1.0
    %v2775 = vadd.f32 %v2765, 1.0
    %v2776 = vadd.f32 %v2767, 1.0
    %v2777 = vadd.f32 %v2769, 1.0
    %v2778 = vadd.f32 %v2771, 1.0
    %v2779 = vadd.f32 %v2773, 1.0
    %v2780 = vrcp.pop %v2774
    %v2781 = vmul.f32 %v2774, %v2780
    %v2782 = vsub.f32 1.0, %v2781
    %v2783 = vmul.f32 %v2780, %v2782
    %v2784 = vadd.f32 %v2780, %v2783
    %vm2785 = vweird.f32 %v2774
    %vm2786 = vweird.f32 %v2780
    %vm2787 = vmor %vm2785, %vm2786
    %v2788 = vsel %vm2787, %v2780, %v2784
    %v2789 = vand.u32 2147483647, %v2774
    %vm2790 = vcmp.eq.f32.partialorder %v2789, 8.507059e+37
    %v2791 = vand.u32 %v2774, 2147483648
    %v2792 = vor.u32 1.1754944e-38, %v2791
    %v2793 = vsel %vm2790, %v2792, %v2788
    %v2794 = vmul.f32 1.0, %v2793
    %v2795 = vrcp.pop %v2775
    %v2796 = vmul.f32 %v2775, %v2795
    %v2797 = vsub.f32 1.0, %v2796
    %v2798 = vmul.f32 %v2795, %v2797
    %v2799 = vadd.f32 %v2795, %v2798
    %vm2800 = vweird.f32 %v2775
    %vm2801 = vweird.f32 %v2795
    %vm2802 = vmor %vm2800, %vm2801
    %v2803 = vsel %vm2802, %v2795, %v2799
    %v2804 = vand.u32 2147483647, %v2775
    %vm2805 = vcmp.eq.f32.partialorder %v2804, 8.507059e+37
    %v2806 = vand.u32 %v2775, 2147483648
    %v2807 = vor.u32 1.1754944e-38, %v2806
    %v2808 = vsel %vm2805, %v2807, %v2803
    %v2809 = vmul.f32 1.0, %v2808
    %v2810 = vrcp.pop %v2776
    %v2811 = vmul.f32 %v2776, %v2810
    %v2812 = vsub.f32 1.0, %v2811
    %v2813 = vmul.f32 %v2810, %v2812
    %v2814 = vadd.f32 %v2810, %v2813
    %vm2815 = vweird.f32 %v2776
    %vm2816 = vweird.f32 %v2810
    %vm2817 = vmor %vm2815, %vm2816
    %v2818 = vsel %vm2817, %v2810, %v2814
    %v2819 = vand.u32 2147483647, %v2776
    %vm2820 = vcmp.eq.f32.partialorder %v2819, 8.507059e+37
    %v2821 = vand.u32 %v2776, 2147483648
    %v2822 = vor.u32 1.1754944e-38, %v2821
    %v2823 = vsel %vm2820, %v2822, %v2818
    %v2824 = vmul.f32 1.0, %v2823
    %v2825 = vrcp.pop %v2777
    %v2826 = vmul.f32 %v2777, %v2825
    %v2827 = vsub.f32 1.0, %v2826
    %v2828 = vmul.f32 %v2825, %v2827
    %v2829 = vadd.f32 %v2825, %v2828
    %vm2830 = vweird.f32 %v2777
    %vm2831 = vweird.f32 %v2825
    %vm2832 = vmor %vm2830, %vm2831
    %v2833 = vsel %vm2832, %v2825, %v2829
    %v2834 = vand.u32 2147483647, %v2777
    %vm2835 = vcmp.eq.f32.partialorder %v2834, 8.507059e+37
    %v2836 = vand.u32 %v2777, 2147483648
    %v2837 = vor.u32 1.1754944e-38, %v2836
    %v2838 = vsel %vm2835, %v2837, %v2833
    %v2839 = vmul.f32 1.0, %v2838
    %v2840 = vrcp.pop %v2778
    %v2841 = vmul.f32 %v2778, %v2840
    %v2842 = vsub.f32 1.0, %v2841
    %v2843 = vmul.f32 %v2840, %v2842
    %v2844 = vadd.f32 %v2840, %v2843
    %vm2845 = vweird.f32 %v2778
    %vm2846 = vweird.f32 %v2840
    %vm2847 = vmor %vm2845, %vm2846
    %v2848 = vsel %vm2847, %v2840, %v2844
    %v2849 = vand.u32 2147483647, %v2778
    %vm2850 = vcmp.eq.f32.partialorder %v2849, 8.507059e+37
    %v2851 = vand.u32 %v2778, 2147483648
    %v2852 = vor.u32 1.1754944e-38, %v2851
    %v2853 = vsel %vm2850, %v2852, %v2848
    %v2854 = vmul.f32 1.0, %v2853
    %v2855 = vrcp.pop %v2779
    %v2856 = vmul.f32 %v2779, %v2855
    %v2857 = vsub.f32 1.0, %v2856
    %v2858 = vmul.f32 %v2855, %v2857
    %v2859 = vadd.f32 %v2855, %v2858
    %vm2860 = vweird.f32 %v2779
    %vm2861 = vweird.f32 %v2855
    %vm2862 = vmor %vm2860, %vm2861
    %v2863 = vsel %vm2862, %v2855, %v2859
    %v2864 = vand.u32 2147483647, %v2779
    %vm2865 = vcmp.eq.f32.partialorder %v2864, 8.507059e+37
    %v2866 = vand.u32 %v2779, 2147483648
    %v2867 = vor.u32 1.1754944e-38, %v2866
    %v2868 = vsel %vm2865, %v2867, %v2863
    %v2869 = vmul.f32 1.0, %v2868
    %v2870 = vtanh.pop %v2751
    %v2871 = vtanh.pop %v2755
    %v2872 = vmul.f32 %v2809, %v2438
    %v2873 = vmul.f32 %v2854, %v2439
    %v2874 = vmul.f32 %v2794, %v2870
    %v2875 = vmul.f32 %v2839, %v2871
    %v2876 = vadd.f32 %v2872, %v2874
    %v2877 = vadd.f32 %v2873, %v2875
    %v2878 = vtanh.pop %v2876
    %v2879 = vtanh.pop %v2877
    %v2880 = vmul.f32 %v2824, %v2878
    %v2881 = vmul.f32 %v2869, %v2879
    %v2882 = vpack.c.bf16 %v2881, %v2880
    %v2883 = vpack.c.bf16 %v2691, %v2690
    %2884 = vmatpush.bf16.msra.mxu0 %v926
    %2885 = vmatpush.bf16.msra.mxu0 %v922
    %2886 = vmatpush.bf16.msra.mxu0 %v918
    %2887 = vmatpush.bf16.msra.mxu0 %v914
    %2888 = vmatpush.bf16.msra.mxu0 %v910
    %2889 = vmatpush.bf16.msra.mxu0 %v906
    %2890 = vmatpush.bf16.msra.mxu0 %v902
    %2891 = vmatpush.bf16.msra.mxu0 %v898
    %2892 = vmatmul.bf16.gmra.mxu0 %v2883
    %v2893 = vpop.f32.mrf.mxu0
    %v2894 = vadd.f32 0.0, %v2893
    %v2895 = vpop.f32.mrf.mxu0
    %v2896 = vadd.f32 0.0, %v2895
    %2897 = vdwg.mxu0
    %2898 = vmatpush.bf16.msra.mxu0 %v927
    %2899 = vmatpush.bf16.msra.mxu0 %v923
    %2900 = vmatpush.bf16.msra.mxu0 %v919
    %2901 = vmatpush.bf16.msra.mxu0 %v915
    %2902 = vmatpush.bf16.msra.mxu0 %v911
    %2903 = vmatpush.bf16.msra.mxu0 %v907
    %2904 = vmatpush.bf16.msra.mxu0 %v903
    %2905 = vmatpush.bf16.msra.mxu0 %v899
    %2906 = vmatmul.bf16.gmra.mxu0 %v2883
    %v2907 = vpop.f32.mrf.mxu0
    %v2908 = vadd.f32 0.0, %v2907
    %v2909 = vpop.f32.mrf.mxu0
    %v2910 = vadd.f32 0.0, %v2909
    %2911 = vdwg.mxu0
    %2912 = vmatpush.bf16.msra.mxu0 %v928
    %2913 = vmatpush.bf16.msra.mxu0 %v924
    %2914 = vmatpush.bf16.msra.mxu0 %v920
    %2915 = vmatpush.bf16.msra.mxu0 %v916
    %2916 = vmatpush.bf16.msra.mxu0 %v912
    %2917 = vmatpush.bf16.msra.mxu0 %v908
    %2918 = vmatpush.bf16.msra.mxu0 %v904
    %2919 = vmatpush.bf16.msra.mxu0 %v900
    %2920 = vmatmul.bf16.gmra.mxu0 %v2883
    %v2921 = vpop.f32.mrf.mxu0
    %v2922 = vadd.f32 0.0, %v2921
    %v2923 = vpop.f32.mrf.mxu0
    %v2924 = vadd.f32 0.0, %v2923
    %2925 = vdwg.mxu0
    %2926 = vmatpush.bf16.msra.mxu0 %v929
    %2927 = vmatpush.bf16.msra.mxu0 %v925
    %2928 = vmatpush.bf16.msra.mxu0 %v921
    %2929 = vmatpush.bf16.msra.mxu0 %v917
    %2930 = vmatpush.bf16.msra.mxu0 %v913
    %2931 = vmatpush.bf16.msra.mxu0 %v909
    %2932 = vmatpush.bf16.msra.mxu0 %v905
    %2933 = vmatpush.bf16.msra.mxu0 %v901
    %2934 = vmatmul.bf16.gmra.mxu0 %v2883
    %v2935 = vpop.f32.mrf.mxu0
    %v2936 = vadd.f32 0.0, %v2935
    %v2937 = vpop.f32.mrf.mxu0
    %v2938 = vadd.f32 0.0, %v2937
    %2939 = vdwg.mxu0
    %2940 = vmatpush.bf16.msra.mxu0 %v1142
    %2941 = vmatpush.bf16.msra.mxu0 %v1138
    %2942 = vmatpush.bf16.msra.mxu0 %v1134
    %2943 = vmatpush.bf16.msra.mxu0 %v1130
    %2944 = vmatpush.bf16.msra.mxu0 %v1126
    %2945 = vmatpush.bf16.msra.mxu0 %v1122
    %2946 = vmatpush.bf16.msra.mxu0 %v1118
    %2947 = vmatpush.bf16.msra.mxu0 %v1114
    %2948 = vmatmul.bf16.gmra.mxu0 %v2882
    %v2949 = vpop.f32.mrf.mxu0
    %v2950 = vadd.f32 %v2894, %v2949
    %v2951 = vpop.f32.mrf.mxu0
    %v2952 = vadd.f32 %v2896, %v2951
    %2953 = vdwg.mxu0
    %2954 = vmatpush.bf16.msra.mxu0 %v1143
    %2955 = vmatpush.bf16.msra.mxu0 %v1139
    %2956 = vmatpush.bf16.msra.mxu0 %v1135
    %2957 = vmatpush.bf16.msra.mxu0 %v1131
    %2958 = vmatpush.bf16.msra.mxu0 %v1127
    %2959 = vmatpush.bf16.msra.mxu0 %v1123
    %2960 = vmatpush.bf16.msra.mxu0 %v1119
    %2961 = vmatpush.bf16.msra.mxu0 %v1115
    %2962 = vmatmul.bf16.gmra.mxu0 %v2882
    %v2963 = vpop.f32.mrf.mxu0
    %v2964 = vadd.f32 %v2908, %v2963
    %v2965 = vpop.f32.mrf.mxu0
    %v2966 = vadd.f32 %v2910, %v2965
    %2967 = vdwg.mxu0
    %2968 = vmatpush.bf16.msra.mxu0 %v1144
    %2969 = vmatpush.bf16.msra.mxu0 %v1140
    %2970 = vmatpush.bf16.msra.mxu0 %v1136
    %2971 = vmatpush.bf16.msra.mxu0 %v1132
    %2972 = vmatpush.bf16.msra.mxu0 %v1128
    %2973 = vmatpush.bf16.msra.mxu0 %v1124
    %2974 = vmatpush.bf16.msra.mxu0 %v1120
    %2975 = vmatpush.bf16.msra.mxu0 %v1116
    %2976 = vmatmul.bf16.gmra.mxu0 %v2882
    %v2977 = vpop.f32.mrf.mxu0
    %v2978 = vadd.f32 %v2922, %v2977
    %v2979 = vpop.f32.mrf.mxu0
    %v2980 = vadd.f32 %v2924, %v2979
    %2981 = vdwg.mxu0
    %2982 = vmatpush.bf16.msra.mxu0 %v1145
    %2983 = vmatpush.bf16.msra.mxu0 %v1141
    %2984 = vmatpush.bf16.msra.mxu0 %v1137
    %2985 = vmatpush.bf16.msra.mxu0 %v1133
    %2986 = vmatpush.bf16.msra.mxu0 %v1129
    %2987 = vmatpush.bf16.msra.mxu0 %v1125
    %2988 = vmatpush.bf16.msra.mxu0 %v1121
    %2989 = vmatpush.bf16.msra.mxu0 %v1117
    %2990 = vmatmul.bf16.gmra.mxu0 %v2882
    %v2991 = vpop.f32.mrf.mxu0
    %v2992 = vadd.f32 %v2936, %v2991
    %v2993 = vpop.f32.mrf.mxu0
    %v2994 = vadd.f32 %v2938, %v2993
    %2995 = vdwg.mxu0
    %v2996 = vadd.f32 %v2950, %v1236
    %v2997 = vadd.f32 %v2964, %v1237
    %v2998 = vadd.f32 %v2978, %v1238
    %v2999 = vadd.f32 %v2992, %v1239
    %v3000 = vadd.f32 %v2952, %v1236
    %v3001 = vadd.f32 %v2966, %v1237
    %v3002 = vadd.f32 %v2980, %v1238
    %v3003 = vadd.f32 %v2994, %v1239
    %v3004 = vxor.u32 %v2996, 2147483648
    %v3005 = vxor.u32 %v2997, 2147483648
    %v3006 = vxor.u32 %v2998, 2147483648
    %v3007 = vxor.u32 %v3000, 2147483648
    %v3008 = vxor.u32 %v3001, 2147483648
    %v3009 = vxor.u32 %v3002, 2147483648
    %v3010 = vmul.f32 %v3004, 1.442695
    %v3011 = vpow.pop %v3010
    %v3012 = vmul.f32 %v3005, 1.442695
    %v3013 = vpow.pop %v3012
    %v3014 = vmul.f32 %v3006, 1.442695
    %v3015 = vpow.pop %v3014
    %v3016 = vmul.f32 %v3007, 1.442695
    %v3017 = vpow.pop %v3016
    %v3018 = vmul.f32 %v3008, 1.442695
    %v3019 = vpow.pop %v3018
    %v3020 = vmul.f32 %v3009, 1.442695
    %v3021 = vpow.pop %v3020
    %v3022 = vadd.f32 %v3011, 1.0
    %v3023 = vadd.f32 %v3013, 1.0
    %v3024 = vadd.f32 %v3015, 1.0
    %v3025 = vadd.f32 %v3017, 1.0
    %v3026 = vadd.f32 %v3019, 1.0
    %v3027 = vadd.f32 %v3021, 1.0
    %v3028 = vrcp.pop %v3022
    %v3029 = vmul.f32 %v3022, %v3028
    %v3030 = vsub.f32 1.0, %v3029
    %v3031 = vmul.f32 %v3028, %v3030
    %v3032 = vadd.f32 %v3028, %v3031
    %vm3033 = vweird.f32 %v3022
    %vm3034 = vweird.f32 %v3028
    %vm3035 = vmor %vm3033, %vm3034
    %v3036 = vsel %vm3035, %v3028, %v3032
    %v3037 = vand.u32 2147483647, %v3022
    %vm3038 = vcmp.eq.f32.partialorder %v3037, 8.507059e+37
    %v3039 = vand.u32 %v3022, 2147483648
    %v3040 = vor.u32 1.1754944e-38, %v3039
    %v3041 = vsel %vm3038, %v3040, %v3036
    %v3042 = vmul.f32 1.0, %v3041
    %v3043 = vrcp.pop %v3023
    %v3044 = vmul.f32 %v3023, %v3043
    %v3045 = vsub.f32 1.0, %v3044
    %v3046 = vmul.f32 %v3043, %v3045
    %v3047 = vadd.f32 %v3043, %v3046
    %vm3048 = vweird.f32 %v3023
    %vm3049 = vweird.f32 %v3043
    %vm3050 = vmor %vm3048, %vm3049
    %v3051 = vsel %vm3050, %v3043, %v3047
    %v3052 = vand.u32 2147483647, %v3023
    %vm3053 = vcmp.eq.f32.partialorder %v3052, 8.507059e+37
    %v3054 = vand.u32 %v3023, 2147483648
    %v3055 = vor.u32 1.1754944e-38, %v3054
    %v3056 = vsel %vm3053, %v3055, %v3051
    %v3057 = vmul.f32 1.0, %v3056
    %v3058 = vrcp.pop %v3024
    %v3059 = vmul.f32 %v3024, %v3058
    %v3060 = vsub.f32 1.0, %v3059
    %v3061 = vmul.f32 %v3058, %v3060
    %v3062 = vadd.f32 %v3058, %v3061
    %vm3063 = vweird.f32 %v3024
    %vm3064 = vweird.f32 %v3058
    %vm3065 = vmor %vm3063, %vm3064
    %v3066 = vsel %vm3065, %v3058, %v3062
    %v3067 = vand.u32 2147483647, %v3024
    %vm3068 = vcmp.eq.f32.partialorder %v3067, 8.507059e+37
    %v3069 = vand.u32 %v3024, 2147483648
    %v3070 = vor.u32 1.1754944e-38, %v3069
    %v3071 = vsel %vm3068, %v3070, %v3066
    %v3072 = vmul.f32 1.0, %v3071
    %v3073 = vrcp.pop %v3025
    %v3074 = vmul.f32 %v3025, %v3073
    %v3075 = vsub.f32 1.0, %v3074
    %v3076 = vmul.f32 %v3073, %v3075
    %v3077 = vadd.f32 %v3073, %v3076
    %vm3078 = vweird.f32 %v3025
    %vm3079 = vweird.f32 %v3073
    %vm3080 = vmor %vm3078, %vm3079
    %v3081 = vsel %vm3080, %v3073, %v3077
    %v3082 = vand.u32 2147483647, %v3025
    %vm3083 = vcmp.eq.f32.partialorder %v3082, 8.507059e+37
    %v3084 = vand.u32 %v3025, 2147483648
    %v3085 = vor.u32 1.1754944e-38, %v3084
    %v3086 = vsel %vm3083, %v3085, %v3081
    %v3087 = vmul.f32 1.0, %v3086
    %v3088 = vrcp.pop %v3026
    %v3089 = vmul.f32 %v3026, %v3088
    %v3090 = vsub.f32 1.0, %v3089
    %v3091 = vmul.f32 %v3088, %v3090
    %v3092 = vadd.f32 %v3088, %v3091
    %vm3093 = vweird.f32 %v3026
    %vm3094 = vweird.f32 %v3088
    %vm3095 = vmor %vm3093, %vm3094
    %v3096 = vsel %vm3095, %v3088, %v3092
    %v3097 = vand.u32 2147483647, %v3026
    %vm3098 = vcmp.eq.f32.partialorder %v3097, 8.507059e+37
    %v3099 = vand.u32 %v3026, 2147483648
    %v3100 = vor.u32 1.1754944e-38, %v3099
    %v3101 = vsel %vm3098, %v3100, %v3096
    %v3102 = vmul.f32 1.0, %v3101
    %v3103 = vrcp.pop %v3027
    %v3104 = vmul.f32 %v3027, %v3103
    %v3105 = vsub.f32 1.0, %v3104
    %v3106 = vmul.f32 %v3103, %v3105
    %v3107 = vadd.f32 %v3103, %v3106
    %vm3108 = vweird.f32 %v3027
    %vm3109 = vweird.f32 %v3103
    %vm3110 = vmor %vm3108, %vm3109
    %v3111 = vsel %vm3110, %v3103, %v3107
    %v3112 = vand.u32 2147483647, %v3027
    %vm3113 = vcmp.eq.f32.partialorder %v3112, 8.507059e+37
    %v3114 = vand.u32 %v3027, 2147483648
    %v3115 = vor.u32 1.1754944e-38, %v3114
    %v3116 = vsel %vm3113, %v3115, %v3111
    %v3117 = vmul.f32 1.0, %v3116
    %v3118 = vtanh.pop %v2999
    %v3119 = vtanh.pop %v3003
    %v3120 = vmul.f32 %v3057, %v2686
    %v3121 = vmul.f32 %v3102, %v2687
    %v3122 = vmul.f32 %v3042, %v3118
    %v3123 = vmul.f32 %v3087, %v3119
    %v3124 = vadd.f32 %v3120, %v3122
    %v3125 = vadd.f32 %v3121, %v3123
    %v3126 = vtanh.pop %v3124
    %v3127 = vtanh.pop %v3125
    %v3128 = vmul.f32 %v3072, %v3126
    %v3129 = vmul.f32 %v3117, %v3127
    %3130 = vmatpush.bf16.msra.mxu0 %v511
    %3131 = vmatpush.bf16.msra.mxu0 %v507
    %3132 = vmatpush.bf16.msra.mxu0 %v503
    %3133 = vmatpush.bf16.msra.mxu0 %v499
    %3134 = vmatpush.bf16.msra.mxu0 %v495
    %3135 = vmatpush.bf16.msra.mxu0 %v491
    %3136 = vmatpush.bf16.msra.mxu0 %v487
    %3137 = vmatpush.bf16.msra.mxu0 %v483
    %3138 = vmatmul.bf16.gmra.mxu0 %v2882
    %v3139 = vpop.f32.mrf.mxu0
    %v3140 = vadd.f32 0.0, %v3139
    %v3141 = vpop.f32.mrf.mxu0
    %v3142 = vadd.f32 0.0, %v3141
    %3143 = vdwg.mxu0
    %3144 = vmatpush.bf16.msra.mxu0 %v512
    %3145 = vmatpush.bf16.msra.mxu0 %v508
    %3146 = vmatpush.bf16.msra.mxu0 %v504
    %3147 = vmatpush.bf16.msra.mxu0 %v500
    %3148 = vmatpush.bf16.msra.mxu0 %v496
    %3149 = vmatpush.bf16.msra.mxu0 %v492
    %3150 = vmatpush.bf16.msra.mxu0 %v488
    %3151 = vmatpush.bf16.msra.mxu0 %v484
    %3152 = vmatmul.bf16.gmra.mxu0 %v2882
    %v3153 = vpop.f32.mrf.mxu0
    %v3154 = vadd.f32 0.0, %v3153
    %v3155 = vpop.f32.mrf.mxu0
    %v3156 = vadd.f32 0.0, %v3155
    %3157 = vdwg.mxu0
    %3158 = vmatpush.bf16.msra.mxu0 %v513
    %3159 = vmatpush.bf16.msra.mxu0 %v509
    %3160 = vmatpush.bf16.msra.mxu0 %v505
    %3161 = vmatpush.bf16.msra.mxu0 %v501
    %3162 = vmatpush.bf16.msra.mxu0 %v497
    %3163 = vmatpush.bf16.msra.mxu0 %v493
    %3164 = vmatpush.bf16.msra.mxu0 %v489
    %3165 = vmatpush.bf16.msra.mxu0 %v485
    %3166 = vmatmul.bf16.gmra.mxu0 %v2882
    %v3167 = vpop.f32.mrf.mxu0
    %v3168 = vadd.f32 0.0, %v3167
    %v3169 = vpop.f32.mrf.mxu0
    %v3170 = vadd.f32 0.0, %v3169
    %3171 = vdwg.mxu0
    %3172 = vmatpush.bf16.msra.mxu0 %v514
    %3173 = vmatpush.bf16.msra.mxu0 %v510
    %3174 = vmatpush.bf16.msra.mxu0 %v506
    %3175 = vmatpush.bf16.msra.mxu0 %v502
    %3176 = vmatpush.bf16.msra.mxu0 %v498
    %3177 = vmatpush.bf16.msra.mxu0 %v494
    %3178 = vmatpush.bf16.msra.mxu0 %v490
    %3179 = vmatpush.bf16.msra.mxu0 %v486
    %3180 = vmatmul.bf16.gmra.mxu0 %v2882
    %v3181 = vpop.f32.mrf.mxu0
    %v3182 = vadd.f32 0.0, %v3181
    %v3183 = vpop.f32.mrf.mxu0
    %v3184 = vadd.f32 0.0, %v3183
    %3185 = vdwg.mxu0
    %v3186 = vadd.f32 %v194, %v3140
    %v3187 = vadd.f32 %v243, %v3154
    %v3188 = vadd.f32 %v292, %v3168
    %v3189 = vadd.f32 %v341, %v3182
    %v3190 = vadd.f32 %v196, %v3142
    %v3191 = vadd.f32 %v245, %v3156
    %v3192 = vadd.f32 %v294, %v3170
    %v3193 = vadd.f32 %v343, %v3184
    %v3194 = vxor.u32 %v3186, 2147483648
    %v3195 = vxor.u32 %v3187, 2147483648
    %v3196 = vxor.u32 %v3188, 2147483648
    %v3197 = vxor.u32 %v3190, 2147483648
    %v3198 = vxor.u32 %v3191, 2147483648
    %v3199 = vxor.u32 %v3192, 2147483648
    %v3200 = vmul.f32 %v3194, 1.442695
    %v3201 = vpow.pop %v3200
    %v3202 = vmul.f32 %v3195, 1.442695
    %v3203 = vpow.pop %v3202
    %v3204 = vmul.f32 %v3196, 1.442695
    %v3205 = vpow.pop %v3204
    %v3206 = vmul.f32 %v3197, 1.442695
    %v3207 = vpow.pop %v3206
    %v3208 = vmul.f32 %v3198, 1.442695
    %v3209 = vpow.pop %v3208
    %v3210 = vmul.f32 %v3199, 1.442695
    %v3211 = vpow.pop %v3210
    %v3212 = vadd.f32 %v3201, 1.0
    %v3213 = vadd.f32 %v3203, 1.0
    %v3214 = vadd.f32 %v3205, 1.0
    %v3215 = vadd.f32 %v3207, 1.0
    %v3216 = vadd.f32 %v3209, 1.0
    %v3217 = vadd.f32 %v3211, 1.0
    %v3218 = vrcp.pop %v3212
    %v3219 = vmul.f32 %v3212, %v3218
    %v3220 = vsub.f32 1.0, %v3219
    %v3221 = vmul.f32 %v3218, %v3220
    %v3222 = vadd.f32 %v3218, %v3221
    %vm3223 = vweird.f32 %v3212
    %vm3224 = vweird.f32 %v3218
    %vm3225 = vmor %vm3223, %vm3224
    %v3226 = vsel %vm3225, %v3218, %v3222
    %v3227 = vand.u32 2147483647, %v3212
    %vm3228 = vcmp.eq.f32.partialorder %v3227, 8.507059e+37
    %v3229 = vand.u32 %v3212, 2147483648
    %v3230 = vor.u32 1.1754944e-38, %v3229
    %v3231 = vsel %vm3228, %v3230, %v3226
    %v3232 = vmul.f32 1.0, %v3231
    %v3233 = vrcp.pop %v3213
    %v3234 = vmul.f32 %v3213, %v3233
    %v3235 = vsub.f32 1.0, %v3234
    %v3236 = vmul.f32 %v3233, %v3235
    %v3237 = vadd.f32 %v3233, %v3236
    %vm3238 = vweird.f32 %v3213
    %vm3239 = vweird.f32 %v3233
    %vm3240 = vmor %vm3238, %vm3239
    %v3241 = vsel %vm3240, %v3233, %v3237
    %v3242 = vand.u32 2147483647, %v3213
    %vm3243 = vcmp.eq.f32.partialorder %v3242, 8.507059e+37
    %v3244 = vand.u32 %v3213, 2147483648
    %v3245 = vor.u32 1.1754944e-38, %v3244
    %v3246 = vsel %vm3243, %v3245, %v3241
    %v3247 = vmul.f32 1.0, %v3246
    %v3248 = vrcp.pop %v3214
    %v3249 = vmul.f32 %v3214, %v3248
    %v3250 = vsub.f32 1.0, %v3249
    %v3251 = vmul.f32 %v3248, %v3250
    %v3252 = vadd.f32 %v3248, %v3251
    %vm3253 = vweird.f32 %v3214
    %vm3254 = vweird.f32 %v3248
    %vm3255 = vmor %vm3253, %vm3254
    %v3256 = vsel %vm3255, %v3248, %v3252
    %v3257 = vand.u32 2147483647, %v3214
    %vm3258 = vcmp.eq.f32.partialorder %v3257, 8.507059e+37
    %v3259 = vand.u32 %v3214, 2147483648
    %v3260 = vor.u32 1.1754944e-38, %v3259
    %v3261 = vsel %vm3258, %v3260, %v3256
    %v3262 = vmul.f32 1.0, %v3261
    %v3263 = vrcp.pop %v3215
    %v3264 = vmul.f32 %v3215, %v3263
    %v3265 = vsub.f32 1.0, %v3264
    %v3266 = vmul.f32 %v3263, %v3265
    %v3267 = vadd.f32 %v3263, %v3266
    %vm3268 = vweird.f32 %v3215
    %vm3269 = vweird.f32 %v3263
    %vm3270 = vmor %vm3268, %vm3269
    %v3271 = vsel %vm3270, %v3263, %v3267
    %v3272 = vand.u32 2147483647, %v3215
    %vm3273 = vcmp.eq.f32.partialorder %v3272, 8.507059e+37
    %v3274 = vand.u32 %v3215, 2147483648
    %v3275 = vor.u32 1.1754944e-38, %v3274
    %v3276 = vsel %vm3273, %v3275, %v3271
    %v3277 = vmul.f32 1.0, %v3276
    %v3278 = vrcp.pop %v3216
    %v3279 = vmul.f32 %v3216, %v3278
    %v3280 = vsub.f32 1.0, %v3279
    %v3281 = vmul.f32 %v3278, %v3280
    %v3282 = vadd.f32 %v3278, %v3281
    %vm3283 = vweird.f32 %v3216
    %vm3284 = vweird.f32 %v3278
    %vm3285 = vmor %vm3283, %vm3284
    %v3286 = vsel %vm3285, %v3278, %v3282
    %v3287 = vand.u32 2147483647, %v3216
    %vm3288 = vcmp.eq.f32.partialorder %v3287, 8.507059e+37
    %v3289 = vand.u32 %v3216, 2147483648
    %v3290 = vor.u32 1.1754944e-38, %v3289
    %v3291 = vsel %vm3288, %v3290, %v3286
    %v3292 = vmul.f32 1.0, %v3291
    %v3293 = vrcp.pop %v3217
    %v3294 = vmul.f32 %v3217, %v3293
    %v3295 = vsub.f32 1.0, %v3294
    %v3296 = vmul.f32 %v3293, %v3295
    %v3297 = vadd.f32 %v3293, %v3296
    %vm3298 = vweird.f32 %v3217
    %vm3299 = vweird.f32 %v3293
    %vm3300 = vmor %vm3298, %vm3299
    %v3301 = vsel %vm3300, %v3293, %v3297
    %v3302 = vand.u32 2147483647, %v3217
    %vm3303 = vcmp.eq.f32.partialorder %v3302, 8.507059e+37
    %v3304 = vand.u32 %v3217, 2147483648
    %v3305 = vor.u32 1.1754944e-38, %v3304
    %v3306 = vsel %vm3303, %v3305, %v3301
    %v3307 = vmul.f32 1.0, %v3306
    %v3308 = vtanh.pop %v3189
    %v3309 = vtanh.pop %v3193
    %v3310 = vmul.f32 %v3247, %v2876
    %v3311 = vmul.f32 %v3292, %v2877
    %v3312 = vmul.f32 %v3232, %v3308
    %v3313 = vmul.f32 %v3277, %v3309
    %v3314 = vadd.f32 %v3310, %v3312
    %v3315 = vadd.f32 %v3311, %v3313
    %v3316 = vtanh.pop %v3314
    %v3317 = vtanh.pop %v3315
    %v3318 = vmul.f32 %v3262, %v3316
    %v3319 = vmul.f32 %v3307, %v3317
    %v3320 = vpack.c.bf16 %v3319, %v3318
    %v3321 = vpack.c.bf16 %v3129, %v3128
    %3322 = vmatpush.bf16.msra.mxu0 %v926
    %3323 = vmatpush.bf16.msra.mxu0 %v922
    %3324 = vmatpush.bf16.msra.mxu0 %v918
    %3325 = vmatpush.bf16.msra.mxu0 %v914
    %3326 = vmatpush.bf16.msra.mxu0 %v910
    %3327 = vmatpush.bf16.msra.mxu0 %v906
    %3328 = vmatpush.bf16.msra.mxu0 %v902
    %3329 = vmatpush.bf16.msra.mxu0 %v898
    %3330 = vmatmul.bf16.gmra.mxu0 %v3321
    %v3331 = vpop.f32.mrf.mxu0
    %v3332 = vadd.f32 0.0, %v3331
    %v3333 = vpop.f32.mrf.mxu0
    %v3334 = vadd.f32 0.0, %v3333
    %3335 = vdwg.mxu0
    %3336 = vmatpush.bf16.msra.mxu0 %v927
    %3337 = vmatpush.bf16.msra.mxu0 %v923
    %3338 = vmatpush.bf16.msra.mxu0 %v919
    %3339 = vmatpush.bf16.msra.mxu0 %v915
    %3340 = vmatpush.bf16.msra.mxu0 %v911
    %3341 = vmatpush.bf16.msra.mxu0 %v907
    %3342 = vmatpush.bf16.msra.mxu0 %v903
    %3343 = vmatpush.bf16.msra.mxu0 %v899
    %3344 = vmatmul.bf16.gmra.mxu0 %v3321
    %v3345 = vpop.f32.mrf.mxu0
    %v3346 = vadd.f32 0.0, %v3345
    %v3347 = vpop.f32.mrf.mxu0
    %v3348 = vadd.f32 0.0, %v3347
    %3349 = vdwg.mxu0
    %3350 = vmatpush.bf16.msra.mxu0 %v928
    %3351 = vmatpush.bf16.msra.mxu0 %v924
    %3352 = vmatpush.bf16.msra.mxu0 %v920
    %3353 = vmatpush.bf16.msra.mxu0 %v916
    %3354 = vmatpush.bf16.msra.mxu0 %v912
    %3355 = vmatpush.bf16.msra.mxu0 %v908
    %3356 = vmatpush.bf16.msra.mxu0 %v904
    %3357 = vmatpush.bf16.msra.mxu0 %v900
    %3358 = vmatmul.bf16.gmra.mxu0 %v3321
    %v3359 = vpop.f32.mrf.mxu0
    %v3360 = vadd.f32 0.0, %v3359
    %v3361 = vpop.f32.mrf.mxu0
    %v3362 = vadd.f32 0.0, %v3361
    %3363 = vdwg.mxu0
    %3364 = vmatpush.bf16.msra.mxu0 %v929
    %3365 = vmatpush.bf16.msra.mxu0 %v925
    %3366 = vmatpush.bf16.msra.mxu0 %v921
    %3367 = vmatpush.bf16.msra.mxu0 %v917
    %3368 = vmatpush.bf16.msra.mxu0 %v913
    %3369 = vmatpush.bf16.msra.mxu0 %v909
    %3370 = vmatpush.bf16.msra.mxu0 %v905
    %3371 = vmatpush.bf16.msra.mxu0 %v901
    %3372 = vmatmul.bf16.gmra.mxu0 %v3321
    %v3373 = vpop.f32.mrf.mxu0
    %v3374 = vadd.f32 0.0, %v3373
    %v3375 = vpop.f32.mrf.mxu0
    %v3376 = vadd.f32 0.0, %v3375
    %3377 = vdwg.mxu0
    %3378 = vmatpush.bf16.msra.mxu0 %v1142
    %3379 = vmatpush.bf16.msra.mxu0 %v1138
    %3380 = vmatpush.bf16.msra.mxu0 %v1134
    %3381 = vmatpush.bf16.msra.mxu0 %v1130
    %3382 = vmatpush.bf16.msra.mxu0 %v1126
    %3383 = vmatpush.bf16.msra.mxu0 %v1122
    %3384 = vmatpush.bf16.msra.mxu0 %v1118
    %3385 = vmatpush.bf16.msra.mxu0 %v1114
    %3386 = vmatmul.bf16.gmra.mxu0 %v3320
    %v3387 = vpop.f32.mrf.mxu0
    %v3388 = vadd.f32 %v3332, %v3387
    %v3389 = vpop.f32.mrf.mxu0
    %v3390 = vadd.f32 %v3334, %v3389
    %3391 = vdwg.mxu0
    %3392 = vmatpush.bf16.msra.mxu0 %v1143
    %3393 = vmatpush.bf16.msra.mxu0 %v1139
    %3394 = vmatpush.bf16.msra.mxu0 %v1135
    %3395 = vmatpush.bf16.msra.mxu0 %v1131
    %3396 = vmatpush.bf16.msra.mxu0 %v1127
    %3397 = vmatpush.bf16.msra.mxu0 %v1123
    %3398 = vmatpush.bf16.msra.mxu0 %v1119
    %3399 = vmatpush.bf16.msra.mxu0 %v1115
    %3400 = vmatmul.bf16.gmra.mxu0 %v3320
    %v3401 = vpop.f32.mrf.mxu0
    %v3402 = vadd.f32 %v3346, %v3401
    %v3403 = vpop.f32.mrf.mxu0
    %v3404 = vadd.f32 %v3348, %v3403
    %3405 = vdwg.mxu0
    %3406 = vmatpush.bf16.msra.mxu0 %v1144
    %3407 = vmatpush.bf16.msra.mxu0 %v1140
    %3408 = vmatpush.bf16.msra.mxu0 %v1136
    %3409 = vmatpush.bf16.msra.mxu0 %v1132
    %3410 = vmatpush.bf16.msra.mxu0 %v1128
    %3411 = vmatpush.bf16.msra.mxu0 %v1124
    %3412 = vmatpush.bf16.msra.mxu0 %v1120
    %3413 = vmatpush.bf16.msra.mxu0 %v1116
    %3414 = vmatmul.bf16.gmra.mxu0 %v3320
    %v3415 = vpop.f32.mrf.mxu0
    %v3416 = vadd.f32 %v3360, %v3415
    %v3417 = vpop.f32.mrf.mxu0
    %v3418 = vadd.f32 %v3362, %v3417
    %3419 = vdwg.mxu0
    %3420 = vmatpush.bf16.msra.mxu0 %v1145
    %3421 = vmatpush.bf16.msra.mxu0 %v1141
    %3422 = vmatpush.bf16.msra.mxu0 %v1137
    %3423 = vmatpush.bf16.msra.mxu0 %v1133
    %3424 = vmatpush.bf16.msra.mxu0 %v1129
    %3425 = vmatpush.bf16.msra.mxu0 %v1125
    %3426 = vmatpush.bf16.msra.mxu0 %v1121
    %3427 = vmatpush.bf16.msra.mxu0 %v1117
    %3428 = vmatmul.bf16.gmra.mxu0 %v3320
    %v3429 = vpop.f32.mrf.mxu0
    %v3430 = vadd.f32 %v3374, %v3429
    %v3431 = vpop.f32.mrf.mxu0
    %v3432 = vadd.f32 %v3376, %v3431
    %3433 = vdwg.mxu0
    %v3434 = vadd.f32 %v3388, %v1236
    %v3435 = vadd.f32 %v3402, %v1237
    %v3436 = vadd.f32 %v3416, %v1238
    %v3437 = vadd.f32 %v3430, %v1239
    %v3438 = vadd.f32 %v3390, %v1236
    %v3439 = vadd.f32 %v3404, %v1237
    %v3440 = vadd.f32 %v3418, %v1238
    %v3441 = vadd.f32 %v3432, %v1239
    %v3442 = vxor.u32 %v3434, 2147483648
    %v3443 = vxor.u32 %v3435, 2147483648
    %v3444 = vxor.u32 %v3436, 2147483648
    %v3445 = vxor.u32 %v3438, 2147483648
    %v3446 = vxor.u32 %v3439, 2147483648
    %v3447 = vxor.u32 %v3440, 2147483648
    %v3448 = vmul.f32 %v3442, 1.442695
    %v3449 = vpow.pop %v3448
    %v3450 = vmul.f32 %v3443, 1.442695
    %v3451 = vpow.pop %v3450
    %v3452 = vmul.f32 %v3444, 1.442695
    %v3453 = vpow.pop %v3452
    %v3454 = vmul.f32 %v3445, 1.442695
    %v3455 = vpow.pop %v3454
    %v3456 = vmul.f32 %v3446, 1.442695
    %v3457 = vpow.pop %v3456
    %v3458 = vmul.f32 %v3447, 1.442695
    %v3459 = vpow.pop %v3458
    %v3460 = vadd.f32 %v3449, 1.0
    %v3461 = vadd.f32 %v3451, 1.0
    %v3462 = vadd.f32 %v3453, 1.0
    %v3463 = vadd.f32 %v3455, 1.0
    %v3464 = vadd.f32 %v3457, 1.0
    %v3465 = vadd.f32 %v3459, 1.0
    %v3466 = vrcp.pop %v3460
    %v3467 = vmul.f32 %v3460, %v3466
    %v3468 = vsub.f32 1.0, %v3467
    %v3469 = vmul.f32 %v3466, %v3468
    %v3470 = vadd.f32 %v3466, %v3469
    %vm3471 = vweird.f32 %v3460
    %vm3472 = vweird.f32 %v3466
    %vm3473 = vmor %vm3471, %vm3472
    %v3474 = vsel %vm3473, %v3466, %v3470
    %v3475 = vand.u32 2147483647, %v3460
    %vm3476 = vcmp.eq.f32.partialorder %v3475, 8.507059e+37
    %v3477 = vand.u32 %v3460, 2147483648
    %v3478 = vor.u32 1.1754944e-38, %v3477
    %v3479 = vsel %vm3476, %v3478, %v3474
    %v3480 = vmul.f32 1.0, %v3479
    %v3481 = vrcp.pop %v3461
    %v3482 = vmul.f32 %v3461, %v3481
    %v3483 = vsub.f32 1.0, %v3482
    %v3484 = vmul.f32 %v3481, %v3483
    %v3485 = vadd.f32 %v3481, %v3484
    %vm3486 = vweird.f32 %v3461
    %vm3487 = vweird.f32 %v3481
    %vm3488 = vmor %vm3486, %vm3487
    %v3489 = vsel %vm3488, %v3481, %v3485
    %v3490 = vand.u32 2147483647, %v3461
    %vm3491 = vcmp.eq.f32.partialorder %v3490, 8.507059e+37
    %v3492 = vand.u32 %v3461, 2147483648
    %v3493 = vor.u32 1.1754944e-38, %v3492
    %v3494 = vsel %vm3491, %v3493, %v3489
    %v3495 = vmul.f32 1.0, %v3494
    %v3496 = vrcp.pop %v3462
    %v3497 = vmul.f32 %v3462, %v3496
    %v3498 = vsub.f32 1.0, %v3497
    %v3499 = vmul.f32 %v3496, %v3498
    %v3500 = vadd.f32 %v3496, %v3499
    %vm3501 = vweird.f32 %v3462
    %vm3502 = vweird.f32 %v3496
    %vm3503 = vmor %vm3501, %vm3502
    %v3504 = vsel %vm3503, %v3496, %v3500
    %v3505 = vand.u32 2147483647, %v3462
    %vm3506 = vcmp.eq.f32.partialorder %v3505, 8.507059e+37
    %v3507 = vand.u32 %v3462, 2147483648
    %v3508 = vor.u32 1.1754944e-38, %v3507
    %v3509 = vsel %vm3506, %v3508, %v3504
    %v3510 = vmul.f32 1.0, %v3509
    %v3511 = vrcp.pop %v3463
    %v3512 = vmul.f32 %v3463, %v3511
    %v3513 = vsub.f32 1.0, %v3512
    %v3514 = vmul.f32 %v3511, %v3513
    %v3515 = vadd.f32 %v3511, %v3514
    %vm3516 = vweird.f32 %v3463
    %vm3517 = vweird.f32 %v3511
    %vm3518 = vmor %vm3516, %vm3517
    %v3519 = vsel %vm3518, %v3511, %v3515
    %v3520 = vand.u32 2147483647, %v3463
    %vm3521 = vcmp.eq.f32.partialorder %v3520, 8.507059e+37
    %v3522 = vand.u32 %v3463, 2147483648
    %v3523 = vor.u32 1.1754944e-38, %v3522
    %v3524 = vsel %vm3521, %v3523, %v3519
    %v3525 = vmul.f32 1.0, %v3524
    %v3526 = vrcp.pop %v3464
    %v3527 = vmul.f32 %v3464, %v3526
    %v3528 = vsub.f32 1.0, %v3527
    %v3529 = vmul.f32 %v3526, %v3528
    %v3530 = vadd.f32 %v3526, %v3529
    %vm3531 = vweird.f32 %v3464
    %vm3532 = vweird.f32 %v3526
    %vm3533 = vmor %vm3531, %vm3532
    %v3534 = vsel %vm3533, %v3526, %v3530
    %v3535 = vand.u32 2147483647, %v3464
    %vm3536 = vcmp.eq.f32.partialorder %v3535, 8.507059e+37
    %v3537 = vand.u32 %v3464, 2147483648
    %v3538 = vor.u32 1.1754944e-38, %v3537
    %v3539 = vsel %vm3536, %v3538, %v3534
    %v3540 = vmul.f32 1.0, %v3539
    %v3541 = vrcp.pop %v3465
    %v3542 = vmul.f32 %v3465, %v3541
    %v3543 = vsub.f32 1.0, %v3542
    %v3544 = vmul.f32 %v3541, %v3543
    %v3545 = vadd.f32 %v3541, %v3544
    %vm3546 = vweird.f32 %v3465
    %vm3547 = vweird.f32 %v3541
    %vm3548 = vmor %vm3546, %vm3547
    %v3549 = vsel %vm3548, %v3541, %v3545
    %v3550 = vand.u32 2147483647, %v3465
    %vm3551 = vcmp.eq.f32.partialorder %v3550, 8.507059e+37
    %v3552 = vand.u32 %v3465, 2147483648
    %v3553 = vor.u32 1.1754944e-38, %v3552
    %v3554 = vsel %vm3551, %v3553, %v3549
    %v3555 = vmul.f32 1.0, %v3554
    %v3556 = vtanh.pop %v3437
    %v3557 = vtanh.pop %v3441
    %v3558 = vmul.f32 %v3495, %v3124
    %v3559 = vmul.f32 %v3540, %v3125
    %v3560 = vmul.f32 %v3480, %v3556
    %v3561 = vmul.f32 %v3525, %v3557
    %v3562 = vadd.f32 %v3558, %v3560
    %v3563 = vadd.f32 %v3559, %v3561
    %v3564 = vtanh.pop %v3562
    %v3565 = vtanh.pop %v3563
    %v3566 = vmul.f32 %v3510, %v3564
    %v3567 = vmul.f32 %v3555, %v3565
    %3568 = vmatpush.bf16.msra.mxu0 %v511
    %3569 = vmatpush.bf16.msra.mxu0 %v507
    %3570 = vmatpush.bf16.msra.mxu0 %v503
    %3571 = vmatpush.bf16.msra.mxu0 %v499
    %3572 = vmatpush.bf16.msra.mxu0 %v495
    %3573 = vmatpush.bf16.msra.mxu0 %v491
    %3574 = vmatpush.bf16.msra.mxu0 %v487
    %3575 = vmatpush.bf16.msra.mxu0 %v483
    %3576 = vmatmul.bf16.gmra.mxu0 %v3320
    %v3577 = vpop.f32.mrf.mxu0
    %v3578 = vadd.f32 0.0, %v3577
    %v3579 = vpop.f32.mrf.mxu0
    %v3580 = vadd.f32 0.0, %v3579
    %3581 = vdwg.mxu0
    %3582 = vmatpush.bf16.msra.mxu0 %v512
    %3583 = vmatpush.bf16.msra.mxu0 %v508
    %3584 = vmatpush.bf16.msra.mxu0 %v504
    %3585 = vmatpush.bf16.msra.mxu0 %v500
    %3586 = vmatpush.bf16.msra.mxu0 %v496
    %3587 = vmatpush.bf16.msra.mxu0 %v492
    %3588 = vmatpush.bf16.msra.mxu0 %v488
    %3589 = vmatpush.bf16.msra.mxu0 %v484
    %3590 = vmatmul.bf16.gmra.mxu0 %v3320
    %v3591 = vpop.f32.mrf.mxu0
    %v3592 = vadd.f32 0.0, %v3591
    %v3593 = vpop.f32.mrf.mxu0
    %v3594 = vadd.f32 0.0, %v3593
    %3595 = vdwg.mxu0
    %3596 = vmatpush.bf16.msra.mxu0 %v513
    %3597 = vmatpush.bf16.msra.mxu0 %v509
    %3598 = vmatpush.bf16.msra.mxu0 %v505
    %3599 = vmatpush.bf16.msra.mxu0 %v501
    %3600 = vmatpush.bf16.msra.mxu0 %v497
    %3601 = vmatpush.bf16.msra.mxu0 %v493
    %3602 = vmatpush.bf16.msra.mxu0 %v489
    %3603 = vmatpush.bf16.msra.mxu0 %v485
    %3604 = vmatmul.bf16.gmra.mxu0 %v3320
    %v3605 = vpop.f32.mrf.mxu0
    %v3606 = vadd.f32 0.0, %v3605
    %v3607 = vpop.f32.mrf.mxu0
    %v3608 = vadd.f32 0.0, %v3607
    %3609 = vdwg.mxu0
    %3610 = vmatpush.bf16.msra.mxu0 %v514
    %3611 = vmatpush.bf16.msra.mxu0 %v510
    %3612 = vmatpush.bf16.msra.mxu0 %v506
    %3613 = vmatpush.bf16.msra.mxu0 %v502
    %3614 = vmatpush.bf16.msra.mxu0 %v498
    %3615 = vmatpush.bf16.msra.mxu0 %v494
    %3616 = vmatpush.bf16.msra.mxu0 %v490
    %3617 = vmatpush.bf16.msra.mxu0 %v486
    %3618 = vmatmul.bf16.gmra.mxu0 %v3320
    %v3619 = vpop.f32.mrf.mxu0
    %v3620 = vadd.f32 0.0, %v3619
    %v3621 = vpop.f32.mrf.mxu0
    %v3622 = vadd.f32 0.0, %v3621
    %3623 = vdwg.mxu0
    %v3624 = vadd.f32 %v199, %v3578
    %v3625 = vadd.f32 %v248, %v3592
    %v3626 = vadd.f32 %v297, %v3606
    %v3627 = vadd.f32 %v346, %v3620
    %v3628 = vadd.f32 %v201, %v3580
    %v3629 = vadd.f32 %v250, %v3594
    %v3630 = vadd.f32 %v299, %v3608
    %v3631 = vadd.f32 %v348, %v3622
    %v3632 = vxor.u32 %v3624, 2147483648
    %v3633 = vxor.u32 %v3625, 2147483648
    %v3634 = vxor.u32 %v3626, 2147483648
    %v3635 = vxor.u32 %v3628, 2147483648
    %v3636 = vxor.u32 %v3629, 2147483648
    %v3637 = vxor.u32 %v3630, 2147483648
    %v3638 = vmul.f32 %v3632, 1.442695
    %v3639 = vpow.pop %v3638
    %v3640 = vmul.f32 %v3633, 1.442695
    %v3641 = vpow.pop %v3640
    %v3642 = vmul.f32 %v3634, 1.442695
    %v3643 = vpow.pop %v3642
    %v3644 = vmul.f32 %v3635, 1.442695
    %v3645 = vpow.pop %v3644
    %v3646 = vmul.f32 %v3636, 1.442695
    %v3647 = vpow.pop %v3646
    %v3648 = vmul.f32 %v3637, 1.442695
    %v3649 = vpow.pop %v3648
    %v3650 = vadd.f32 %v3639, 1.0
    %v3651 = vadd.f32 %v3641, 1.0
    %v3652 = vadd.f32 %v3643, 1.0
    %v3653 = vadd.f32 %v3645, 1.0
    %v3654 = vadd.f32 %v3647, 1.0
    %v3655 = vadd.f32 %v3649, 1.0
    %v3656 = vrcp.pop %v3650
    %v3657 = vmul.f32 %v3650, %v3656
    %v3658 = vsub.f32 1.0, %v3657
    %v3659 = vmul.f32 %v3656, %v3658
    %v3660 = vadd.f32 %v3656, %v3659
    %vm3661 = vweird.f32 %v3650
    %vm3662 = vweird.f32 %v3656
    %vm3663 = vmor %vm3661, %vm3662
    %v3664 = vsel %vm3663, %v3656, %v3660
    %v3665 = vand.u32 2147483647, %v3650
    %vm3666 = vcmp.eq.f32.partialorder %v3665, 8.507059e+37
    %v3667 = vand.u32 %v3650, 2147483648
    %v3668 = vor.u32 1.1754944e-38, %v3667
    %v3669 = vsel %vm3666, %v3668, %v3664
    %v3670 = vmul.f32 1.0, %v3669
    %v3671 = vrcp.pop %v3651
    %v3672 = vmul.f32 %v3651, %v3671
    %v3673 = vsub.f32 1.0, %v3672
    %v3674 = vmul.f32 %v3671, %v3673
    %v3675 = vadd.f32 %v3671, %v3674
    %vm3676 = vweird.f32 %v3651
    %vm3677 = vweird.f32 %v3671
    %vm3678 = vmor %vm3676, %vm3677
    %v3679 = vsel %vm3678, %v3671, %v3675
    %v3680 = vand.u32 2147483647, %v3651
    %vm3681 = vcmp.eq.f32.partialorder %v3680, 8.507059e+37
    %v3682 = vand.u32 %v3651, 2147483648
    %v3683 = vor.u32 1.1754944e-38, %v3682
    %v3684 = vsel %vm3681, %v3683, %v3679
    %v3685 = vmul.f32 1.0, %v3684
    %v3686 = vrcp.pop %v3652
    %v3687 = vmul.f32 %v3652, %v3686
    %v3688 = vsub.f32 1.0, %v3687
    %v3689 = vmul.f32 %v3686, %v3688
    %v3690 = vadd.f32 %v3686, %v3689
    %vm3691 = vweird.f32 %v3652
    %vm3692 = vweird.f32 %v3686
    %vm3693 = vmor %vm3691, %vm3692
    %v3694 = vsel %vm3693, %v3686, %v3690
    %v3695 = vand.u32 2147483647, %v3652
    %vm3696 = vcmp.eq.f32.partialorder %v3695, 8.507059e+37
    %v3697 = vand.u32 %v3652, 2147483648
    %v3698 = vor.u32 1.1754944e-38, %v3697
    %v3699 = vsel %vm3696, %v3698, %v3694
    %v3700 = vmul.f32 1.0, %v3699
    %v3701 = vrcp.pop %v3653
    %v3702 = vmul.f32 %v3653, %v3701
    %v3703 = vsub.f32 1.0, %v3702
    %v3704 = vmul.f32 %v3701, %v3703
    %v3705 = vadd.f32 %v3701, %v3704
    %vm3706 = vweird.f32 %v3653
    %vm3707 = vweird.f32 %v3701
    %vm3708 = vmor %vm3706, %vm3707
    %v3709 = vsel %vm3708, %v3701, %v3705
    %v3710 = vand.u32 2147483647, %v3653
    %vm3711 = vcmp.eq.f32.partialorder %v3710, 8.507059e+37
    %v3712 = vand.u32 %v3653, 2147483648
    %v3713 = vor.u32 1.1754944e-38, %v3712
    %v3714 = vsel %vm3711, %v3713, %v3709
    %v3715 = vmul.f32 1.0, %v3714
    %v3716 = vrcp.pop %v3654
    %v3717 = vmul.f32 %v3654, %v3716
    %v3718 = vsub.f32 1.0, %v3717
    %v3719 = vmul.f32 %v3716, %v3718
    %v3720 = vadd.f32 %v3716, %v3719
    %vm3721 = vweird.f32 %v3654
    %vm3722 = vweird.f32 %v3716
    %vm3723 = vmor %vm3721, %vm3722
    %v3724 = vsel %vm3723, %v3716, %v3720
    %v3725 = vand.u32 2147483647, %v3654
    %vm3726 = vcmp.eq.f32.partialorder %v3725, 8.507059e+37
    %v3727 = vand.u32 %v3654, 2147483648
    %v3728 = vor.u32 1.1754944e-38, %v3727
    %v3729 = vsel %vm3726, %v3728, %v3724
    %v3730 = vmul.f32 1.0, %v3729
    %v3731 = vrcp.pop %v3655
    %v3732 = vmul.f32 %v3655, %v3731
    %v3733 = vsub.f32 1.0, %v3732
    %v3734 = vmul.f32 %v3731, %v3733
    %v3735 = vadd.f32 %v3731, %v3734
    %vm3736 = vweird.f32 %v3655
    %vm3737 = vweird.f32 %v3731
    %vm3738 = vmor %vm3736, %vm3737
    %v3739 = vsel %vm3738, %v3731, %v3735
    %v3740 = vand.u32 2147483647, %v3655
    %vm3741 = vcmp.eq.f32.partialorder %v3740, 8.507059e+37
    %v3742 = vand.u32 %v3655, 2147483648
    %v3743 = vor.u32 1.1754944e-38, %v3742
    %v3744 = vsel %vm3741, %v3743, %v3739
    %v3745 = vmul.f32 1.0, %v3744
    %v3746 = vtanh.pop %v3627
    %v3747 = vtanh.pop %v3631
    %v3748 = vmul.f32 %v3685, %v3314
    %v3749 = vmul.f32 %v3730, %v3315
    %v3750 = vmul.f32 %v3670, %v3746
    %v3751 = vmul.f32 %v3715, %v3747
    %v3752 = vadd.f32 %v3748, %v3750
    %v3753 = vadd.f32 %v3749, %v3751
    %v3754 = vtanh.pop %v3752
    %v3755 = vtanh.pop %v3753
    %v3756 = vmul.f32 %v3700, %v3754
    %v3757 = vmul.f32 %v3745, %v3755
    %v3758 = vpack.c.bf16 %v3757, %v3756
    %v3759 = vpack.c.bf16 %v3567, %v3566
    %3760 = vmatpush.bf16.msra.mxu0 %v926
    %3761 = vmatpush.bf16.msra.mxu0 %v922
    %3762 = vmatpush.bf16.msra.mxu0 %v918
    %3763 = vmatpush.bf16.msra.mxu0 %v914
    %3764 = vmatpush.bf16.msra.mxu0 %v910
    %3765 = vmatpush.bf16.msra.mxu0 %v906
    %3766 = vmatpush.bf16.msra.mxu0 %v902
    %3767 = vmatpush.bf16.msra.mxu0 %v898
    %3768 = vmatmul.bf16.gmra.mxu0 %v3759
    %v3769 = vpop.f32.mrf.mxu0
    %v3770 = vadd.f32 0.0, %v3769
    %v3771 = vpop.f32.mrf.mxu0
    %v3772 = vadd.f32 0.0, %v3771
    %3773 = vdwg.mxu0
    %3774 = vmatpush.bf16.msra.mxu0 %v927
    %3775 = vmatpush.bf16.msra.mxu0 %v923
    %3776 = vmatpush.bf16.msra.mxu0 %v919
    %3777 = vmatpush.bf16.msra.mxu0 %v915
    %3778 = vmatpush.bf16.msra.mxu0 %v911
    %3779 = vmatpush.bf16.msra.mxu0 %v907
    %3780 = vmatpush.bf16.msra.mxu0 %v903
    %3781 = vmatpush.bf16.msra.mxu0 %v899
    %3782 = vmatmul.bf16.gmra.mxu0 %v3759
    %v3783 = vpop.f32.mrf.mxu0
    %v3784 = vadd.f32 0.0, %v3783
    %v3785 = vpop.f32.mrf.mxu0
    %v3786 = vadd.f32 0.0, %v3785
    %3787 = vdwg.mxu0
    %3788 = vmatpush.bf16.msra.mxu0 %v928
    %3789 = vmatpush.bf16.msra.mxu0 %v924
    %3790 = vmatpush.bf16.msra.mxu0 %v920
    %3791 = vmatpush.bf16.msra.mxu0 %v916
    %3792 = vmatpush.bf16.msra.mxu0 %v912
    %3793 = vmatpush.bf16.msra.mxu0 %v908
    %3794 = vmatpush.bf16.msra.mxu0 %v904
    %3795 = vmatpush.bf16.msra.mxu0 %v900
    %3796 = vmatmul.bf16.gmra.mxu0 %v3759
    %v3797 = vpop.f32.mrf.mxu0
    %v3798 = vadd.f32 0.0, %v3797
    %v3799 = vpop.f32.mrf.mxu0
    %v3800 = vadd.f32 0.0, %v3799
    %3801 = vdwg.mxu0
    %3802 = vmatpush.bf16.msra.mxu0 %v929
    %3803 = vmatpush.bf16.msra.mxu0 %v925
    %3804 = vmatpush.bf16.msra.mxu0 %v921
    %3805 = vmatpush.bf16.msra.mxu0 %v917
    %3806 = vmatpush.bf16.msra.mxu0 %v913
    %3807 = vmatpush.bf16.msra.mxu0 %v909
    %3808 = vmatpush.bf16.msra.mxu0 %v905
    %3809 = vmatpush.bf16.msra.mxu0 %v901
    %3810 = vmatmul.bf16.gmra.mxu0 %v3759
    %v3811 = vpop.f32.mrf.mxu0
    %v3812 = vadd.f32 0.0, %v3811
    %v3813 = vpop.f32.mrf.mxu0
    %v3814 = vadd.f32 0.0, %v3813
    %3815 = vdwg.mxu0
    %3816 = vmatpush.bf16.msra.mxu0 %v1142
    %3817 = vmatpush.bf16.msra.mxu0 %v1138
    %3818 = vmatpush.bf16.msra.mxu0 %v1134
    %3819 = vmatpush.bf16.msra.mxu0 %v1130
    %3820 = vmatpush.bf16.msra.mxu0 %v1126
    %3821 = vmatpush.bf16.msra.mxu0 %v1122
    %3822 = vmatpush.bf16.msra.mxu0 %v1118
    %3823 = vmatpush.bf16.msra.mxu0 %v1114
    %3824 = vmatmul.bf16.gmra.mxu0 %v3758
    %v3825 = vpop.f32.mrf.mxu0
    %v3826 = vadd.f32 %v3770, %v3825
    %v3827 = vpop.f32.mrf.mxu0
    %v3828 = vadd.f32 %v3772, %v3827
    %3829 = vdwg.mxu0
    %3830 = vmatpush.bf16.msra.mxu0 %v1143
    %3831 = vmatpush.bf16.msra.mxu0 %v1139
    %3832 = vmatpush.bf16.msra.mxu0 %v1135
    %3833 = vmatpush.bf16.msra.mxu0 %v1131
    %3834 = vmatpush.bf16.msra.mxu0 %v1127
    %3835 = vmatpush.bf16.msra.mxu0 %v1123
    %3836 = vmatpush.bf16.msra.mxu0 %v1119
    %3837 = vmatpush.bf16.msra.mxu0 %v1115
    %3838 = vmatmul.bf16.gmra.mxu0 %v3758
    %v3839 = vpop.f32.mrf.mxu0
    %v3840 = vadd.f32 %v3784, %v3839
    %v3841 = vpop.f32.mrf.mxu0
    %v3842 = vadd.f32 %v3786, %v3841
    %3843 = vdwg.mxu0
    %3844 = vmatpush.bf16.msra.mxu0 %v1144
    %3845 = vmatpush.bf16.msra.mxu0 %v1140
    %3846 = vmatpush.bf16.msra.mxu0 %v1136
    %3847 = vmatpush.bf16.msra.mxu0 %v1132
    %3848 = vmatpush.bf16.msra.mxu0 %v1128
    %3849 = vmatpush.bf16.msra.mxu0 %v1124
    %3850 = vmatpush.bf16.msra.mxu0 %v1120
    %3851 = vmatpush.bf16.msra.mxu0 %v1116
    %3852 = vmatmul.bf16.gmra.mxu0 %v3758
    %v3853 = vpop.f32.mrf.mxu0
    %v3854 = vadd.f32 %v3798, %v3853
    %v3855 = vpop.f32.mrf.mxu0
    %v3856 = vadd.f32 %v3800, %v3855
    %3857 = vdwg.mxu0
    %3858 = vmatpush.bf16.msra.mxu0 %v1145
    %3859 = vmatpush.bf16.msra.mxu0 %v1141
    %3860 = vmatpush.bf16.msra.mxu0 %v1137
    %3861 = vmatpush.bf16.msra.mxu0 %v1133
    %3862 = vmatpush.bf16.msra.mxu0 %v1129
    %3863 = vmatpush.bf16.msra.mxu0 %v1125
    %3864 = vmatpush.bf16.msra.mxu0 %v1121
    %3865 = vmatpush.bf16.msra.mxu0 %v1117
    %3866 = vmatmul.bf16.gmra.mxu0 %v3758
    %v3867 = vpop.f32.mrf.mxu0
    %v3868 = vadd.f32 %v3812, %v3867
    %v3869 = vpop.f32.mrf.mxu0
    %v3870 = vadd.f32 %v3814, %v3869
    %3871 = vdwg.mxu0
    %v3872 = vadd.f32 %v3826, %v1236
    %v3873 = vadd.f32 %v3840, %v1237
    %v3874 = vadd.f32 %v3854, %v1238
    %v3875 = vadd.f32 %v3868, %v1239
    %v3876 = vadd.f32 %v3828, %v1236
    %v3877 = vadd.f32 %v3842, %v1237
    %v3878 = vadd.f32 %v3856, %v1238
    %v3879 = vadd.f32 %v3870, %v1239
    %v3880 = vxor.u32 %v3872, 2147483648
    %v3881 = vxor.u32 %v3873, 2147483648
    %v3882 = vxor.u32 %v3874, 2147483648
    %v3883 = vxor.u32 %v3876, 2147483648
    %v3884 = vxor.u32 %v3877, 2147483648
    %v3885 = vxor.u32 %v3878, 2147483648
    %v3886 = vmul.f32 %v3880, 1.442695
    %v3887 = vpow.pop %v3886
    %v3888 = vmul.f32 %v3881, 1.442695
    %v3889 = vpow.pop %v3888
    %v3890 = vmul.f32 %v3882, 1.442695
    %v3891 = vpow.pop %v3890
    %v3892 = vmul.f32 %v3883, 1.442695
    %v3893 = vpow.pop %v3892
    %v3894 = vmul.f32 %v3884, 1.442695
    %v3895 = vpow.pop %v3894
    %v3896 = vmul.f32 %v3885, 1.442695
    %v3897 = vpow.pop %v3896
    %v3898 = vadd.f32 %v3887, 1.0
    %v3899 = vadd.f32 %v3889, 1.0
    %v3900 = vadd.f32 %v3891, 1.0
    %v3901 = vadd.f32 %v3893, 1.0
    %v3902 = vadd.f32 %v3895, 1.0
    %v3903 = vadd.f32 %v3897, 1.0
    %v3904 = vrcp.pop %v3898
    %v3905 = vmul.f32 %v3898, %v3904
    %v3906 = vsub.f32 1.0, %v3905
    %v3907 = vmul.f32 %v3904, %v3906
    %v3908 = vadd.f32 %v3904, %v3907
    %vm3909 = vweird.f32 %v3898
    %vm3910 = vweird.f32 %v3904
    %vm3911 = vmor %vm3909, %vm3910
    %v3912 = vsel %vm3911, %v3904, %v3908
    %v3913 = vand.u32 2147483647, %v3898
    %vm3914 = vcmp.eq.f32.partialorder %v3913, 8.507059e+37
    %v3915 = vand.u32 %v3898, 2147483648
    %v3916 = vor.u32 1.1754944e-38, %v3915
    %v3917 = vsel %vm3914, %v3916, %v3912
    %v3918 = vmul.f32 1.0, %v3917
    %v3919 = vrcp.pop %v3899
    %v3920 = vmul.f32 %v3899, %v3919
    %v3921 = vsub.f32 1.0, %v3920
    %v3922 = vmul.f32 %v3919, %v3921
    %v3923 = vadd.f32 %v3919, %v3922
    %vm3924 = vweird.f32 %v3899
    %vm3925 = vweird.f32 %v3919
    %vm3926 = vmor %vm3924, %vm3925
    %v3927 = vsel %vm3926, %v3919, %v3923
    %v3928 = vand.u32 2147483647, %v3899
    %vm3929 = vcmp.eq.f32.partialorder %v3928, 8.507059e+37
    %v3930 = vand.u32 %v3899, 2147483648
    %v3931 = vor.u32 1.1754944e-38, %v3930
    %v3932 = vsel %vm3929, %v3931, %v3927
    %v3933 = vmul.f32 1.0, %v3932
    %v3934 = vrcp.pop %v3900
    %v3935 = vmul.f32 %v3900, %v3934
    %v3936 = vsub.f32 1.0, %v3935
    %v3937 = vmul.f32 %v3934, %v3936
    %v3938 = vadd.f32 %v3934, %v3937
    %vm3939 = vweird.f32 %v3900
    %vm3940 = vweird.f32 %v3934
    %vm3941 = vmor %vm3939, %vm3940
    %v3942 = vsel %vm3941, %v3934, %v3938
    %v3943 = vand.u32 2147483647, %v3900
    %vm3944 = vcmp.eq.f32.partialorder %v3943, 8.507059e+37
    %v3945 = vand.u32 %v3900, 2147483648
    %v3946 = vor.u32 1.1754944e-38, %v3945
    %v3947 = vsel %vm3944, %v3946, %v3942
    %v3948 = vmul.f32 1.0, %v3947
    %v3949 = vrcp.pop %v3901
    %v3950 = vmul.f32 %v3901, %v3949
    %v3951 = vsub.f32 1.0, %v3950
    %v3952 = vmul.f32 %v3949, %v3951
    %v3953 = vadd.f32 %v3949, %v3952
    %vm3954 = vweird.f32 %v3901
    %vm3955 = vweird.f32 %v3949
    %vm3956 = vmor %vm3954, %vm3955
    %v3957 = vsel %vm3956, %v3949, %v3953
    %v3958 = vand.u32 2147483647, %v3901
    %vm3959 = vcmp.eq.f32.partialorder %v3958, 8.507059e+37
    %v3960 = vand.u32 %v3901, 2147483648
    %v3961 = vor.u32 1.1754944e-38, %v3960
    %v3962 = vsel %vm3959, %v3961, %v3957
    %v3963 = vmul.f32 1.0, %v3962
    %v3964 = vrcp.pop %v3902
    %v3965 = vmul.f32 %v3902, %v3964
    %v3966 = vsub.f32 1.0, %v3965
    %v3967 = vmul.f32 %v3964, %v3966
    %v3968 = vadd.f32 %v3964, %v3967
    %vm3969 = vweird.f32 %v3902
    %vm3970 = vweird.f32 %v3964
    %vm3971 = vmor %vm3969, %vm3970
    %v3972 = vsel %vm3971, %v3964, %v3968
    %v3973 = vand.u32 2147483647, %v3902
    %vm3974 = vcmp.eq.f32.partialorder %v3973, 8.507059e+37
    %v3975 = vand.u32 %v3902, 2147483648
    %v3976 = vor.u32 1.1754944e-38, %v3975
    %v3977 = vsel %vm3974, %v3976, %v3972
    %v3978 = vmul.f32 1.0, %v3977
    %v3979 = vrcp.pop %v3903
    %v3980 = vmul.f32 %v3903, %v3979
    %v3981 = vsub.f32 1.0, %v3980
    %v3982 = vmul.f32 %v3979, %v3981
    %v3983 = vadd.f32 %v3979, %v3982
    %vm3984 = vweird.f32 %v3903
    %vm3985 = vweird.f32 %v3979
    %vm3986 = vmor %vm3984, %vm3985
    %v3987 = vsel %vm3986, %v3979, %v3983
    %v3988 = vand.u32 2147483647, %v3903
    %vm3989 = vcmp.eq.f32.partialorder %v3988, 8.507059e+37
    %v3990 = vand.u32 %v3903, 2147483648
    %v3991 = vor.u32 1.1754944e-38, %v3990
    %v3992 = vsel %vm3989, %v3991, %v3987
    %v3993 = vmul.f32 1.0, %v3992
    %v3994 = vtanh.pop %v3875
    %v3995 = vtanh.pop %v3879
    %v3996 = vmul.f32 %v3933, %v3562
    %v3997 = vmul.f32 %v3978, %v3563
    %v3998 = vmul.f32 %v3918, %v3994
    %v3999 = vmul.f32 %v3963, %v3995
    %v4000 = vadd.f32 %v3996, %v3998
    %v4001 = vadd.f32 %v3997, %v3999
    %v4002 = vtanh.pop %v4000
    %v4003 = vtanh.pop %v4001
    %v4004 = vmul.f32 %v3948, %v4002
    %v4005 = vmul.f32 %v3993, %v4003
    %4006 = vmatpush.bf16.msra.mxu0 %v511
    %4007 = vmatpush.bf16.msra.mxu0 %v507
    %4008 = vmatpush.bf16.msra.mxu0 %v503
    %4009 = vmatpush.bf16.msra.mxu0 %v499
    %4010 = vmatpush.bf16.msra.mxu0 %v495
    %4011 = vmatpush.bf16.msra.mxu0 %v491
    %4012 = vmatpush.bf16.msra.mxu0 %v487
    %4013 = vmatpush.bf16.msra.mxu0 %v483
    %4014 = vmatmul.bf16.gmra.mxu0 %v3758
    %v4015 = vpop.f32.mrf.mxu0
    %v4016 = vadd.f32 0.0, %v4015
    %v4017 = vpop.f32.mrf.mxu0
    %v4018 = vadd.f32 0.0, %v4017
    %4019 = vdwg.mxu0
    %4020 = vmatpush.bf16.msra.mxu0 %v512
    %4021 = vmatpush.bf16.msra.mxu0 %v508
    %4022 = vmatpush.bf16.msra.mxu0 %v504
    %4023 = vmatpush.bf16.msra.mxu0 %v500
    %4024 = vmatpush.bf16.msra.mxu0 %v496
    %4025 = vmatpush.bf16.msra.mxu0 %v492
    %4026 = vmatpush.bf16.msra.mxu0 %v488
    %4027 = vmatpush.bf16.msra.mxu0 %v484
    %4028 = vmatmul.bf16.gmra.mxu0 %v3758
    %v4029 = vpop.f32.mrf.mxu0
    %v4030 = vadd.f32 0.0, %v4029
    %v4031 = vpop.f32.mrf.mxu0
    %v4032 = vadd.f32 0.0, %v4031
    %4033 = vdwg.mxu0
    %4034 = vmatpush.bf16.msra.mxu0 %v513
    %4035 = vmatpush.bf16.msra.mxu0 %v509
    %4036 = vmatpush.bf16.msra.mxu0 %v505
    %4037 = vmatpush.bf16.msra.mxu0 %v501
    %4038 = vmatpush.bf16.msra.mxu0 %v497
    %4039 = vmatpush.bf16.msra.mxu0 %v493
    %4040 = vmatpush.bf16.msra.mxu0 %v489
    %4041 = vmatpush.bf16.msra.mxu0 %v485
    %4042 = vmatmul.bf16.gmra.mxu0 %v3758
    %v4043 = vpop.f32.mrf.mxu0
    %v4044 = vadd.f32 0.0, %v4043
    %v4045 = vpop.f32.mrf.mxu0
    %v4046 = vadd.f32 0.0, %v4045
    %4047 = vdwg.mxu0
    %4048 = vmatpush.bf16.msra.mxu0 %v514
    %4049 = vmatpush.bf16.msra.mxu0 %v510
    %4050 = vmatpush.bf16.msra.mxu0 %v506
    %4051 = vmatpush.bf16.msra.mxu0 %v502
    %4052 = vmatpush.bf16.msra.mxu0 %v498
    %4053 = vmatpush.bf16.msra.mxu0 %v494
    %4054 = vmatpush.bf16.msra.mxu0 %v490
    %4055 = vmatpush.bf16.msra.mxu0 %v486
    %4056 = vmatmul.bf16.gmra.mxu0 %v3758
    %v4057 = vpop.f32.mrf.mxu0
    %v4058 = vadd.f32 0.0, %v4057
    %v4059 = vpop.f32.mrf.mxu0
    %v4060 = vadd.f32 0.0, %v4059
    %4061 = vdwg.mxu0
    %v4062 = vadd.f32 %v204, %v4016
    %v4063 = vadd.f32 %v253, %v4030
    %v4064 = vadd.f32 %v302, %v4044
    %v4065 = vadd.f32 %v351, %v4058
    %v4066 = vadd.f32 %v206, %v4018
    %v4067 = vadd.f32 %v255, %v4032
    %v4068 = vadd.f32 %v304, %v4046
    %v4069 = vadd.f32 %v353, %v4060
    %v4070 = vxor.u32 %v4062, 2147483648
    %v4071 = vxor.u32 %v4063, 2147483648
    %v4072 = vxor.u32 %v4064, 2147483648
    %v4073 = vxor.u32 %v4066, 2147483648
    %v4074 = vxor.u32 %v4067, 2147483648
    %v4075 = vxor.u32 %v4068, 2147483648
    %v4076 = vmul.f32 %v4070, 1.442695
    %v4077 = vpow.pop %v4076
    %v4078 = vmul.f32 %v4071, 1.442695
    %v4079 = vpow.pop %v4078
    %v4080 = vmul.f32 %v4072, 1.442695
    %v4081 = vpow.pop %v4080
    %v4082 = vmul.f32 %v4073, 1.442695
    %v4083 = vpow.pop %v4082
    %v4084 = vmul.f32 %v4074, 1.442695
    %v4085 = vpow.pop %v4084
    %v4086 = vmul.f32 %v4075, 1.442695
    %v4087 = vpow.pop %v4086
    %v4088 = vadd.f32 %v4077, 1.0
    %v4089 = vadd.f32 %v4079, 1.0
    %v4090 = vadd.f32 %v4081, 1.0
    %v4091 = vadd.f32 %v4083, 1.0
    %v4092 = vadd.f32 %v4085, 1.0
    %v4093 = vadd.f32 %v4087, 1.0
    %v4094 = vrcp.pop %v4088
    %v4095 = vmul.f32 %v4088, %v4094
    %v4096 = vsub.f32 1.0, %v4095
    %v4097 = vmul.f32 %v4094, %v4096
    %v4098 = vadd.f32 %v4094, %v4097
    %vm4099 = vweird.f32 %v4088
    %vm4100 = vweird.f32 %v4094
    %vm4101 = vmor %vm4099, %vm4100
    %v4102 = vsel %vm4101, %v4094, %v4098
    %v4103 = vand.u32 2147483647, %v4088
    %vm4104 = vcmp.eq.f32.partialorder %v4103, 8.507059e+37
    %v4105 = vand.u32 %v4088, 2147483648
    %v4106 = vor.u32 1.1754944e-38, %v4105
    %v4107 = vsel %vm4104, %v4106, %v4102
    %v4108 = vmul.f32 1.0, %v4107
    %v4109 = vrcp.pop %v4089
    %v4110 = vmul.f32 %v4089, %v4109
    %v4111 = vsub.f32 1.0, %v4110
    %v4112 = vmul.f32 %v4109, %v4111
    %v4113 = vadd.f32 %v4109, %v4112
    %vm4114 = vweird.f32 %v4089
    %vm4115 = vweird.f32 %v4109
    %vm4116 = vmor %vm4114, %vm4115
    %v4117 = vsel %vm4116, %v4109, %v4113
    %v4118 = vand.u32 2147483647, %v4089
    %vm4119 = vcmp.eq.f32.partialorder %v4118, 8.507059e+37
    %v4120 = vand.u32 %v4089, 2147483648
    %v4121 = vor.u32 1.1754944e-38, %v4120
    %v4122 = vsel %vm4119, %v4121, %v4117
    %v4123 = vmul.f32 1.0, %v4122
    %v4124 = vrcp.pop %v4090
    %v4125 = vmul.f32 %v4090, %v4124
    %v4126 = vsub.f32 1.0, %v4125
    %v4127 = vmul.f32 %v4124, %v4126
    %v4128 = vadd.f32 %v4124, %v4127
    %vm4129 = vweird.f32 %v4090
    %vm4130 = vweird.f32 %v4124
    %vm4131 = vmor %vm4129, %vm4130
    %v4132 = vsel %vm4131, %v4124, %v4128
    %v4133 = vand.u32 2147483647, %v4090
    %vm4134 = vcmp.eq.f32.partialorder %v4133, 8.507059e+37
    %v4135 = vand.u32 %v4090, 2147483648
    %v4136 = vor.u32 1.1754944e-38, %v4135
    %v4137 = vsel %vm4134, %v4136, %v4132
    %v4138 = vmul.f32 1.0, %v4137
    %v4139 = vrcp.pop %v4091
    %v4140 = vmul.f32 %v4091, %v4139
    %v4141 = vsub.f32 1.0, %v4140
    %v4142 = vmul.f32 %v4139, %v4141
    %v4143 = vadd.f32 %v4139, %v4142
    %vm4144 = vweird.f32 %v4091
    %vm4145 = vweird.f32 %v4139
    %vm4146 = vmor %vm4144, %vm4145
    %v4147 = vsel %vm4146, %v4139, %v4143
    %v4148 = vand.u32 2147483647, %v4091
    %vm4149 = vcmp.eq.f32.partialorder %v4148, 8.507059e+37
    %v4150 = vand.u32 %v4091, 2147483648
    %v4151 = vor.u32 1.1754944e-38, %v4150
    %v4152 = vsel %vm4149, %v4151, %v4147
    %v4153 = vmul.f32 1.0, %v4152
    %v4154 = vrcp.pop %v4092
    %v4155 = vmul.f32 %v4092, %v4154
    %v4156 = vsub.f32 1.0, %v4155
    %v4157 = vmul.f32 %v4154, %v4156
    %v4158 = vadd.f32 %v4154, %v4157
    %vm4159 = vweird.f32 %v4092
    %vm4160 = vweird.f32 %v4154
    %vm4161 = vmor %vm4159, %vm4160
    %v4162 = vsel %vm4161, %v4154, %v4158
    %v4163 = vand.u32 2147483647, %v4092
    %vm4164 = vcmp.eq.f32.partialorder %v4163, 8.507059e+37
    %v4165 = vand.u32 %v4092, 2147483648
    %v4166 = vor.u32 1.1754944e-38, %v4165
    %v4167 = vsel %vm4164, %v4166, %v4162
    %v4168 = vmul.f32 1.0, %v4167
    %v4169 = vrcp.pop %v4093
    %v4170 = vmul.f32 %v4093, %v4169
    %v4171 = vsub.f32 1.0, %v4170
    %v4172 = vmul.f32 %v4169, %v4171
    %v4173 = vadd.f32 %v4169, %v4172
    %vm4174 = vweird.f32 %v4093
    %vm4175 = vweird.f32 %v4169
    %vm4176 = vmor %vm4174, %vm4175
    %v4177 = vsel %vm4176, %v4169, %v4173
    %v4178 = vand.u32 2147483647, %v4093
    %vm4179 = vcmp.eq.f32.partialorder %v4178, 8.507059e+37
    %v4180 = vand.u32 %v4093, 2147483648
    %v4181 = vor.u32 1.1754944e-38, %v4180
    %v4182 = vsel %vm4179, %v4181, %v4177
    %v4183 = vmul.f32 1.0, %v4182
    %v4184 = vtanh.pop %v4065
    %v4185 = vtanh.pop %v4069
    %v4186 = vmul.f32 %v4123, %v3752
    %v4187 = vmul.f32 %v4168, %v3753
    %v4188 = vmul.f32 %v4108, %v4184
    %v4189 = vmul.f32 %v4153, %v4185
    %v4190 = vadd.f32 %v4186, %v4188
    %v4191 = vadd.f32 %v4187, %v4189
    %v4192 = vtanh.pop %v4190
    %v4193 = vtanh.pop %v4191
    %v4194 = vmul.f32 %v4138, %v4192
    %v4195 = vmul.f32 %v4183, %v4193
    %v4196 = vpack.c.bf16 %v4195, %v4194
    %v4197 = vpack.c.bf16 %v4005, %v4004
    %4198 = vmatpush.bf16.msra.mxu0 %v926
    %4199 = vmatpush.bf16.msra.mxu0 %v922
    %4200 = vmatpush.bf16.msra.mxu0 %v918
    %4201 = vmatpush.bf16.msra.mxu0 %v914
    %4202 = vmatpush.bf16.msra.mxu0 %v910
    %4203 = vmatpush.bf16.msra.mxu0 %v906
    %4204 = vmatpush.bf16.msra.mxu0 %v902
    %4205 = vmatpush.bf16.msra.mxu0 %v898
    %4206 = vmatmul.bf16.gmra.mxu0 %v4197
    %v4207 = vpop.f32.mrf.mxu0
    %v4208 = vadd.f32 0.0, %v4207
    %v4209 = vpop.f32.mrf.mxu0
    %v4210 = vadd.f32 0.0, %v4209
    %4211 = vdwg.mxu0
    %4212 = vmatpush.bf16.msra.mxu0 %v927
    %4213 = vmatpush.bf16.msra.mxu0 %v923
    %4214 = vmatpush.bf16.msra.mxu0 %v919
    %4215 = vmatpush.bf16.msra.mxu0 %v915
    %4216 = vmatpush.bf16.msra.mxu0 %v911
    %4217 = vmatpush.bf16.msra.mxu0 %v907
    %4218 = vmatpush.bf16.msra.mxu0 %v903
    %4219 = vmatpush.bf16.msra.mxu0 %v899
    %4220 = vmatmul.bf16.gmra.mxu0 %v4197
    %v4221 = vpop.f32.mrf.mxu0
    %v4222 = vadd.f32 0.0, %v4221
    %v4223 = vpop.f32.mrf.mxu0
    %v4224 = vadd.f32 0.0, %v4223
    %4225 = vdwg.mxu0
    %4226 = vmatpush.bf16.msra.mxu0 %v928
    %4227 = vmatpush.bf16.msra.mxu0 %v924
    %4228 = vmatpush.bf16.msra.mxu0 %v920
    %4229 = vmatpush.bf16.msra.mxu0 %v916
    %4230 = vmatpush.bf16.msra.mxu0 %v912
    %4231 = vmatpush.bf16.msra.mxu0 %v908
    %4232 = vmatpush.bf16.msra.mxu0 %v904
    %4233 = vmatpush.bf16.msra.mxu0 %v900
    %4234 = vmatmul.bf16.gmra.mxu0 %v4197
    %v4235 = vpop.f32.mrf.mxu0
    %v4236 = vadd.f32 0.0, %v4235
    %v4237 = vpop.f32.mrf.mxu0
    %v4238 = vadd.f32 0.0, %v4237
    %4239 = vdwg.mxu0
    %4240 = vmatpush.bf16.msra.mxu0 %v929
    %4241 = vmatpush.bf16.msra.mxu0 %v925
    %4242 = vmatpush.bf16.msra.mxu0 %v921
    %4243 = vmatpush.bf16.msra.mxu0 %v917
    %4244 = vmatpush.bf16.msra.mxu0 %v913
    %4245 = vmatpush.bf16.msra.mxu0 %v909
    %4246 = vmatpush.bf16.msra.mxu0 %v905
    %4247 = vmatpush.bf16.msra.mxu0 %v901
    %4248 = vmatmul.bf16.gmra.mxu0 %v4197
    %v4249 = vpop.f32.mrf.mxu0
    %v4250 = vadd.f32 0.0, %v4249
    %v4251 = vpop.f32.mrf.mxu0
    %v4252 = vadd.f32 0.0, %v4251
    %4253 = vdwg.mxu0
    %4254 = vmatpush.bf16.msra.mxu0 %v1142
    %4255 = vmatpush.bf16.msra.mxu0 %v1138
    %4256 = vmatpush.bf16.msra.mxu0 %v1134
    %4257 = vmatpush.bf16.msra.mxu0 %v1130
    %4258 = vmatpush.bf16.msra.mxu0 %v1126
    %4259 = vmatpush.bf16.msra.mxu0 %v1122
    %4260 = vmatpush.bf16.msra.mxu0 %v1118
    %4261 = vmatpush.bf16.msra.mxu0 %v1114
    %4262 = vmatmul.bf16.gmra.mxu0 %v4196
    %v4263 = vpop.f32.mrf.mxu0
    %v4264 = vadd.f32 %v4208, %v4263
    %v4265 = vpop.f32.mrf.mxu0
    %v4266 = vadd.f32 %v4210, %v4265
    %4267 = vdwg.mxu0
    %4268 = vmatpush.bf16.msra.mxu0 %v1143
    %4269 = vmatpush.bf16.msra.mxu0 %v1139
    %4270 = vmatpush.bf16.msra.mxu0 %v1135
    %4271 = vmatpush.bf16.msra.mxu0 %v1131
    %4272 = vmatpush.bf16.msra.mxu0 %v1127
    %4273 = vmatpush.bf16.msra.mxu0 %v1123
    %4274 = vmatpush.bf16.msra.mxu0 %v1119
    %4275 = vmatpush.bf16.msra.mxu0 %v1115
    %4276 = vmatmul.bf16.gmra.mxu0 %v4196
    %v4277 = vpop.f32.mrf.mxu0
    %v4278 = vadd.f32 %v4222, %v4277
    %v4279 = vpop.f32.mrf.mxu0
    %v4280 = vadd.f32 %v4224, %v4279
    %4281 = vdwg.mxu0
    %4282 = vmatpush.bf16.msra.mxu0 %v1144
    %4283 = vmatpush.bf16.msra.mxu0 %v1140
    %4284 = vmatpush.bf16.msra.mxu0 %v1136
    %4285 = vmatpush.bf16.msra.mxu0 %v1132
    %4286 = vmatpush.bf16.msra.mxu0 %v1128
    %4287 = vmatpush.bf16.msra.mxu0 %v1124
    %4288 = vmatpush.bf16.msra.mxu0 %v1120
    %4289 = vmatpush.bf16.msra.mxu0 %v1116
    %4290 = vmatmul.bf16.gmra.mxu0 %v4196
    %v4291 = vpop.f32.mrf.mxu0
    %v4292 = vadd.f32 %v4236, %v4291
    %v4293 = vpop.f32.mrf.mxu0
    %v4294 = vadd.f32 %v4238, %v4293
    %4295 = vdwg.mxu0
    %4296 = vmatpush.bf16.msra.mxu0 %v1145
    %4297 = vmatpush.bf16.msra.mxu0 %v1141
    %4298 = vmatpush.bf16.msra.mxu0 %v1137
    %4299 = vmatpush.bf16.msra.mxu0 %v1133
    %4300 = vmatpush.bf16.msra.mxu0 %v1129
    %4301 = vmatpush.bf16.msra.mxu0 %v1125
    %4302 = vmatpush.bf16.msra.mxu0 %v1121
    %4303 = vmatpush.bf16.msra.mxu0 %v1117
    %4304 = vmatmul.bf16.gmra.mxu0 %v4196
    %v4305 = vpop.f32.mrf.mxu0
    %v4306 = vadd.f32 %v4250, %v4305
    %v4307 = vpop.f32.mrf.mxu0
    %v4308 = vadd.f32 %v4252, %v4307
    %4309 = vdwg.mxu0
    %v4310 = vadd.f32 %v4264, %v1236
    %v4311 = vadd.f32 %v4278, %v1237
    %v4312 = vadd.f32 %v4292, %v1238
    %v4313 = vadd.f32 %v4306, %v1239
    %v4314 = vadd.f32 %v4266, %v1236
    %v4315 = vadd.f32 %v4280, %v1237
    %v4316 = vadd.f32 %v4294, %v1238
    %v4317 = vadd.f32 %v4308, %v1239
    %v4318 = vxor.u32 %v4310, 2147483648
    %v4319 = vxor.u32 %v4311, 2147483648
    %v4320 = vxor.u32 %v4312, 2147483648
    %v4321 = vxor.u32 %v4314, 2147483648
    %v4322 = vxor.u32 %v4315, 2147483648
    %v4323 = vxor.u32 %v4316, 2147483648
    %v4324 = vmul.f32 %v4318, 1.442695
    %v4325 = vpow.pop %v4324
    %v4326 = vmul.f32 %v4319, 1.442695
    %v4327 = vpow.pop %v4326
    %v4328 = vmul.f32 %v4320, 1.442695
    %v4329 = vpow.pop %v4328
    %v4330 = vmul.f32 %v4321, 1.442695
    %v4331 = vpow.pop %v4330
    %v4332 = vmul.f32 %v4322, 1.442695
    %v4333 = vpow.pop %v4332
    %v4334 = vmul.f32 %v4323, 1.442695
    %v4335 = vpow.pop %v4334
    %v4336 = vadd.f32 %v4325, 1.0
    %v4337 = vadd.f32 %v4327, 1.0
    %v4338 = vadd.f32 %v4329, 1.0
    %v4339 = vadd.f32 %v4331, 1.0
    %v4340 = vadd.f32 %v4333, 1.0
    %v4341 = vadd.f32 %v4335, 1.0
    %v4342 = vrcp.pop %v4336
    %v4343 = vmul.f32 %v4336, %v4342
    %v4344 = vsub.f32 1.0, %v4343
    %v4345 = vmul.f32 %v4342, %v4344
    %v4346 = vadd.f32 %v4342, %v4345
    %vm4347 = vweird.f32 %v4336
    %vm4348 = vweird.f32 %v4342
    %vm4349 = vmor %vm4347, %vm4348
    %v4350 = vsel %vm4349, %v4342, %v4346
    %v4351 = vand.u32 2147483647, %v4336
    %vm4352 = vcmp.eq.f32.partialorder %v4351, 8.507059e+37
    %v4353 = vand.u32 %v4336, 2147483648
    %v4354 = vor.u32 1.1754944e-38, %v4353
    %v4355 = vsel %vm4352, %v4354, %v4350
    %v4356 = vmul.f32 1.0, %v4355
    %v4357 = vrcp.pop %v4337
    %v4358 = vmul.f32 %v4337, %v4357
    %v4359 = vsub.f32 1.0, %v4358
    %v4360 = vmul.f32 %v4357, %v4359
    %v4361 = vadd.f32 %v4357, %v4360
    %vm4362 = vweird.f32 %v4337
    %vm4363 = vweird.f32 %v4357
    %vm4364 = vmor %vm4362, %vm4363
    %v4365 = vsel %vm4364, %v4357, %v4361
    %v4366 = vand.u32 2147483647, %v4337
    %vm4367 = vcmp.eq.f32.partialorder %v4366, 8.507059e+37
    %v4368 = vand.u32 %v4337, 2147483648
    %v4369 = vor.u32 1.1754944e-38, %v4368
    %v4370 = vsel %vm4367, %v4369, %v4365
    %v4371 = vmul.f32 1.0, %v4370
    %v4372 = vrcp.pop %v4338
    %v4373 = vmul.f32 %v4338, %v4372
    %v4374 = vsub.f32 1.0, %v4373
    %v4375 = vmul.f32 %v4372, %v4374
    %v4376 = vadd.f32 %v4372, %v4375
    %vm4377 = vweird.f32 %v4338
    %vm4378 = vweird.f32 %v4372
    %vm4379 = vmor %vm4377, %vm4378
    %v4380 = vsel %vm4379, %v4372, %v4376
    %v4381 = vand.u32 2147483647, %v4338
    %vm4382 = vcmp.eq.f32.partialorder %v4381, 8.507059e+37
    %v4383 = vand.u32 %v4338, 2147483648
    %v4384 = vor.u32 1.1754944e-38, %v4383
    %v4385 = vsel %vm4382, %v4384, %v4380
    %v4386 = vmul.f32 1.0, %v4385
    %v4387 = vrcp.pop %v4339
    %v4388 = vmul.f32 %v4339, %v4387
    %v4389 = vsub.f32 1.0, %v4388
    %v4390 = vmul.f32 %v4387, %v4389
    %v4391 = vadd.f32 %v4387, %v4390
    %vm4392 = vweird.f32 %v4339
    %vm4393 = vweird.f32 %v4387
    %vm4394 = vmor %vm4392, %vm4393
    %v4395 = vsel %vm4394, %v4387, %v4391
    %v4396 = vand.u32 2147483647, %v4339
    %vm4397 = vcmp.eq.f32.partialorder %v4396, 8.507059e+37
    %v4398 = vand.u32 %v4339, 2147483648
    %v4399 = vor.u32 1.1754944e-38, %v4398
    %v4400 = vsel %vm4397, %v4399, %v4395
    %v4401 = vmul.f32 1.0, %v4400
    %v4402 = vrcp.pop %v4340
    %v4403 = vmul.f32 %v4340, %v4402
    %v4404 = vsub.f32 1.0, %v4403
    %v4405 = vmul.f32 %v4402, %v4404
    %v4406 = vadd.f32 %v4402, %v4405
    %vm4407 = vweird.f32 %v4340
    %vm4408 = vweird.f32 %v4402
    %vm4409 = vmor %vm4407, %vm4408
    %v4410 = vsel %vm4409, %v4402, %v4406
    %v4411 = vand.u32 2147483647, %v4340
    %vm4412 = vcmp.eq.f32.partialorder %v4411, 8.507059e+37
    %v4413 = vand.u32 %v4340, 2147483648
    %v4414 = vor.u32 1.1754944e-38, %v4413
    %v4415 = vsel %vm4412, %v4414, %v4410
    %v4416 = vmul.f32 1.0, %v4415
    %v4417 = vrcp.pop %v4341
    %v4418 = vmul.f32 %v4341, %v4417
    %v4419 = vsub.f32 1.0, %v4418
    %v4420 = vmul.f32 %v4417, %v4419
    %v4421 = vadd.f32 %v4417, %v4420
    %vm4422 = vweird.f32 %v4341
    %vm4423 = vweird.f32 %v4417
    %vm4424 = vmor %vm4422, %vm4423
    %v4425 = vsel %vm4424, %v4417, %v4421
    %v4426 = vand.u32 2147483647, %v4341
    %vm4427 = vcmp.eq.f32.partialorder %v4426, 8.507059e+37
    %v4428 = vand.u32 %v4341, 2147483648
    %v4429 = vor.u32 1.1754944e-38, %v4428
    %v4430 = vsel %vm4427, %v4429, %v4425
    %v4431 = vmul.f32 1.0, %v4430
    %v4432 = vtanh.pop %v4313
    %v4433 = vtanh.pop %v4317
    %v4434 = vmul.f32 %v4371, %v4000
    %v4435 = vmul.f32 %v4416, %v4001
    %v4436 = vmul.f32 %v4356, %v4432
    %v4437 = vmul.f32 %v4401, %v4433
    %v4438 = vadd.f32 %v4434, %v4436
    %v4439 = vadd.f32 %v4435, %v4437
    %v4440 = vtanh.pop %v4438
    %v4441 = vtanh.pop %v4439
    %v4442 = vmul.f32 %v4386, %v4440
    %v4443 = vmul.f32 %v4431, %v4441
    %v4444 = vld [vmem:[%s7] sm:$0xff]
    %v4445 = vld [vmem:[%s7 + $0x8] sm:$0xff]
    %v4446 = vld [vmem:[%s7 + $0x10] sm:$0xff]
    %v4447 = vld [vmem:[%s7 + $0x18] sm:$0xff]
    %v4448 = vld [vmem:[%s7 + $0x20] sm:$0xff]
    %v4449 = vld [vmem:[%s7 + $0x28] sm:$0xff]
    %v4450 = vld [vmem:[%s7 + $0x30] sm:$0xff]
    %v4451 = vld [vmem:[%s7 + $0x38] sm:$0xff]
    %v4452 = vld [vmem:[%s7 + $0x40] sm:$0xff]
    %v4453 = vld [vmem:[%s7 + $0x48] sm:$0xff]
    %v4454 = vld [vmem:[%s7 + $0x50] sm:$0xff]
    %v4455 = vld [vmem:[%s7 + $0x58] sm:$0xff]
    %v4456 = vld [vmem:[%s7 + $0x60] sm:$0xff]
    %v4457 = vld [vmem:[%s7 + $0x68] sm:$0xff]
    %v4458 = vld [vmem:[%s7 + $0x70] sm:$0xff]
    %v4459 = vld [vmem:[%s7 + $0x78] sm:$0xff]
    %v4460 = vld [vmem:[#allocation2] sm:$0x1]
    %v4462 = vperm.slane %v4460, 0
    %4464 = vmatpush.msra.mxu0 %v4459
    %4465 = vmatpush.msra.mxu0 %v4458
    %4466 = vmatpush.msra.mxu0 %v4457
    %4467 = vmatpush.msra.mxu0 %v4456
    %4468 = vmatpush.msra.mxu0 %v4455
    %4469 = vmatpush.msra.mxu0 %v4454
    %4470 = vmatpush.msra.mxu0 %v4453
    %4471 = vmatpush.msra.mxu0 %v4452
    %4472 = vmatpush.msra.mxu0 %v4451
    %4473 = vmatpush.msra.mxu0 %v4450
    %4474 = vmatpush.msra.mxu0 %v4449
    %4475 = vmatpush.msra.mxu0 %v4448
    %4476 = vmatpush.msra.mxu0 %v4447
    %4477 = vmatpush.msra.mxu0 %v4446
    %4478 = vmatpush.msra.mxu0 %v4445
    %4479 = vmatpush.msra.mxu0 %v4444
    %4480 = vmatmul.f32.gmra.mxu0 %v4442
    %v4481 = vpop.f32.mrf.mxu0
    %v4482 = vadd.f32 %v4462, %v4481
    %4483 = vmatmul.f32.gmra.mxu0 %v4443
    %v4484 = vpop.f32.mrf.mxu0
    %v4485 = vadd.f32 %v4462, %v4484
    %4486 = vdwg.mxu0
    %vm4487 = vcmask 7168
    %4488 = vst.msk [vmem:[%s9] sm:$0xff] %vm4487, %v4482
    %4489 = vst.msk [vmem:[%s9 + $0x8] sm:$0xff] %vm4487, %v4485
    // Predicated region
    $region46: #{multimodal_stock_predictor.1} parent=1 // pred_check
      _
    $region47: #{multimodal_stock_predictor.1} parent=1 // pred_check_branch
      %4491 = sbr.rel (0) target = $region49
    $region48: #{multimodal_stock_predictor.1} parent=1 // pred_region
      _
    $region49: #{multimodal_stock_predictor.1} parent=1 // pred_fallthru
      _
    // Predicated region
    $region50: #{multimodal_stock_predictor.1} parent=1 // pred_check
      _
    $region51: #{multimodal_stock_predictor.1} parent=1 // pred_check_branch
      %4493 = sbr.rel (0) target = $region53
    $region52: #{multimodal_stock_predictor.1} parent=1 // pred_region
      _
    $region53: #{multimodal_stock_predictor.1} parent=1 // pred_fallthru
      _
    %4494 = vsyncpa [#allocation4], 1
    %4495 = vsyncpa [#allocation6], 1

</llo_original>
